<compile_context>
chip_gen: v5e
topology: v5e:2x2
jax: 0.10.0
libtpu: 0.0.40
codegen_flags: <defaults>
</compile_context>

<pallas_src>
import jax
import jax.numpy as jnp
from jax.experimental import pallas as pl
from jax.experimental.pallas import tpu as pltpu

STATE_DIM = 16
ACTION_DIM = 4
LATENT_DIM = 8
HIDDEN = 750            # fixed by the PyTorch module
HIDDEN_PAD = 768        # 6 * 128 lanes (zero-padded)
MAX_ACTION = 1.0
BATCH = 8

# Packed output layout (single lane-contiguous slab, sliced in the wrapper).
PACK = 24
U_LO, U_HI = 0, ACTION_DIM                                   # 0..4   : u
MEAN_LO, MEAN_HI = U_HI, U_HI + LATENT_DIM                   # 4..12  : mean
STD_LO, STD_HI = MEAN_HI, MEAN_HI + LATENT_DIM               # 12..20 : std


def vae_kernel(sa_ref, state_ref, eps_ref,
               e1_w_ref, e1_b_ref,
               e2_w_ref, e2_b_ref,
               head_w_ref, head_b_ref,
               d1_ws_ref, d1_wz_ref, d1_b_ref,
               d2_w_ref, d2_b_ref,
               d3_w_ref, d3_b_ref,
               out_ref):
    bf16 = jnp.bfloat16
    f32 = jnp.float32

    sa = sa_ref[...]          # (B, STATE+ACTION)   bf16
    s = state_ref[...]        # (B, STATE)          bf16
    eps = eps_ref[...]        # (B, PACK)           f32 (1 in mean lanes, noise in std lanes)

    # ----- encoder -----
    h = jnp.dot(sa, e1_w_ref[...], preferred_element_type=f32) + e1_b_ref[...]
    h = jnp.maximum(h, 0.0)                                           # relu(e1)
    h = jnp.dot(h.astype(bf16), e2_w_ref[...],
                preferred_element_type=f32) + e2_b_ref[...]
    h = jnp.maximum(h, 0.0)                                           # relu(e2)

    # ----- fused mean / log_std head (single matmul, packed lanes) -----
    head = jnp.dot(h.astype(bf16), head_w_ref[...],
                   preferred_element_type=f32) + head_b_ref[...]      # (B, PACK)
    lane = jax.lax.broadcasted_iota(jnp.int32, head.shape, 1)
    is_mean = jnp.logical_and(lane >= MEAN_LO, lane < MEAN_HI)
    is_std = jnp.logical_and(lane >= STD_LO, lane < STD_HI)
    std_all = jnp.exp(jnp.clip(head, -4.0, 15.0))                     # EUP; masked below
    # ms: lanes 4..11 = mean, lanes 12..19 = std, everything else 0.
    ms = jnp.where(is_mean, head, jnp.where(is_std, std_all, 0.0))

    # ----- reparameterization, kept in packed layout -----
    # eps has 1.0 in the mean lanes and the gaussian noise in the std lanes, so
    # z_packed @ d1_wz (rows duplicated for both lane groups) == (mean+std*eps) @ W_z.
    z_packed = ms * eps

    # ----- decoder -----
    d = (jnp.dot(s, d1_ws_ref[...], preferred_element_type=f32)
         + jnp.dot(z_packed.astype(bf16), d1_wz_ref[...], preferred_element_type=f32)
         + d1_b_ref[...])
    d = jnp.maximum(d, 0.0)                                           # relu(d1)
    d = jnp.dot(d.astype(bf16), d2_w_ref[...],
                preferred_element_type=f32) + d2_b_ref[...]
    d = jnp.maximum(d, 0.0)                                           # relu(d2)
    u = MAX_ACTION * jnp.tanh(
        jnp.dot(d.astype(bf16), d3_w_ref[...], preferred_element_type=f32)
        + d3_b_ref[...])                                              # (B, PACK), lanes 0..3 = u, rest tanh(0)=0

    # Single packed output store: u occupies lanes 0..3, ms occupies 4..19 (disjoint).
    out_ref[...] = u + ms


def init_linear(key, in_dim, out_dim):
    """Deterministic PyTorch-style init; weight returned transposed (in, out)."""
    kw, kb = jax.random.split(key)
    bound = 1.0 / jnp.sqrt(jnp.float32(in_dim))
    w = jax.random.uniform(kw, (in_dim, out_dim), jnp.float32, -bound, bound)
    b = jax.random.uniform(kb, (1, out_dim), jnp.float32, -bound, bound)
    return w, b


def make_params(key):
    keys = jax.random.split(key, 7)
    e1_w, e1_b = init_linear(keys[0], STATE_DIM + ACTION_DIM, HIDDEN)
    e2_w, e2_b = init_linear(keys[1], HIDDEN, HIDDEN)
    mean_w, mean_b = init_linear(keys[2], HIDDEN, LATENT_DIM)
    ls_w, ls_b = init_linear(keys[3], HIDDEN, LATENT_DIM)
    d1_w, d1_b = init_linear(keys[4], STATE_DIM + LATENT_DIM, HIDDEN)
    d2_w, d2_b = init_linear(keys[5], HIDDEN, HIDDEN)
    d3_w, d3_b = init_linear(keys[6], HIDDEN, ACTION_DIM)

    H, HP = HIDDEN, HIDDEN_PAD
    ph = HP - H
    bf16 = jnp.bfloat16

    pad_cols = lambda w: jnp.pad(w, ((0, 0), (0, ph)))      # (K, H)  -> (K, HP)
    pad_bias = lambda b: jnp.pad(b, ((0, 0), (0, ph)))      # (1, H)  -> (1, HP)

    # Encoder layer 1 operates on cat(state, action) (concat done in wrapper).
    e1_w_p = pad_cols(e1_w).astype(bf16)
    e1_b_p = pad_bias(e1_b)
    e2_w_p = jnp.pad(e2_w, ((0, ph), (0, ph))).astype(bf16)
    e2_b_p = pad_bias(e2_b)

    # Fused mean/log_std head in packed layout.
    head_w = jnp.zeros((HP, PACK), jnp.float32)
    head_w = head_w.at[:H, MEAN_LO:MEAN_HI].set(mean_w)
    head_w = head_w.at[:H, STD_LO:STD_HI].set(ls_w)
    head_b = jnp.zeros((1, PACK), jnp.float32)
    head_b = head_b.at[:, MEAN_LO:MEAN_HI].set(mean_b)
    head_b = head_b.at[:, STD_LO:STD_HI].set(ls_b)

    # Decoder layer 1: split cat(state, z).  The z-weight is duplicated into
    # both the mean and std lane groups of the packed layout (see kernel).
    d1_ws = pad_cols(d1_w[:STATE_DIM]).astype(bf16)
    d1_wz_logical = d1_w[STATE_DIM:]                         # (LATENT, H)
    d1_wz = jnp.zeros((PACK, HP), jnp.float32)
    d1_wz = d1_wz.at[MEAN_LO:MEAN_HI, :H].set(d1_wz_logical)
    d1_wz = d1_wz.at[STD_LO:STD_HI, :H].set(d1_wz_logical)
    d1_b_p = pad_bias(d1_b)
    d2_w_p = jnp.pad(d2_w, ((0, ph), (0, ph))).astype(bf16)
    d2_b_p = pad_bias(d2_b)

    # Decoder output head widened into the packed layout (lanes 0..3).
    d3_w_p = jnp.zeros((HP, PACK), jnp.float32)
    d3_w_p = d3_w_p.at[:H, U_LO:U_HI].set(d3_w)
    d3_b_p = jnp.zeros((1, PACK), jnp.float32)
    d3_b_p = d3_b_p.at[:, U_LO:U_HI].set(d3_b)

    return dict(e1_w=e1_w_p, e1_b=e1_b_p,
                e2_w=e2_w_p, e2_b=e2_b_p,
                head_w=head_w.astype(bf16), head_b=head_b,
                d1_ws=d1_ws, d1_wz=d1_wz.astype(bf16), d1_b=d1_b_p,
                d2_w=d2_w_p, d2_b=d2_b_p,
                d3_w=d3_w_p.astype(bf16), d3_b=d3_b_p)


@jax.jit
def vae_forward(state, action, eps, params):
    B = state.shape[0]
    bf16 = jnp.bfloat16

    # cat(state, action) in the wrapper -> single K=20 matmul in-kernel.
    sa = jnp.concatenate([state, action], axis=1).astype(bf16)
    s_bf = state.astype(bf16)

    # Packed eps: 1 in mean lanes, gaussian noise in std lanes, 0 elsewhere.
    eps_p = jnp.zeros((B, PACK), jnp.float32)
    eps_p = eps_p.at[:, MEAN_LO:MEAN_HI].set(1.0)
    eps_p = eps_p.at[:, STD_LO:STD_HI].set(eps)

    vmem = pl.BlockSpec(memory_space=pltpu.MemorySpace.VMEM)
    inputs = (sa, s_bf, eps_p,
              params["e1_w"], params["e1_b"],
              params["e2_w"], params["e2_b"],
              params["head_w"], params["head_b"],
              params["d1_ws"], params["d1_wz"], params["d1_b"],
              params["d2_w"], params["d2_b"],
              params["d3_w"], params["d3_b"])

    # Advisory cost estimate so XLA can overlap surrounding ops with this
    # memory-bound call.
    flops = 2 * B * ((STATE_DIM + ACTION_DIM) * HIDDEN_PAD
                     + HIDDEN_PAD * HIDDEN_PAD
                     + HIDDEN_PAD * PACK
                     + STATE_DIM * HIDDEN_PAD
                     + PACK * HIDDEN_PAD
                     + HIDDEN_PAD * HIDDEN_PAD
                     + HIDDEN_PAD * PACK)
    bytes_accessed = sum(int(x.size) * x.dtype.itemsize for x in inputs) + B * PACK * 4
    cost = pl.CostEstimate(flops=flops,
                           transcendentals=2 * B * PACK,
                           bytes_accessed=bytes_accessed)

    # Single invocation, no grid: total VMEM footprint is ~2.5 MiB (bf16
    # weights), well inside scoped VMEM on v5e/v6e/v7x.  No multi-buffering.
    packed = pl.pallas_call(
        vae_kernel,
        out_shape=jax.ShapeDtypeStruct((B, PACK), jnp.float32),
        in_specs=[vmem] * len(inputs),
        out_specs=vmem,
        cost_estimate=cost,
    )(*inputs)

    u = packed[:, U_LO:U_HI]
    mean = packed[:, MEAN_LO:MEAN_HI]
    std = packed[:, STD_LO:STD_HI]
    return u, mean, std


def vae_forward_ref(state, action, eps, p):
    """Pure-JAX reference (natural cat/split form) using the same bf16 weights."""
    f32, bf16, H = jnp.float32, jnp.bfloat16, HIDDEN

    def lin(x, w, b):
        return jnp.dot(x.astype(bf16), w, preferred_element_type=f32) + b

    e1_w, e1_b = p["e1_w"][:, :H], p["e1_b"][:, :H]
    e2_w, e2_b = p["e2_w"][:H, :H], p["e2_b"][:, :H]
    mean_w, mean_b = p["head_w"][:H, MEAN_LO:MEAN_HI], p["head_b"][:, MEAN_LO:MEAN_HI]
    ls_w, ls_b = p["head_w"][:H, STD_LO:STD_HI], p["head_b"][:, STD_LO:STD_HI]
    d1_ws, d1_b = p["d1_ws"][:, :H], p["d1_b"][:, :H]
    d1_wz = p["d1_wz"][MEAN_LO:MEAN_HI, :H]
    d2_w, d2_b = p["d2_w"][:H, :H], p["d2_b"][:, :H]
    d3_w, d3_b = p["d3_w"][:H, U_LO:U_HI], p["d3_b"][:, U_LO:U_HI]

    sa = jnp.concatenate([state, action], axis=1)
    h = jnp.maximum(lin(sa, e1_w, e1_b), 0.0)
    h = jnp.maximum(lin(h, e2_w, e2_b), 0.0)
    mean = lin(h, mean_w, mean_b)
    log_std = jnp.clip(lin(h, ls_w, ls_b), -4.0, 15.0)
    std = jnp.exp(log_std)
    z = mean + std * eps
    d = jnp.maximum(lin(state, d1_ws, d1_b)
                    + jnp.dot(z.astype(bf16), d1_wz, preferred_element_type=f32), 0.0)
    d = jnp.maximum(lin(d, d2_w, d2_b), 0.0)
    u = MAX_ACTION * jnp.tanh(lin(d, d3_w, d3_b))
    return u, mean, std


if __name__ == "__main__":
    key = jax.random.PRNGKey(0)
    k_state, k_action, k_eps, k_params = jax.random.split(key, 4)

    state = jax.random.normal(k_state, (BATCH, STATE_DIM), jnp.float32)
    action = jax.random.normal(k_action, (BATCH, ACTION_DIM), jnp.float32)
    eps = jax.random.normal(k_eps, (BATCH, LATENT_DIM), jnp.float32)
    params = make_params(k_params)

    u, mean, std = vae_forward(state, action, eps, params)
    jax.block_until_ready((u, mean, std))

    u_r, mean_r, std_r = vae_forward_ref(state, action, eps, params)
    # bf16 weights => relax tolerance vs. the old f32 check (accuracy tradeoff
    # flagged in the review, not a bug).
    assert jnp.allclose(u, u_r, atol=2e-2, rtol=2e-2)
    assert jnp.allclose(mean, mean_r, atol=2e-2, rtol=2e-2)
    assert jnp.allclose(std, std_r, atol=2e-2, rtol=2e-2)

    print("KERNEL_OK")
</pallas_src>

<mosaic_0001>
module attributes {stable_mosaic.version = 11 : i64} {
  func.func @vae_kernel(%arg0: memref<8x20xbf16, #tpu.memory_space<vmem>>, %arg1: memref<8x16xbf16, #tpu.memory_space<vmem>>, %arg2: memref<8x24xf32, #tpu.memory_space<vmem>>, %arg3: memref<20x768xbf16, #tpu.memory_space<vmem>>, %arg4: memref<1x768xf32, #tpu.memory_space<vmem>>, %arg5: memref<768x768xbf16, #tpu.memory_space<vmem>>, %arg6: memref<1x768xf32, #tpu.memory_space<vmem>>, %arg7: memref<768x24xbf16, #tpu.memory_space<vmem>>, %arg8: memref<1x24xf32, #tpu.memory_space<vmem>>, %arg9: memref<16x768xbf16, #tpu.memory_space<vmem>>, %arg10: memref<24x768xbf16, #tpu.memory_space<vmem>>, %arg11: memref<1x768xf32, #tpu.memory_space<vmem>>, %arg12: memref<768x768xbf16, #tpu.memory_space<vmem>>, %arg13: memref<1x768xf32, #tpu.memory_space<vmem>>, %arg14: memref<768x24xbf16, #tpu.memory_space<vmem>>, %arg15: memref<1x24xf32, #tpu.memory_space<vmem>>, %arg16: memref<8x24xf32, #tpu.memory_space<vmem>>) attributes {dimension_semantics = [], scalar_prefetch = 0 : i64, scratch_operands = 0 : i64, tpu.core_type = #tpu.core_type<tc>} {
    %c0 = arith.constant 0 : index
    %c0_0 = arith.constant 0 : index
    %0 = vector.load %arg0[%c0, %c0_0] : memref<8x20xbf16, #tpu.memory_space<vmem>>, vector<8x20xbf16>
    %c0_1 = arith.constant 0 : index
    %c0_2 = arith.constant 0 : index
    %1 = vector.load %arg1[%c0_1, %c0_2] : memref<8x16xbf16, #tpu.memory_space<vmem>>, vector<8x16xbf16>
    %c0_3 = arith.constant 0 : index
    %c0_4 = arith.constant 0 : index
    %2 = vector.load %arg2[%c0_3, %c0_4] : memref<8x24xf32, #tpu.memory_space<vmem>>, vector<8x24xf32>
    %c0_5 = arith.constant 0 : index
    %c0_6 = arith.constant 0 : index
    %3 = vector.load %arg3[%c0_5, %c0_6] : memref<20x768xbf16, #tpu.memory_space<vmem>>, vector<20x768xbf16>
    %cst = arith.constant dense<0.000000e+00> : vector<8x768xf32>
    %4 = tpu.matmul %0, %3, %cst {dimension_numbers = #tpu.dot_dimension_numbers<[1], [0], [0], [1], [0, 0, 1, 1], [], []>} : vector<8x20xbf16>, vector<20x768xbf16>, vector<8x768xf32> -> vector<8x768xf32>
    %c0_7 = arith.constant 0 : index
    %c0_8 = arith.constant 0 : index
    %5 = vector.load %arg4[%c0_7, %c0_8] : memref<1x768xf32, #tpu.memory_space<vmem>>, vector<1x768xf32>
    %6 = vector.broadcast %5 : vector<1x768xf32> to vector<8x768xf32>
    %7 = arith.addf %4, %6 : vector<8x768xf32>
    %cst_9 = arith.constant 0.000000e+00 : f32
    %8 = vector.broadcast %cst_9 : f32 to vector<8x768xf32>
    %9 = arith.maximumf %7, %8 : vector<8x768xf32>
    %10 = arith.truncf %9 : vector<8x768xf32> to vector<8x768xbf16>
    %c0_10 = arith.constant 0 : index
    %c0_11 = arith.constant 0 : index
    %11 = vector.load %arg5[%c0_10, %c0_11] : memref<768x768xbf16, #tpu.memory_space<vmem>>, vector<768x768xbf16>
    %cst_12 = arith.constant dense<0.000000e+00> : vector<8x768xf32>
    %12 = tpu.matmul %10, %11, %cst_12 {dimension_numbers = #tpu.dot_dimension_numbers<[1], [0], [0], [1], [0, 0, 1, 1], [], []>} : vector<8x768xbf16>, vector<768x768xbf16>, vector<8x768xf32> -> vector<8x768xf32>
    %c0_13 = arith.constant 0 : index
    %c0_14 = arith.constant 0 : index
    %13 = vector.load %arg6[%c0_13, %c0_14] : memref<1x768xf32, #tpu.memory_space<vmem>>, vector<1x768xf32>
    %14 = vector.broadcast %13 : vector<1x768xf32> to vector<8x768xf32>
    %15 = arith.addf %12, %14 : vector<8x768xf32>
    %cst_15 = arith.constant 0.000000e+00 : f32
    %16 = vector.broadcast %cst_15 : f32 to vector<8x768xf32>
    %17 = arith.maximumf %15, %16 : vector<8x768xf32>
    %18 = arith.truncf %17 : vector<8x768xf32> to vector<8x768xbf16>
    %c0_16 = arith.constant 0 : index
    %c0_17 = arith.constant 0 : index
    %19 = vector.load %arg7[%c0_16, %c0_17] : memref<768x24xbf16, #tpu.memory_space<vmem>>, vector<768x24xbf16>
    %cst_18 = arith.constant dense<0.000000e+00> : vector<8x24xf32>
    %20 = tpu.matmul %18, %19, %cst_18 {dimension_numbers = #tpu.dot_dimension_numbers<[1], [0], [0], [1], [0, 0, 1, 1], [], []>} : vector<8x768xbf16>, vector<768x24xbf16>, vector<8x24xf32> -> vector<8x24xf32>
    %c0_19 = arith.constant 0 : index
    %c0_20 = arith.constant 0 : index
    %21 = vector.load %arg8[%c0_19, %c0_20] : memref<1x24xf32, #tpu.memory_space<vmem>>, vector<1x24xf32>
    %22 = vector.broadcast %21 : vector<1x24xf32> to vector<8x24xf32>
    %23 = arith.addf %20, %22 : vector<8x24xf32>
    %24 = tpu.iota {dimensions = array<i32: 1>} : vector<8x24xi32>
    %c4_i32 = arith.constant 4 : i32
    %25 = vector.broadcast %c4_i32 : i32 to vector<8x24xi32>
    %26 = arith.cmpi sge, %24, %25 : vector<8x24xi32>
    %c12_i32 = arith.constant 12 : i32
    %27 = vector.broadcast %c12_i32 : i32 to vector<8x24xi32>
    %28 = arith.cmpi slt, %24, %27 : vector<8x24xi32>
    %29 = arith.andi %26, %28 : vector<8x24xi1>
    %c12_i32_21 = arith.constant 12 : i32
    %30 = vector.broadcast %c12_i32_21 : i32 to vector<8x24xi32>
    %31 = arith.cmpi sge, %24, %30 : vector<8x24xi32>
    %c20_i32 = arith.constant 20 : i32
    %32 = vector.broadcast %c20_i32 : i32 to vector<8x24xi32>
    %33 = arith.cmpi slt, %24, %32 : vector<8x24xi32>
    %34 = arith.andi %31, %33 : vector<8x24xi1>
    %cst_22 = arith.constant -4.000000e+00 : f32
    %cst_23 = arith.constant 1.500000e+01 : f32
    %35 = vector.broadcast %cst_22 : f32 to vector<8x24xf32>
    %36 = arith.maximumf %35, %23 : vector<8x24xf32>
    %37 = vector.broadcast %cst_23 : f32 to vector<8x24xf32>
    %38 = arith.minimumf %37, %36 : vector<8x24xf32>
    %39 = math.exp %38 : vector<8x24xf32>
    %cst_24 = arith.constant 0.000000e+00 : f32
    %40 = vector.broadcast %cst_24 : f32 to vector<8x24xf32>
    %41 = arith.select %34, %39, %40 : vector<8x24xi1>, vector<8x24xf32>
    %42 = arith.select %29, %23, %41 : vector<8x24xi1>, vector<8x24xf32>
    %43 = arith.mulf %42, %2 : vector<8x24xf32>
    %c0_25 = arith.constant 0 : index
    %c0_26 = arith.constant 0 : index
    %44 = vector.load %arg9[%c0_25, %c0_26] : memref<16x768xbf16, #tpu.memory_space<vmem>>, vector<16x768xbf16>
    %cst_27 = arith.constant dense<0.000000e+00> : vector<8x768xf32>
    %45 = tpu.matmul %1, %44, %cst_27 {dimension_numbers = #tpu.dot_dimension_numbers<[1], [0], [0], [1], [0, 0, 1, 1], [], []>} : vector<8x16xbf16>, vector<16x768xbf16>, vector<8x768xf32> -> vector<8x768xf32>
    %46 = arith.truncf %43 : vector<8x24xf32> to vector<8x24xbf16>
    %c0_28 = arith.constant 0 : index
    %c0_29 = arith.constant 0 : index
    %47 = vector.load %arg10[%c0_28, %c0_29] : memref<24x768xbf16, #tpu.memory_space<vmem>>, vector<24x768xbf16>
    %cst_30 = arith.constant dense<0.000000e+00> : vector<8x768xf32>
    %48 = tpu.matmul %46, %47, %cst_30 {dimension_numbers = #tpu.dot_dimension_numbers<[1], [0], [0], [1], [0, 0, 1, 1], [], []>} : vector<8x24xbf16>, vector<24x768xbf16>, vector<8x768xf32> -> vector<8x768xf32>
    %49 = arith.addf %45, %48 : vector<8x768xf32>
    %c0_31 = arith.constant 0 : index
    %c0_32 = arith.constant 0 : index
    %50 = vector.load %arg11[%c0_31, %c0_32] : memref<1x768xf32, #tpu.memory_space<vmem>>, vector<1x768xf32>
    %51 = vector.broadcast %50 : vector<1x768xf32> to vector<8x768xf32>
    %52 = arith.addf %49, %51 : vector<8x768xf32>
    %cst_33 = arith.constant 0.000000e+00 : f32
    %53 = vector.broadcast %cst_33 : f32 to vector<8x768xf32>
    %54 = arith.maximumf %52, %53 : vector<8x768xf32>
    %55 = arith.truncf %54 : vector<8x768xf32> to vector<8x768xbf16>
    %c0_34 = arith.constant 0 : index
    %c0_35 = arith.constant 0 : index
    %56 = vector.load %arg12[%c0_34, %c0_35] : memref<768x768xbf16, #tpu.memory_space<vmem>>, vector<768x768xbf16>
    %cst_36 = arith.constant dense<0.000000e+00> : vector<8x768xf32>
    %57 = tpu.matmul %55, %56, %cst_36 {dimension_numbers = #tpu.dot_dimension_numbers<[1], [0], [0], [1], [0, 0, 1, 1], [], []>} : vector<8x768xbf16>, vector<768x768xbf16>, vector<8x768xf32> -> vector<8x768xf32>
    %c0_37 = arith.constant 0 : index
    %c0_38 = arith.constant 0 : index
    %58 = vector.load %arg13[%c0_37, %c0_38] : memref<1x768xf32, #tpu.memory_space<vmem>>, vector<1x768xf32>
    %59 = vector.broadcast %58 : vector<1x768xf32> to vector<8x768xf32>
    %60 = arith.addf %57, %59 : vector<8x768xf32>
    %cst_39 = arith.constant 0.000000e+00 : f32
    %61 = vector.broadcast %cst_39 : f32 to vector<8x768xf32>
    %62 = arith.maximumf %60, %61 : vector<8x768xf32>
    %63 = arith.truncf %62 : vector<8x768xf32> to vector<8x768xbf16>
    %c0_40 = arith.constant 0 : index
    %c0_41 = arith.constant 0 : index
    %64 = vector.load %arg14[%c0_40, %c0_41] : memref<768x24xbf16, #tpu.memory_space<vmem>>, vector<768x24xbf16>
    %cst_42 = arith.constant dense<0.000000e+00> : vector<8x24xf32>
    %65 = tpu.matmul %63, %64, %cst_42 {dimension_numbers = #tpu.dot_dimension_numbers<[1], [0], [0], [1], [0, 0, 1, 1], [], []>} : vector<8x768xbf16>, vector<768x24xbf16>, vector<8x24xf32> -> vector<8x24xf32>
    %c0_43 = arith.constant 0 : index
    %c0_44 = arith.constant 0 : index
    %66 = vector.load %arg15[%c0_43, %c0_44] : memref<1x24xf32, #tpu.memory_space<vmem>>, vector<1x24xf32>
    %67 = vector.broadcast %66 : vector<1x24xf32> to vector<8x24xf32>
    %68 = arith.addf %65, %67 : vector<8x24xf32>
    %69 = math.tanh %68 : vector<8x24xf32>
    %cst_45 = arith.constant 1.000000e+00 : f32
    %70 = vector.broadcast %cst_45 : f32 to vector<8x24xf32>
    %71 = arith.mulf %70, %69 : vector<8x24xf32>
    %72 = arith.addf %71, %42 : vector<8x24xf32>
    %c0_46 = arith.constant 0 : index
    %c0_47 = arith.constant 0 : index
    %73 = vector.load %arg16[%c0_46, %c0_47] : memref<8x24xf32, #tpu.memory_space<vmem>>, vector<8x24xf32>
    tpu.vector_store %arg16[%c0_46, %c0_47], %72 {strides = array<i32>} : memref<8x24xf32, #tpu.memory_space<vmem>>, vector<8x24xf32>,
    return
  }
}

</mosaic_0001>

<llo_original>
// kernel: vae_forward.1
$region0: #{vae_forward.1}
  #allocation0 [shape = 'u32[]', space=smem, size = 0x4, offset = 0x4, fixed_abs, tag = 'smem constant byte address 0x4 - core index']
  #allocation1 [shape = 'u32[72,128]{1,0:T(1,128)}', space=vmem, size = 0x9000, scoped, tag = 'internal scratch']
  %s0 = inlined_call_operand.vmem [shape: bf16[8,20], index: 0, kind: input, shape index: {}]
  %s1 = inlined_call_operand.vmem [shape: bf16[8,16], index: 1, kind: input, shape index: {}]
  %s2 = inlined_call_operand.vmem [shape: f32[8,24], index: 2, kind: input, shape index: {}]
  %s3 = inlined_call_operand.hbm [shape: bf16[20,768], index: 3, kind: input, shape index: {}]
  %s4 = inlined_call_operand.hbm [shape: f32[1,768], index: 4, kind: input, shape index: {}]
  %s5 = inlined_call_operand.hbm [shape: bf16[768,768], index: 5, kind: input, shape index: {}]
  %s6 = inlined_call_operand.hbm [shape: f32[1,768], index: 6, kind: input, shape index: {}]
  %s7 = inlined_call_operand.vmem [shape: bf16[768,24], index: 7, kind: input, shape index: {}]
  %s8 = inlined_call_operand.hbm [shape: f32[1,24], index: 8, kind: input, shape index: {}]
  %s9 = inlined_call_operand.hbm [shape: bf16[16,768], index: 9, kind: input, shape index: {}]
  %s10 = inlined_call_operand.hbm [shape: bf16[24,768], index: 10, kind: input, shape index: {}]
  %s11 = inlined_call_operand.hbm [shape: f32[1,768], index: 11, kind: input, shape index: {}]
  %s12 = inlined_call_operand.hbm [shape: bf16[768,768], index: 12, kind: input, shape index: {}]
  %s13 = inlined_call_operand.hbm [shape: f32[1,768], index: 13, kind: input, shape index: {}]
  %s14 = inlined_call_operand.vmem [shape: bf16[768,24], index: 14, kind: input, shape index: {}]
  %s15 = inlined_call_operand.hbm [shape: f32[1,24], index: 15, kind: input, shape index: {}]
  %s16 = inlined_call_operand.vmem [shape: f32[8,24], index: 16, kind: output, shape index: {}]
  %s17 = sld [smem:[#allocation0]]
  $region118: #{vae_forward.1} parent=0
    _
  %s19 = ssub.s32 1, %s17
  %s20 = scalar_select 0, %s19, %s17
  $region1: #{vae_forward.1} parent=0
    #allocation2 [shape = 'u8[36864]{0}', space=vmem, size = 0x9000, scoped, tag = 'input window, operand 3, single buffered']
    #allocation3 [shape = 's32[1]{0}', space=sflag, size = 0x4, scoped, tag = 'scoped memory for vae_forward.1']
    #allocation4 [shape = 'u8[3072]{0}', space=vmem, size = 0xc00, scoped, tag = 'input window, operand 4, single buffered']
    #allocation5 [shape = 's32[1]{0}', space=sflag, size = 0x4, scoped, tag = 'scoped memory for vae_forward.1']
    #allocation6 [shape = 'u8[1179648]{0}', space=vmem, size = 0x120000, scoped, tag = 'input window, operand 5, single buffered']
    #allocation7 [shape = 'u8[3072]{0}', space=vmem, size = 0xc00, scoped, tag = 'input window, operand 6, single buffered']
    #allocation8 [shape = 's32[1]{0}', space=sflag, size = 0x4, scoped, tag = 'scoped memory for vae_forward.1']
    #allocation9 [shape = 'u8[512]{0}', space=vmem, size = 0x400, scoped, tag = 'input window, operand 8, single buffered']
    #allocation10 [shape = 'u8[24576]{0}', space=vmem, size = 0x6000, scoped, tag = 'input window, operand 9, single buffered']
    #allocation11 [shape = 's32[1]{0}', space=sflag, size = 0x4, scoped, tag = 'scoped memory for vae_forward.1']
    #allocation12 [shape = 'u8[36864]{0}', space=vmem, size = 0x9000, scoped, tag = 'input window, operand 10, single buffered']
    #allocation13 [shape = 'u8[3072]{0}', space=vmem, size = 0xc00, scoped, tag = 'input window, operand 11, single buffered']
    #allocation14 [shape = 's32[1]{0}', space=sflag, size = 0x4, scoped, tag = 'scoped memory for vae_forward.1']
    #allocation15 [shape = 'u8[1179648]{0}', space=vmem, size = 0x120000, scoped, tag = 'input window, operand 12, single buffered']
    #allocation16 [shape = 'u8[3072]{0}', space=vmem, size = 0xc00, scoped, tag = 'input window, operand 13, single buffered']
    #allocation17 [shape = 's32[1]{0}', space=sflag, size = 0x4, scoped, tag = 'scoped memory for vae_forward.1']
    #allocation18 [shape = 'u8[512]{0}', space=vmem, size = 0x400, scoped, tag = 'input window, operand 15, single buffered']
    %21 = vsyncpa [#allocation3], 0
    %22 = vsyncpa [#allocation5], 0
    %23 = vsyncpa [#allocation8], 0
    %24 = vsyncpa [#allocation11], 0
    %25 = vsyncpa [#allocation14], 0
    %26 = vsyncpa [#allocation17], 0
    // Predicated region
    $region2: #{vae_forward.1} parent=1 // pred_check
      _
    $region3: #{vae_forward.1} parent=1 // pred_check_branch
      %28 = sbr.rel (0) target = $region5
    $region4: #{vae_forward.1} parent=1 // pred_region
      _
    $region5: #{vae_forward.1} parent=1 // pred_fallthru
      _
    // Predicated region
    $region6: #{vae_forward.1} parent=1 // pred_check
      _
    $region7: #{vae_forward.1} parent=1 // pred_check_branch
      %30 = sbr.rel (0) target = $region9
    $region8: #{vae_forward.1} parent=1 // pred_region
      _
    $region9: #{vae_forward.1} parent=1 // pred_fallthru
      _
    // Predicated region
    $region10: #{vae_forward.1} parent=1 // pred_check
      _
    $region11: #{vae_forward.1} parent=1 // pred_check_branch
      %32 = sbr.rel (0) target = $region13
    $region12: #{vae_forward.1} parent=1 // pred_region
      _
    $region13: #{vae_forward.1} parent=1 // pred_fallthru
      _
    // Predicated region
    $region14: #{vae_forward.1} parent=1 // pred_check
      _
    $region15: #{vae_forward.1} parent=1 // pred_check_branch
      %34 = sbr.rel (0) target = $region17
    $region16: #{vae_forward.1} parent=1 // pred_region
      %36 = vsyncadd [#allocation3], 0
      %s37 = sshll.u32 %s3, 4
      %s38 = int_to_ptr.hbm [resolvable:$true] %s37
      %s39 = sshll.u32 [#allocation2], 4
      %s40 = int_to_ptr.vmem [resolvable:$true] %s39
      %45 = dma.hbm_to_vmem [thread:$0]  %s38, 1152, %s40, [#allocation3], 384, 384, 24
    $region17: #{vae_forward.1} parent=1 // pred_fallthru
      _
    // Predicated region
    $region18: #{vae_forward.1} parent=1 // pred_check
      _
    $region19: #{vae_forward.1} parent=1 // pred_check_branch
      %47 = sbr.rel (0) target = $region21
    $region20: #{vae_forward.1} parent=1 // pred_region
      %49 = vsyncadd [#allocation5], 0
      %s51 = sshll.u32 %s4, 4
      %s52 = int_to_ptr.hbm [resolvable:$true] %s51
      %s53 = sshll.u32 [#allocation4], 4
      %s54 = int_to_ptr.vmem [resolvable:$true] %s53
      %56 = dma.hbm_to_vmem [thread:$0]  %s52, 96, %s54, [#allocation5]
    $region21: #{vae_forward.1} parent=1 // pred_fallthru
      _
    // Predicated region
    $region22: #{vae_forward.1} parent=1 // pred_check
      _
    $region23: #{vae_forward.1} parent=1 // pred_check_branch
      %58 = sbr.rel (0) target = $region25
    $region24: #{vae_forward.1} parent=1 // pred_region
      %60 = vsyncadd [#allocation5], 0
      %s61 = sshll.u32 %s5, 4
      %s62 = int_to_ptr.hbm [resolvable:$true] %s61
      %s63 = sshll.u32 [#allocation6], 4
      %s64 = int_to_ptr.vmem [resolvable:$true] %s63
      %69 = dma.hbm_to_vmem [thread:$0]  %s62, 36864, %s64, [#allocation5], 384, 384, 24
    $region25: #{vae_forward.1} parent=1 // pred_fallthru
      _
    // Predicated region
    $region26: #{vae_forward.1} parent=1 // pred_check
      _
    $region27: #{vae_forward.1} parent=1 // pred_check_branch
      %71 = sbr.rel (0) target = $region29
    $region28: #{vae_forward.1} parent=1 // pred_region
      %73 = vsyncadd [#allocation8], 0
      %s75 = sshll.u32 %s6, 4
      %s76 = int_to_ptr.hbm [resolvable:$true] %s75
      %s77 = sshll.u32 [#allocation7], 4
      %s78 = int_to_ptr.vmem [resolvable:$true] %s77
      %80 = dma.hbm_to_vmem [thread:$0]  %s76, 96, %s78, [#allocation8]
    $region29: #{vae_forward.1} parent=1 // pred_fallthru
      _
    // Predicated region
    $region30: #{vae_forward.1} parent=1 // pred_check
      _
    $region31: #{vae_forward.1} parent=1 // pred_check_branch
      %82 = sbr.rel (0) target = $region33
    $region32: #{vae_forward.1} parent=1 // pred_region
      _
    $region33: #{vae_forward.1} parent=1 // pred_fallthru
      _
    // Predicated region
    $region34: #{vae_forward.1} parent=1 // pred_check
      _
    $region35: #{vae_forward.1} parent=1 // pred_check_branch
      %84 = sbr.rel (0) target = $region37
    $region36: #{vae_forward.1} parent=1 // pred_region
      %86 = vsyncadd [#allocation8], 0
      %s88 = sshll.u32 %s8, 4
      %s89 = int_to_ptr.hbm [resolvable:$true] %s88
      %s90 = sshll.u32 [#allocation9], 4
      %s91 = int_to_ptr.vmem [resolvable:$true] %s90
      %93 = dma.hbm_to_vmem [thread:$0]  %s89, 16, %s91, [#allocation8]
    $region37: #{vae_forward.1} parent=1 // pred_fallthru
      _
    // Predicated region
    $region38: #{vae_forward.1} parent=1 // pred_check
      _
    $region39: #{vae_forward.1} parent=1 // pred_check_branch
      %95 = sbr.rel (0) target = $region41
    $region40: #{vae_forward.1} parent=1 // pred_region
      %97 = vsyncadd [#allocation11], 0
      %s98 = sshll.u32 %s9, 4
      %s99 = int_to_ptr.hbm [resolvable:$true] %s98
      %s100 = sshll.u32 [#allocation10], 4
      %s101 = int_to_ptr.vmem [resolvable:$true] %s100
      %106 = dma.hbm_to_vmem [thread:$0]  %s99, 768, %s101, [#allocation11], 384, 384, 24
    $region41: #{vae_forward.1} parent=1 // pred_fallthru
      _
    // Predicated region
    $region42: #{vae_forward.1} parent=1 // pred_check
      _
    $region43: #{vae_forward.1} parent=1 // pred_check_branch
      %108 = sbr.rel (0) target = $region45
    $region44: #{vae_forward.1} parent=1 // pred_region
      %110 = vsyncadd [#allocation11], 0
      %s111 = sshll.u32 %s10, 4
      %s112 = int_to_ptr.hbm [resolvable:$true] %s111
      %s113 = sshll.u32 [#allocation12], 4
      %s114 = int_to_ptr.vmem [resolvable:$true] %s113
      %119 = dma.hbm_to_vmem [thread:$0]  %s112, 1152, %s114, [#allocation11], 384, 384, 24
    $region45: #{vae_forward.1} parent=1 // pred_fallthru
      _
    // Predicated region
    $region46: #{vae_forward.1} parent=1 // pred_check
      _
    $region47: #{vae_forward.1} parent=1 // pred_check_branch
      %121 = sbr.rel (0) target = $region49
    $region48: #{vae_forward.1} parent=1 // pred_region
      %123 = vsyncadd [#allocation14], 0
      %s125 = sshll.u32 %s11, 4
      %s126 = int_to_ptr.hbm [resolvable:$true] %s125
      %s127 = sshll.u32 [#allocation13], 4
      %s128 = int_to_ptr.vmem [resolvable:$true] %s127
      %130 = dma.hbm_to_vmem [thread:$0]  %s126, 96, %s128, [#allocation14]
    $region49: #{vae_forward.1} parent=1 // pred_fallthru
      _
    // Predicated region
    $region50: #{vae_forward.1} parent=1 // pred_check
      _
    $region51: #{vae_forward.1} parent=1 // pred_check_branch
      %132 = sbr.rel (0) target = $region53
    $region52: #{vae_forward.1} parent=1 // pred_region
      %134 = vsyncadd [#allocation14], 0
      %s135 = sshll.u32 %s12, 4
      %s136 = int_to_ptr.hbm [resolvable:$true] %s135
      %s137 = sshll.u32 [#allocation15], 4
      %s138 = int_to_ptr.vmem [resolvable:$true] %s137
      %143 = dma.hbm_to_vmem [thread:$0]  %s136, 36864, %s138, [#allocation14], 384, 384, 24
    $region53: #{vae_forward.1} parent=1 // pred_fallthru
      _
    // Predicated region
    $region54: #{vae_forward.1} parent=1 // pred_check
      _
    $region55: #{vae_forward.1} parent=1 // pred_check_branch
      %145 = sbr.rel (0) target = $region57
    $region56: #{vae_forward.1} parent=1 // pred_region
      %147 = vsyncadd [#allocation17], 0
      %s149 = sshll.u32 %s13, 4
      %s150 = int_to_ptr.hbm [resolvable:$true] %s149
      %s151 = sshll.u32 [#allocation16], 4
      %s152 = int_to_ptr.vmem [resolvable:$true] %s151
      %154 = dma.hbm_to_vmem [thread:$0]  %s150, 96, %s152, [#allocation17]
    $region57: #{vae_forward.1} parent=1 // pred_fallthru
      _
    // Predicated region
    $region58: #{vae_forward.1} parent=1 // pred_check
      _
    $region59: #{vae_forward.1} parent=1 // pred_check_branch
      %156 = sbr.rel (0) target = $region61
    $region60: #{vae_forward.1} parent=1 // pred_region
      _
    $region61: #{vae_forward.1} parent=1 // pred_fallthru
      _
    // Predicated region
    $region62: #{vae_forward.1} parent=1 // pred_check
      _
    $region63: #{vae_forward.1} parent=1 // pred_check_branch
      %158 = sbr.rel (0) target = $region65
    $region64: #{vae_forward.1} parent=1 // pred_region
      %160 = vsyncadd [#allocation17], 0
      %s162 = sshll.u32 %s15, 4
      %s163 = int_to_ptr.hbm [resolvable:$true] %s162
      %s164 = sshll.u32 [#allocation18], 4
      %s165 = int_to_ptr.vmem [resolvable:$true] %s164
      %167 = dma.hbm_to_vmem [thread:$0]  %s163, 16, %s165, [#allocation17]
    $region65: #{vae_forward.1} parent=1 // pred_fallthru
      _
    // Predicated region
    $region66: #{vae_forward.1} parent=1 // pred_check
      _
    $region67: #{vae_forward.1} parent=1 // pred_check_branch
      %169 = sbr.rel (0) target = $region69
    $region68: #{vae_forward.1} parent=1 // pred_region
      %171 = dma.done [#allocation3], 1152
    $region69: #{vae_forward.1} parent=1 // pred_fallthru
      _
    // Predicated region
    $region70: #{vae_forward.1} parent=1 // pred_check
      _
    $region71: #{vae_forward.1} parent=1 // pred_check_branch
      %173 = sbr.rel (0) target = $region73
    $region72: #{vae_forward.1} parent=1 // pred_region
      %175 = dma.done [#allocation5], 96
    $region73: #{vae_forward.1} parent=1 // pred_fallthru
      _
    // Predicated region
    $region74: #{vae_forward.1} parent=1 // pred_check
      _
    $region75: #{vae_forward.1} parent=1 // pred_check_branch
      %177 = sbr.rel (0) target = $region77
    $region76: #{vae_forward.1} parent=1 // pred_region
      %179 = dma.done [#allocation5], 36864
    $region77: #{vae_forward.1} parent=1 // pred_fallthru
      _
    // Predicated region
    $region78: #{vae_forward.1} parent=1 // pred_check
      _
    $region79: #{vae_forward.1} parent=1 // pred_check_branch
      %181 = sbr.rel (0) target = $region81
    $region80: #{vae_forward.1} parent=1 // pred_region
      %183 = dma.done [#allocation8], 96
    $region81: #{vae_forward.1} parent=1 // pred_fallthru
      _
    // Predicated region
    $region82: #{vae_forward.1} parent=1 // pred_check
      _
    $region83: #{vae_forward.1} parent=1 // pred_check_branch
      %185 = sbr.rel (0) target = $region85
    $region84: #{vae_forward.1} parent=1 // pred_region
      %187 = dma.done [#allocation8], 16
    $region85: #{vae_forward.1} parent=1 // pred_fallthru
      _
    // Predicated region
    $region86: #{vae_forward.1} parent=1 // pred_check
      _
    $region87: #{vae_forward.1} parent=1 // pred_check_branch
      %189 = sbr.rel (0) target = $region89
    $region88: #{vae_forward.1} parent=1 // pred_region
      %191 = dma.done [#allocation11], 768
    $region89: #{vae_forward.1} parent=1 // pred_fallthru
      _
    // Predicated region
    $region90: #{vae_forward.1} parent=1 // pred_check
      _
    $region91: #{vae_forward.1} parent=1 // pred_check_branch
      %193 = sbr.rel (0) target = $region93
    $region92: #{vae_forward.1} parent=1 // pred_region
      %195 = dma.done [#allocation11], 1152
    $region93: #{vae_forward.1} parent=1 // pred_fallthru
      _
    // Predicated region
    $region94: #{vae_forward.1} parent=1 // pred_check
      _
    $region95: #{vae_forward.1} parent=1 // pred_check_branch
      %197 = sbr.rel (0) target = $region97
    $region96: #{vae_forward.1} parent=1 // pred_region
      %199 = dma.done [#allocation14], 96
    $region97: #{vae_forward.1} parent=1 // pred_fallthru
      _
    // Predicated region
    $region98: #{vae_forward.1} parent=1 // pred_check
      _
    $region99: #{vae_forward.1} parent=1 // pred_check_branch
      %201 = sbr.rel (0) target = $region101
    $region100: #{vae_forward.1} parent=1 // pred_region
      %203 = dma.done [#allocation14], 36864
    $region101: #{vae_forward.1} parent=1 // pred_fallthru
      _
    // Predicated region
    $region102: #{vae_forward.1} parent=1 // pred_check
      _
    $region103: #{vae_forward.1} parent=1 // pred_check_branch
      %205 = sbr.rel (0) target = $region105
    $region104: #{vae_forward.1} parent=1 // pred_region
      %207 = dma.done [#allocation17], 96
    $region105: #{vae_forward.1} parent=1 // pred_fallthru
      _
    // Predicated region
    $region106: #{vae_forward.1} parent=1 // pred_check
      _
    $region107: #{vae_forward.1} parent=1 // pred_check_branch
      %209 = sbr.rel (0) target = $region109
    $region108: #{vae_forward.1} parent=1 // pred_region
      %211 = dma.done [#allocation17], 16
    $region109: #{vae_forward.1} parent=1 // pred_fallthru
      _
    %v213 = vld [vmem:[%s0] sm:$0xf]
    %v214 = vld [vmem:[%s1] sm:$0xf]
    %v215 = vld [vmem:[%s2] sm:$0xff]
    %v216 = vld [vmem:[#allocation2] sm:$0xff]
    %v217 = vld [vmem:[#allocation2 + $0x8] sm:$0xff]
    %v218 = vld [vmem:[#allocation2 + $0x10] sm:$0xff]
    %v219 = vld [vmem:[#allocation2 + $0x18] sm:$0xff]
    %v220 = vld [vmem:[#allocation2 + $0x20] sm:$0xff]
    %v221 = vld [vmem:[#allocation2 + $0x28] sm:$0xff]
    %v222 = vld [vmem:[#allocation2 + $0x30] sm:$0x33]
    %v223 = vld [vmem:[#allocation2 + $0x38] sm:$0x33]
    %v224 = vld [vmem:[#allocation2 + $0x40] sm:$0x33]
    %v225 = vld [vmem:[#allocation4] sm:$0x3f]
    %v227 = vperm.slane %v225, 0
    %v228 = vperm.slane %v225, 1
    %v229 = vperm.slane %v225, 2
    %v230 = vperm.slane %v225, 3
    %v231 = vperm.slane %v225, 4
    %v232 = vperm.slane %v225, 5
    %v248 = vunpack.c.l.b16 %v216
    %v249 = vunpack.c.h.b16 %v216
    %v250 = vunpack.c.l.b16 %v217
    %v251 = vunpack.c.h.b16 %v217
    %v252 = vunpack.c.l.b16 %v218
    %v253 = vunpack.c.h.b16 %v218
    %v254 = vunpack.c.l.b16 %v219
    %v255 = vunpack.c.h.b16 %v219
    %v256 = vunpack.c.l.b16 %v220
    %v257 = vunpack.c.h.b16 %v220
    %v258 = vunpack.c.l.b16 %v221
    %v259 = vunpack.c.h.b16 %v221
    %v260 = vunpack.c.l.b16 %v222
    %v261 = vunpack.c.h.b16 %v222
    %v262 = vunpack.c.l.b16 %v223
    %v263 = vunpack.c.h.b16 %v223
    %v264 = vunpack.c.l.b16 %v224
    %v265 = vunpack.c.h.b16 %v224
    %v266 = vpack.c.b16 %v254, %v248
    %v267 = vpack.c.b16 %v255, %v249
    %v268 = vpack.c.b16 %v256, %v250
    %v269 = vpack.c.b16 %v257, %v251
    %v270 = vpack.c.b16 %v258, %v252
    %v271 = vpack.c.b16 %v259, %v253
    %v272 = vpack.c.b16 %v260, %v260
    %v273 = vpack.c.b16 %v261, %v261
    %v274 = vpack.c.b16 %v262, %v262
    %v275 = vpack.c.b16 %v263, %v263
    %v276 = vpack.c.b16 %v264, %v264
    %v277 = vpack.c.b16 %v265, %v265
    %vm284 = vcmask 162816
    %v286 = vsel %vm284, %v213, 0
    %vm288 = vcmask 1041408
    %v290 = vsel %vm288, %v272, 0
    %v293 = vsel %vm288, %v273, 0
    %v296 = vsel %vm288, %v274, 0
    %v299 = vsel %vm288, %v275, 0
    %v302 = vsel %vm288, %v276, 0
    %v305 = vsel %vm288, %v277, 0
    %307 = vmatpush.bf16.msra.mxu0 0
    %308 = vmatpush.bf16.msra.mxu0 0
    %309 = vmatpush.bf16.msra.mxu0 0
    %310 = vmatpush.bf16.msra.mxu0 0
    %311 = vmatpush.bf16.msra.mxu0 0
    %312 = vmatpush.bf16.msra.mxu0 0
    %313 = vmatpush.bf16.msra.mxu0 %v290
    %314 = vmatpush.bf16.msra.mxu0 %v266
    %315 = vmatmul.bf16.gmra.mxu0 %v286
    %v316 = vpop.f32.mrf.mxu0
    %v317 = vadd.f32 %v227, %v316
    %v318 = vpop.f32.mrf.mxu0
    %319 = vdwg.mxu0
    %320 = vmatpush.bf16.msra.mxu0 0
    %321 = vmatpush.bf16.msra.mxu0 0
    %322 = vmatpush.bf16.msra.mxu0 0
    %323 = vmatpush.bf16.msra.mxu0 0
    %324 = vmatpush.bf16.msra.mxu0 0
    %325 = vmatpush.bf16.msra.mxu0 0
    %326 = vmatpush.bf16.msra.mxu0 %v293
    %327 = vmatpush.bf16.msra.mxu0 %v267
    %328 = vmatmul.bf16.gmra.mxu0 %v286
    %v329 = vpop.f32.mrf.mxu0
    %v330 = vadd.f32 %v228, %v329
    %v331 = vpop.f32.mrf.mxu0
    %332 = vdwg.mxu0
    %333 = vmatpush.bf16.msra.mxu0 0
    %334 = vmatpush.bf16.msra.mxu0 0
    %335 = vmatpush.bf16.msra.mxu0 0
    %336 = vmatpush.bf16.msra.mxu0 0
    %337 = vmatpush.bf16.msra.mxu0 0
    %338 = vmatpush.bf16.msra.mxu0 0
    %339 = vmatpush.bf16.msra.mxu0 %v296
    %340 = vmatpush.bf16.msra.mxu0 %v268
    %341 = vmatmul.bf16.gmra.mxu0 %v286
    %v342 = vpop.f32.mrf.mxu0
    %v343 = vadd.f32 %v229, %v342
    %v344 = vpop.f32.mrf.mxu0
    %345 = vdwg.mxu0
    %346 = vmatpush.bf16.msra.mxu0 0
    %347 = vmatpush.bf16.msra.mxu0 0
    %348 = vmatpush.bf16.msra.mxu0 0
    %349 = vmatpush.bf16.msra.mxu0 0
    %350 = vmatpush.bf16.msra.mxu0 0
    %351 = vmatpush.bf16.msra.mxu0 0
    %352 = vmatpush.bf16.msra.mxu0 %v299
    %353 = vmatpush.bf16.msra.mxu0 %v269
    %354 = vmatmul.bf16.gmra.mxu0 %v286
    %v355 = vpop.f32.mrf.mxu0
    %v356 = vadd.f32 %v230, %v355
    %v357 = vpop.f32.mrf.mxu0
    %358 = vdwg.mxu0
    %359 = vmatpush.bf16.msra.mxu0 0
    %360 = vmatpush.bf16.msra.mxu0 0
    %361 = vmatpush.bf16.msra.mxu0 0
    %362 = vmatpush.bf16.msra.mxu0 0
    %363 = vmatpush.bf16.msra.mxu0 0
    %364 = vmatpush.bf16.msra.mxu0 0
    %365 = vmatpush.bf16.msra.mxu0 %v302
    %366 = vmatpush.bf16.msra.mxu0 %v270
    %367 = vmatmul.bf16.gmra.mxu0 %v286
    %v368 = vpop.f32.mrf.mxu0
    %v369 = vadd.f32 %v231, %v368
    %v370 = vpop.f32.mrf.mxu0
    %371 = vdwg.mxu0
    %372 = vmatpush.bf16.msra.mxu0 0
    %373 = vmatpush.bf16.msra.mxu0 0
    %374 = vmatpush.bf16.msra.mxu0 0
    %375 = vmatpush.bf16.msra.mxu0 0
    %376 = vmatpush.bf16.msra.mxu0 0
    %377 = vmatpush.bf16.msra.mxu0 0
    %378 = vmatpush.bf16.msra.mxu0 %v305
    %379 = vmatpush.bf16.msra.mxu0 %v271
    %380 = vmatmul.bf16.gmra.mxu0 %v286
    %v381 = vpop.f32.mrf.mxu0
    %v382 = vadd.f32 %v232, %v381
    %v383 = vpop.f32.mrf.mxu0
    %384 = vdwg.mxu0
    %v385 = vmax.f32 %v317, 0.0
    %v386 = vmax.f32 %v330, 0.0
    %v387 = vmax.f32 %v343, 0.0
    %v388 = vmax.f32 %v356, 0.0
    %v389 = vmax.f32 %v369, 0.0
    %v390 = vmax.f32 %v382, 0.0
    %v391 = vpack.c.bf16 %v385, %v385
    %v392 = vpack.c.bf16 %v386, %v386
    %v393 = vpack.c.bf16 %v387, %v387
    %v394 = vpack.c.bf16 %v388, %v388
    %v395 = vpack.c.bf16 %v389, %v389
    %v396 = vpack.c.bf16 %v390, %v390
    %v397 = vld [vmem:[#allocation6] sm:$0xff]
    %v398 = vld [vmem:[#allocation6 + $0x8] sm:$0xff]
    %v399 = vld [vmem:[#allocation6 + $0x10] sm:$0xff]
    %v400 = vld [vmem:[#allocation6 + $0x18] sm:$0xff]
    %v401 = vld [vmem:[#allocation6 + $0x20] sm:$0xff]
    %v402 = vld [vmem:[#allocation6 + $0x28] sm:$0xff]
    %v403 = vld [vmem:[#allocation6 + $0x30] sm:$0xff]
    %v404 = vld [vmem:[#allocation6 + $0x38] sm:$0xff]
    %v405 = vld [vmem:[#allocation6 + $0x40] sm:$0xff]
    %v406 = vld [vmem:[#allocation6 + $0x48] sm:$0xff]
    %v407 = vld [vmem:[#allocation6 + $0x50] sm:$0xff]
    %v408 = vld [vmem:[#allocation6 + $0x58] sm:$0xff]
    %v409 = vld [vmem:[#allocation6 + $0x60] sm:$0xff]
    %v410 = vld [vmem:[#allocation6 + $0x68] sm:$0xff]
    %v411 = vld [vmem:[#allocation6 + $0x70] sm:$0xff]
    %v412 = vld [vmem:[#allocation6 + $0x78] sm:$0xff]
    %v413 = vld [vmem:[#allocation6 + $0x80] sm:$0xff]
    %v414 = vld [vmem:[#allocation6 + $0x88] sm:$0xff]
    %v415 = vld [vmem:[#allocation6 + $0x90] sm:$0xff]
    %v416 = vld [vmem:[#allocation6 + $0x98] sm:$0xff]
    %v417 = vld [vmem:[#allocation6 + $0xa0] sm:$0xff]
    %v418 = vld [vmem:[#allocation6 + $0xa8] sm:$0xff]
    %v419 = vld [vmem:[#allocation6 + $0xb0] sm:$0xff]
    %v420 = vld [vmem:[#allocation6 + $0xb8] sm:$0xff]
    %v421 = vld [vmem:[#allocation6 + $0xc0] sm:$0xff]
    %v422 = vld [vmem:[#allocation6 + $0xc8] sm:$0xff]
    %v423 = vld [vmem:[#allocation6 + $0xd0] sm:$0xff]
    %v424 = vld [vmem:[#allocation6 + $0xd8] sm:$0xff]
    %v425 = vld [vmem:[#allocation6 + $0xe0] sm:$0xff]
    %v426 = vld [vmem:[#allocation6 + $0xe8] sm:$0xff]
    %v427 = vld [vmem:[#allocation6 + $0xf0] sm:$0xff]
    %v428 = vld [vmem:[#allocation6 + $0xf8] sm:$0xff]
    %v429 = vld [vmem:[#allocation6 + $0x100] sm:$0xff]
    %v430 = vld [vmem:[#allocation6 + $0x108] sm:$0xff]
    %v431 = vld [vmem:[#allocation6 + $0x110] sm:$0xff]
    %v432 = vld [vmem:[#allocation6 + $0x118] sm:$0xff]
    %v433 = vld [vmem:[#allocation6 + $0x120] sm:$0xff]
    %v434 = vld [vmem:[#allocation6 + $0x128] sm:$0xff]
    %v435 = vld [vmem:[#allocation6 + $0x130] sm:$0xff]
    %v436 = vld [vmem:[#allocation6 + $0x138] sm:$0xff]
    %v437 = vld [vmem:[#allocation6 + $0x140] sm:$0xff]
    %v438 = vld [vmem:[#allocation6 + $0x148] sm:$0xff]
    %v439 = vld [vmem:[#allocation6 + $0x150] sm:$0xff]
    %v440 = vld [vmem:[#allocation6 + $0x158] sm:$0xff]
    %v441 = vld [vmem:[#allocation6 + $0x160] sm:$0xff]
    %v442 = vld [vmem:[#allocation6 + $0x168] sm:$0xff]
    %v443 = vld [vmem:[#allocation6 + $0x170] sm:$0xff]
    %v444 = vld [vmem:[#allocation6 + $0x178] sm:$0xff]
    %v445 = vld [vmem:[#allocation6 + $0x180] sm:$0xff]
    %v446 = vld [vmem:[#allocation6 + $0x188] sm:$0xff]
    %v447 = vld [vmem:[#allocation6 + $0x190] sm:$0xff]
    %v448 = vld [vmem:[#allocation6 + $0x198] sm:$0xff]
    %v449 = vld [vmem:[#allocation6 + $0x1a0] sm:$0xff]
    %v450 = vld [vmem:[#allocation6 + $0x1a8] sm:$0xff]
    %v451 = vld [vmem:[#allocation6 + $0x1b0] sm:$0xff]
    %v452 = vld [vmem:[#allocation6 + $0x1b8] sm:$0xff]
    %v453 = vld [vmem:[#allocation6 + $0x1c0] sm:$0xff]
    %v454 = vld [vmem:[#allocation6 + $0x1c8] sm:$0xff]
    %v455 = vld [vmem:[#allocation6 + $0x1d0] sm:$0xff]
    %v456 = vld [vmem:[#allocation6 + $0x1d8] sm:$0xff]
    %v457 = vld [vmem:[#allocation6 + $0x1e0] sm:$0xff]
    %v458 = vld [vmem:[#allocation6 + $0x1e8] sm:$0xff]
    %v459 = vld [vmem:[#allocation6 + $0x1f0] sm:$0xff]
    %v460 = vld [vmem:[#allocation6 + $0x1f8] sm:$0xff]
    %v461 = vld [vmem:[#allocation6 + $0x200] sm:$0xff]
    %v462 = vld [vmem:[#allocation6 + $0x208] sm:$0xff]
    %v463 = vld [vmem:[#allocation6 + $0x210] sm:$0xff]
    %v464 = vld [vmem:[#allocation6 + $0x218] sm:$0xff]
    %v465 = vld [vmem:[#allocation6 + $0x220] sm:$0xff]
    %v466 = vld [vmem:[#allocation6 + $0x228] sm:$0xff]
    %v467 = vld [vmem:[#allocation6 + $0x230] sm:$0xff]
    %v468 = vld [vmem:[#allocation6 + $0x238] sm:$0xff]
    %v469 = vld [vmem:[#allocation6 + $0x240] sm:$0xff]
    %v470 = vld [vmem:[#allocation6 + $0x248] sm:$0xff]
    %v471 = vld [vmem:[#allocation6 + $0x250] sm:$0xff]
    %v472 = vld [vmem:[#allocation6 + $0x258] sm:$0xff]
    %v473 = vld [vmem:[#allocation6 + $0x260] sm:$0xff]
    %v474 = vld [vmem:[#allocation6 + $0x268] sm:$0xff]
    %v475 = vld [vmem:[#allocation6 + $0x270] sm:$0xff]
    %v476 = vld [vmem:[#allocation6 + $0x278] sm:$0xff]
    %v477 = vld [vmem:[#allocation6 + $0x280] sm:$0xff]
    %v478 = vld [vmem:[#allocation6 + $0x288] sm:$0xff]
    %v479 = vld [vmem:[#allocation6 + $0x290] sm:$0xff]
    %v480 = vld [vmem:[#allocation6 + $0x298] sm:$0xff]
    %v481 = vld [vmem:[#allocation6 + $0x2a0] sm:$0xff]
    %v482 = vld [vmem:[#allocation6 + $0x2a8] sm:$0xff]
    %v483 = vld [vmem:[#allocation6 + $0x2b0] sm:$0xff]
    %v484 = vld [vmem:[#allocation6 + $0x2b8] sm:$0xff]
    %v485 = vld [vmem:[#allocation6 + $0x2c0] sm:$0xff]
    %v486 = vld [vmem:[#allocation6 + $0x2c8] sm:$0xff]
    %v487 = vld [vmem:[#allocation6 + $0x2d0] sm:$0xff]
    %v488 = vld [vmem:[#allocation6 + $0x2d8] sm:$0xff]
    %v489 = vld [vmem:[#allocation6 + $0x2e0] sm:$0xff]
    %v490 = vld [vmem:[#allocation6 + $0x2e8] sm:$0xff]
    %v491 = vld [vmem:[#allocation6 + $0x2f0] sm:$0xff]
    %v492 = vld [vmem:[#allocation6 + $0x2f8] sm:$0xff]
    %v493 = vld [vmem:[#allocation6 + $0x300] sm:$0xff]
    %v494 = vld [vmem:[#allocation6 + $0x308] sm:$0xff]
    %v495 = vld [vmem:[#allocation6 + $0x310] sm:$0xff]
    %v496 = vld [vmem:[#allocation6 + $0x318] sm:$0xff]
    %v497 = vld [vmem:[#allocation6 + $0x320] sm:$0xff]
    %v498 = vld [vmem:[#allocation6 + $0x328] sm:$0xff]
    %v499 = vld [vmem:[#allocation6 + $0x330] sm:$0xff]
    %v500 = vld [vmem:[#allocation6 + $0x338] sm:$0xff]
    %v501 = vld [vmem:[#allocation6 + $0x340] sm:$0xff]
    %v502 = vld [vmem:[#allocation6 + $0x348] sm:$0xff]
    %v503 = vld [vmem:[#allocation6 + $0x350] sm:$0xff]
    %v504 = vld [vmem:[#allocation6 + $0x358] sm:$0xff]
    %v505 = vld [vmem:[#allocation6 + $0x360] sm:$0xff]
    %v506 = vld [vmem:[#allocation6 + $0x368] sm:$0xff]
    %v507 = vld [vmem:[#allocation6 + $0x370] sm:$0xff]
    %v508 = vld [vmem:[#allocation6 + $0x378] sm:$0xff]
    %v509 = vld [vmem:[#allocation6 + $0x380] sm:$0xff]
    %v510 = vld [vmem:[#allocation6 + $0x388] sm:$0xff]
    %v511 = vld [vmem:[#allocation6 + $0x390] sm:$0xff]
    %v512 = vld [vmem:[#allocation6 + $0x398] sm:$0xff]
    %v513 = vld [vmem:[#allocation6 + $0x3a0] sm:$0xff]
    %v514 = vld [vmem:[#allocation6 + $0x3a8] sm:$0xff]
    %v515 = vld [vmem:[#allocation6 + $0x3b0] sm:$0xff]
    %v516 = vld [vmem:[#allocation6 + $0x3b8] sm:$0xff]
    %v517 = vld [vmem:[#allocation6 + $0x3c0] sm:$0xff]
    %v518 = vld [vmem:[#allocation6 + $0x3c8] sm:$0xff]
    %v519 = vld [vmem:[#allocation6 + $0x3d0] sm:$0xff]
    %v520 = vld [vmem:[#allocation6 + $0x3d8] sm:$0xff]
    %v521 = vld [vmem:[#allocation6 + $0x3e0] sm:$0xff]
    %v522 = vld [vmem:[#allocation6 + $0x3e8] sm:$0xff]
    %v523 = vld [vmem:[#allocation6 + $0x3f0] sm:$0xff]
    %v524 = vld [vmem:[#allocation6 + $0x3f8] sm:$0xff]
    %v525 = vld [vmem:[#allocation6 + $0x400] sm:$0xff]
    %v526 = vld [vmem:[#allocation6 + $0x408] sm:$0xff]
    %v527 = vld [vmem:[#allocation6 + $0x410] sm:$0xff]
    %v528 = vld [vmem:[#allocation6 + $0x418] sm:$0xff]
    %v529 = vld [vmem:[#allocation6 + $0x420] sm:$0xff]
    %v530 = vld [vmem:[#allocation6 + $0x428] sm:$0xff]
    %v531 = vld [vmem:[#allocation6 + $0x430] sm:$0xff]
    %v532 = vld [vmem:[#allocation6 + $0x438] sm:$0xff]
    %v533 = vld [vmem:[#allocation6 + $0x440] sm:$0xff]
    %v534 = vld [vmem:[#allocation6 + $0x448] sm:$0xff]
    %v535 = vld [vmem:[#allocation6 + $0x450] sm:$0xff]
    %v536 = vld [vmem:[#allocation6 + $0x458] sm:$0xff]
    %v537 = vld [vmem:[#allocation6 + $0x460] sm:$0xff]
    %v538 = vld [vmem:[#allocation6 + $0x468] sm:$0xff]
    %v539 = vld [vmem:[#allocation6 + $0x470] sm:$0xff]
    %v540 = vld [vmem:[#allocation6 + $0x478] sm:$0xff]
    %v541 = vld [vmem:[#allocation6 + $0x480] sm:$0xff]
    %v542 = vld [vmem:[#allocation6 + $0x488] sm:$0xff]
    %v543 = vld [vmem:[#allocation6 + $0x490] sm:$0xff]
    %v544 = vld [vmem:[#allocation6 + $0x498] sm:$0xff]
    %v545 = vld [vmem:[#allocation6 + $0x4a0] sm:$0xff]
    %v546 = vld [vmem:[#allocation6 + $0x4a8] sm:$0xff]
    %v547 = vld [vmem:[#allocation6 + $0x4b0] sm:$0xff]
    %v548 = vld [vmem:[#allocation6 + $0x4b8] sm:$0xff]
    %v549 = vld [vmem:[#allocation6 + $0x4c0] sm:$0xff]
    %v550 = vld [vmem:[#allocation6 + $0x4c8] sm:$0xff]
    %v551 = vld [vmem:[#allocation6 + $0x4d0] sm:$0xff]
    %v552 = vld [vmem:[#allocation6 + $0x4d8] sm:$0xff]
    %v553 = vld [vmem:[#allocation6 + $0x4e0] sm:$0xff]
    %v554 = vld [vmem:[#allocation6 + $0x4e8] sm:$0xff]
    %v555 = vld [vmem:[#allocation6 + $0x4f0] sm:$0xff]
    %v556 = vld [vmem:[#allocation6 + $0x4f8] sm:$0xff]
    %v557 = vld [vmem:[#allocation6 + $0x500] sm:$0xff]
    %v558 = vld [vmem:[#allocation6 + $0x508] sm:$0xff]
    %v559 = vld [vmem:[#allocation6 + $0x510] sm:$0xff]
    %v560 = vld [vmem:[#allocation6 + $0x518] sm:$0xff]
    %v561 = vld [vmem:[#allocation6 + $0x520] sm:$0xff]
    %v562 = vld [vmem:[#allocation6 + $0x528] sm:$0xff]
    %v563 = vld [vmem:[#allocation6 + $0x530] sm:$0xff]
    %v564 = vld [vmem:[#allocation6 + $0x538] sm:$0xff]
    %v565 = vld [vmem:[#allocation6 + $0x540] sm:$0xff]
    %v566 = vld [vmem:[#allocation6 + $0x548] sm:$0xff]
    %v567 = vld [vmem:[#allocation6 + $0x550] sm:$0xff]
    %v568 = vld [vmem:[#allocation6 + $0x558] sm:$0xff]
    %v569 = vld [vmem:[#allocation6 + $0x560] sm:$0xff]
    %v570 = vld [vmem:[#allocation6 + $0x568] sm:$0xff]
    %v571 = vld [vmem:[#allocation6 + $0x570] sm:$0xff]
    %v572 = vld [vmem:[#allocation6 + $0x578] sm:$0xff]
    %v573 = vld [vmem:[#allocation6 + $0x580] sm:$0xff]
    %v574 = vld [vmem:[#allocation6 + $0x588] sm:$0xff]
    %v575 = vld [vmem:[#allocation6 + $0x590] sm:$0xff]
    %v576 = vld [vmem:[#allocation6 + $0x598] sm:$0xff]
    %v577 = vld [vmem:[#allocation6 + $0x5a0] sm:$0xff]
    %v578 = vld [vmem:[#allocation6 + $0x5a8] sm:$0xff]
    %v579 = vld [vmem:[#allocation6 + $0x5b0] sm:$0xff]
    %v580 = vld [vmem:[#allocation6 + $0x5b8] sm:$0xff]
    %v581 = vld [vmem:[#allocation6 + $0x5c0] sm:$0xff]
    %v582 = vld [vmem:[#allocation6 + $0x5c8] sm:$0xff]
    %v583 = vld [vmem:[#allocation6 + $0x5d0] sm:$0xff]
    %v584 = vld [vmem:[#allocation6 + $0x5d8] sm:$0xff]
    %v585 = vld [vmem:[#allocation6 + $0x5e0] sm:$0xff]
    %v586 = vld [vmem:[#allocation6 + $0x5e8] sm:$0xff]
    %v587 = vld [vmem:[#allocation6 + $0x5f0] sm:$0xff]
    %v588 = vld [vmem:[#allocation6 + $0x5f8] sm:$0xff]
    %v589 = vld [vmem:[#allocation6 + $0x600] sm:$0xff]
    %v590 = vld [vmem:[#allocation6 + $0x608] sm:$0xff]
    %v591 = vld [vmem:[#allocation6 + $0x610] sm:$0xff]
    %v592 = vld [vmem:[#allocation6 + $0x618] sm:$0xff]
    %v593 = vld [vmem:[#allocation6 + $0x620] sm:$0xff]
    %v594 = vld [vmem:[#allocation6 + $0x628] sm:$0xff]
    %v595 = vld [vmem:[#allocation6 + $0x630] sm:$0xff]
    %v596 = vld [vmem:[#allocation6 + $0x638] sm:$0xff]
    %v597 = vld [vmem:[#allocation6 + $0x640] sm:$0xff]
    %v598 = vld [vmem:[#allocation6 + $0x648] sm:$0xff]
    %v599 = vld [vmem:[#allocation6 + $0x650] sm:$0xff]
    %v600 = vld [vmem:[#allocation6 + $0x658] sm:$0xff]
    %v601 = vld [vmem:[#allocation6 + $0x660] sm:$0xff]
    %v602 = vld [vmem:[#allocation6 + $0x668] sm:$0xff]
    %v603 = vld [vmem:[#allocation6 + $0x670] sm:$0xff]
    %v604 = vld [vmem:[#allocation6 + $0x678] sm:$0xff]
    %v605 = vld [vmem:[#allocation6 + $0x680] sm:$0xff]
    %v606 = vld [vmem:[#allocation6 + $0x688] sm:$0xff]
    %v607 = vld [vmem:[#allocation6 + $0x690] sm:$0xff]
    %v608 = vld [vmem:[#allocation6 + $0x698] sm:$0xff]
    %v609 = vld [vmem:[#allocation6 + $0x6a0] sm:$0xff]
    %v610 = vld [vmem:[#allocation6 + $0x6a8] sm:$0xff]
    %v611 = vld [vmem:[#allocation6 + $0x6b0] sm:$0xff]
    %v612 = vld [vmem:[#allocation6 + $0x6b8] sm:$0xff]
    %v613 = vld [vmem:[#allocation6 + $0x6c0] sm:$0xff]
    %v614 = vld [vmem:[#allocation6 + $0x6c8] sm:$0xff]
    %v615 = vld [vmem:[#allocation6 + $0x6d0] sm:$0xff]
    %v616 = vld [vmem:[#allocation6 + $0x6d8] sm:$0xff]
    %v617 = vld [vmem:[#allocation6 + $0x6e0] sm:$0xff]
    %v618 = vld [vmem:[#allocation6 + $0x6e8] sm:$0xff]
    %v619 = vld [vmem:[#allocation6 + $0x6f0] sm:$0xff]
    %v620 = vld [vmem:[#allocation6 + $0x6f8] sm:$0xff]
    %v621 = vld [vmem:[#allocation6 + $0x700] sm:$0xff]
    %v622 = vld [vmem:[#allocation6 + $0x708] sm:$0xff]
    %v623 = vld [vmem:[#allocation6 + $0x710] sm:$0xff]
    %v624 = vld [vmem:[#allocation6 + $0x718] sm:$0xff]
    %v625 = vld [vmem:[#allocation6 + $0x720] sm:$0xff]
    %v626 = vld [vmem:[#allocation6 + $0x728] sm:$0xff]
    %v627 = vld [vmem:[#allocation6 + $0x730] sm:$0xff]
    %v628 = vld [vmem:[#allocation6 + $0x738] sm:$0xff]
    %v629 = vld [vmem:[#allocation6 + $0x740] sm:$0xff]
    %v630 = vld [vmem:[#allocation6 + $0x748] sm:$0xff]
    %v631 = vld [vmem:[#allocation6 + $0x750] sm:$0xff]
    %v632 = vld [vmem:[#allocation6 + $0x758] sm:$0xff]
    %v633 = vld [vmem:[#allocation6 + $0x760] sm:$0xff]
    %v634 = vld [vmem:[#allocation6 + $0x768] sm:$0xff]
    %v635 = vld [vmem:[#allocation6 + $0x770] sm:$0xff]
    %v636 = vld [vmem:[#allocation6 + $0x778] sm:$0xff]
    %v637 = vld [vmem:[#allocation6 + $0x780] sm:$0xff]
    %v638 = vld [vmem:[#allocation6 + $0x788] sm:$0xff]
    %v639 = vld [vmem:[#allocation6 + $0x790] sm:$0xff]
    %v640 = vld [vmem:[#allocation6 + $0x798] sm:$0xff]
    %v641 = vld [vmem:[#allocation6 + $0x7a0] sm:$0xff]
    %v642 = vld [vmem:[#allocation6 + $0x7a8] sm:$0xff]
    %v643 = vld [vmem:[#allocation6 + $0x7b0] sm:$0xff]
    %v644 = vld [vmem:[#allocation6 + $0x7b8] sm:$0xff]
    %v645 = vld [vmem:[#allocation6 + $0x7c0] sm:$0xff]
    %v646 = vld [vmem:[#allocation6 + $0x7c8] sm:$0xff]
    %v647 = vld [vmem:[#allocation6 + $0x7d0] sm:$0xff]
    %v648 = vld [vmem:[#allocation6 + $0x7d8] sm:$0xff]
    %v649 = vld [vmem:[#allocation6 + $0x7e0] sm:$0xff]
    %v650 = vld [vmem:[#allocation6 + $0x7e8] sm:$0xff]
    %v651 = vld [vmem:[#allocation6 + $0x7f0] sm:$0xff]
    %v652 = vld [vmem:[#allocation6 + $0x7f8] sm:$0xff]
    %v653 = vld [vmem:[#allocation6 + $0x800] sm:$0xff]
    %v654 = vld [vmem:[#allocation6 + $0x808] sm:$0xff]
    %v655 = vld [vmem:[#allocation6 + $0x810] sm:$0xff]
    %v656 = vld [vmem:[#allocation6 + $0x818] sm:$0xff]
    %v657 = vld [vmem:[#allocation6 + $0x820] sm:$0xff]
    %v658 = vld [vmem:[#allocation6 + $0x828] sm:$0xff]
    %v659 = vld [vmem:[#allocation6 + $0x830] sm:$0xff]
    %v660 = vld [vmem:[#allocation6 + $0x838] sm:$0xff]
    %v661 = vld [vmem:[#allocation6 + $0x840] sm:$0xff]
    %v662 = vld [vmem:[#allocation6 + $0x848] sm:$0xff]
    %v663 = vld [vmem:[#allocation6 + $0x850] sm:$0xff]
    %v664 = vld [vmem:[#allocation6 + $0x858] sm:$0xff]
    %v665 = vld [vmem:[#allocation6 + $0x860] sm:$0xff]
    %v666 = vld [vmem:[#allocation6 + $0x868] sm:$0xff]
    %v667 = vld [vmem:[#allocation6 + $0x870] sm:$0xff]
    %v668 = vld [vmem:[#allocation6 + $0x878] sm:$0xff]
    %v669 = vld [vmem:[#allocation6 + $0x880] sm:$0xff]
    %v670 = vld [vmem:[#allocation6 + $0x888] sm:$0xff]
    %v671 = vld [vmem:[#allocation6 + $0x890] sm:$0xff]
    %v672 = vld [vmem:[#allocation6 + $0x898] sm:$0xff]
    %v673 = vld [vmem:[#allocation6 + $0x8a0] sm:$0xff]
    %v674 = vld [vmem:[#allocation6 + $0x8a8] sm:$0xff]
    %v675 = vld [vmem:[#allocation6 + $0x8b0] sm:$0xff]
    %v676 = vld [vmem:[#allocation6 + $0x8b8] sm:$0xff]
    %v677 = vld [vmem:[#allocation6 + $0x8c0] sm:$0xff]
    %v678 = vld [vmem:[#allocation6 + $0x8c8] sm:$0xff]
    %v679 = vld [vmem:[#allocation6 + $0x8d0] sm:$0xff]
    %v680 = vld [vmem:[#allocation6 + $0x8d8] sm:$0xff]
    %v681 = vld [vmem:[#allocation6 + $0x8e0] sm:$0xff]
    %v682 = vld [vmem:[#allocation6 + $0x8e8] sm:$0xff]
    %v683 = vld [vmem:[#allocation6 + $0x8f0] sm:$0xff]
    %v684 = vld [vmem:[#allocation6 + $0x8f8] sm:$0xff]
    %v685 = vld [vmem:[#allocation7] sm:$0x3f]
    %v687 = vperm.slane %v685, 0
    %v688 = vperm.slane %v685, 1
    %v689 = vperm.slane %v685, 2
    %v690 = vperm.slane %v685, 3
    %v691 = vperm.slane %v685, 4
    %v692 = vperm.slane %v685, 5
    %v987 = vunpack.c.l.b16 %v397
    %v988 = vunpack.c.h.b16 %v397
    %v989 = vunpack.c.l.b16 %v398
    %v990 = vunpack.c.h.b16 %v398
    %v991 = vunpack.c.l.b16 %v399
    %v992 = vunpack.c.h.b16 %v399
    %v993 = vunpack.c.l.b16 %v400
    %v994 = vunpack.c.h.b16 %v400
    %v995 = vunpack.c.l.b16 %v401
    %v996 = vunpack.c.h.b16 %v401
    %v997 = vunpack.c.l.b16 %v402
    %v998 = vunpack.c.h.b16 %v402
    %v999 = vunpack.c.l.b16 %v403
    %v1000 = vunpack.c.h.b16 %v403
    %v1001 = vunpack.c.l.b16 %v404
    %v1002 = vunpack.c.h.b16 %v404
    %v1003 = vunpack.c.l.b16 %v405
    %v1004 = vunpack.c.h.b16 %v405
    %v1005 = vunpack.c.l.b16 %v406
    %v1006 = vunpack.c.h.b16 %v406
    %v1007 = vunpack.c.l.b16 %v407
    %v1008 = vunpack.c.h.b16 %v407
    %v1009 = vunpack.c.l.b16 %v408
    %v1010 = vunpack.c.h.b16 %v408
    %v1011 = vunpack.c.l.b16 %v409
    %v1012 = vunpack.c.h.b16 %v409
    %v1013 = vunpack.c.l.b16 %v410
    %v1014 = vunpack.c.h.b16 %v410
    %v1015 = vunpack.c.l.b16 %v411
    %v1016 = vunpack.c.h.b16 %v411
    %v1017 = vunpack.c.l.b16 %v412
    %v1018 = vunpack.c.h.b16 %v412
    %v1019 = vunpack.c.l.b16 %v413
    %v1020 = vunpack.c.h.b16 %v413
    %v1021 = vunpack.c.l.b16 %v414
    %v1022 = vunpack.c.h.b16 %v414
    %v1023 = vunpack.c.l.b16 %v415
    %v1024 = vunpack.c.h.b16 %v415
    %v1025 = vunpack.c.l.b16 %v416
    %v1026 = vunpack.c.h.b16 %v416
    %v1027 = vunpack.c.l.b16 %v417
    %v1028 = vunpack.c.h.b16 %v417
    %v1029 = vunpack.c.l.b16 %v418
    %v1030 = vunpack.c.h.b16 %v418
    %v1031 = vunpack.c.l.b16 %v419
    %v1032 = vunpack.c.h.b16 %v419
    %v1033 = vunpack.c.l.b16 %v420
    %v1034 = vunpack.c.h.b16 %v420
    %v1035 = vunpack.c.l.b16 %v421
    %v1036 = vunpack.c.h.b16 %v421
    %v1037 = vunpack.c.l.b16 %v422
    %v1038 = vunpack.c.h.b16 %v422
    %v1039 = vunpack.c.l.b16 %v423
    %v1040 = vunpack.c.h.b16 %v423
    %v1041 = vunpack.c.l.b16 %v424
    %v1042 = vunpack.c.h.b16 %v424
    %v1043 = vunpack.c.l.b16 %v425
    %v1044 = vunpack.c.h.b16 %v425
    %v1045 = vunpack.c.l.b16 %v426
    %v1046 = vunpack.c.h.b16 %v426
    %v1047 = vunpack.c.l.b16 %v427
    %v1048 = vunpack.c.h.b16 %v427
    %v1049 = vunpack.c.l.b16 %v428
    %v1050 = vunpack.c.h.b16 %v428
    %v1051 = vunpack.c.l.b16 %v429
    %v1052 = vunpack.c.h.b16 %v429
    %v1053 = vunpack.c.l.b16 %v430
    %v1054 = vunpack.c.h.b16 %v430
    %v1055 = vunpack.c.l.b16 %v431
    %v1056 = vunpack.c.h.b16 %v431
    %v1057 = vunpack.c.l.b16 %v432
    %v1058 = vunpack.c.h.b16 %v432
    %v1059 = vunpack.c.l.b16 %v433
    %v1060 = vunpack.c.h.b16 %v433
    %v1061 = vunpack.c.l.b16 %v434
    %v1062 = vunpack.c.h.b16 %v434
    %v1063 = vunpack.c.l.b16 %v435
    %v1064 = vunpack.c.h.b16 %v435
    %v1065 = vunpack.c.l.b16 %v436
    %v1066 = vunpack.c.h.b16 %v436
    %v1067 = vunpack.c.l.b16 %v437
    %v1068 = vunpack.c.h.b16 %v437
    %v1069 = vunpack.c.l.b16 %v438
    %v1070 = vunpack.c.h.b16 %v438
    %v1071 = vunpack.c.l.b16 %v439
    %v1072 = vunpack.c.h.b16 %v439
    %v1073 = vunpack.c.l.b16 %v440
    %v1074 = vunpack.c.h.b16 %v440
    %v1075 = vunpack.c.l.b16 %v441
    %v1076 = vunpack.c.h.b16 %v441
    %v1077 = vunpack.c.l.b16 %v442
    %v1078 = vunpack.c.h.b16 %v442
    %v1079 = vunpack.c.l.b16 %v443
    %v1080 = vunpack.c.h.b16 %v443
    %v1081 = vunpack.c.l.b16 %v444
    %v1082 = vunpack.c.h.b16 %v444
    %v1083 = vunpack.c.l.b16 %v445
    %v1084 = vunpack.c.h.b16 %v445
    %v1085 = vunpack.c.l.b16 %v446
    %v1086 = vunpack.c.h.b16 %v446
    %v1087 = vunpack.c.l.b16 %v447
    %v1088 = vunpack.c.h.b16 %v447
    %v1089 = vunpack.c.l.b16 %v448
    %v1090 = vunpack.c.h.b16 %v448
    %v1091 = vunpack.c.l.b16 %v449
    %v1092 = vunpack.c.h.b16 %v449
    %v1093 = vunpack.c.l.b16 %v450
    %v1094 = vunpack.c.h.b16 %v450
    %v1095 = vunpack.c.l.b16 %v451
    %v1096 = vunpack.c.h.b16 %v451
    %v1097 = vunpack.c.l.b16 %v452
    %v1098 = vunpack.c.h.b16 %v452
    %v1099 = vunpack.c.l.b16 %v453
    %v1100 = vunpack.c.h.b16 %v453
    %v1101 = vunpack.c.l.b16 %v454
    %v1102 = vunpack.c.h.b16 %v454
    %v1103 = vunpack.c.l.b16 %v455
    %v1104 = vunpack.c.h.b16 %v455
    %v1105 = vunpack.c.l.b16 %v456
    %v1106 = vunpack.c.h.b16 %v456
    %v1107 = vunpack.c.l.b16 %v457
    %v1108 = vunpack.c.h.b16 %v457
    %v1109 = vunpack.c.l.b16 %v458
    %v1110 = vunpack.c.h.b16 %v458
    %v1111 = vunpack.c.l.b16 %v459
    %v1112 = vunpack.c.h.b16 %v459
    %v1113 = vunpack.c.l.b16 %v460
    %v1114 = vunpack.c.h.b16 %v460
    %v1115 = vunpack.c.l.b16 %v461
    %v1116 = vunpack.c.h.b16 %v461
    %v1117 = vunpack.c.l.b16 %v462
    %v1118 = vunpack.c.h.b16 %v462
    %v1119 = vunpack.c.l.b16 %v463
    %v1120 = vunpack.c.h.b16 %v463
    %v1121 = vunpack.c.l.b16 %v464
    %v1122 = vunpack.c.h.b16 %v464
    %v1123 = vunpack.c.l.b16 %v465
    %v1124 = vunpack.c.h.b16 %v465
    %v1125 = vunpack.c.l.b16 %v466
    %v1126 = vunpack.c.h.b16 %v466
    %v1127 = vunpack.c.l.b16 %v467
    %v1128 = vunpack.c.h.b16 %v467
    %v1129 = vunpack.c.l.b16 %v468
    %v1130 = vunpack.c.h.b16 %v468
    %v1131 = vunpack.c.l.b16 %v469
    %v1132 = vunpack.c.h.b16 %v469
    %v1133 = vunpack.c.l.b16 %v470
    %v1134 = vunpack.c.h.b16 %v470
    %v1135 = vunpack.c.l.b16 %v471
    %v1136 = vunpack.c.h.b16 %v471
    %v1137 = vunpack.c.l.b16 %v472
    %v1138 = vunpack.c.h.b16 %v472
    %v1139 = vunpack.c.l.b16 %v473
    %v1140 = vunpack.c.h.b16 %v473
    %v1141 = vunpack.c.l.b16 %v474
    %v1142 = vunpack.c.h.b16 %v474
    %v1143 = vunpack.c.l.b16 %v475
    %v1144 = vunpack.c.h.b16 %v475
    %v1145 = vunpack.c.l.b16 %v476
    %v1146 = vunpack.c.h.b16 %v476
    %v1147 = vunpack.c.l.b16 %v477
    %v1148 = vunpack.c.h.b16 %v477
    %v1149 = vunpack.c.l.b16 %v478
    %v1150 = vunpack.c.h.b16 %v478
    %v1151 = vunpack.c.l.b16 %v479
    %v1152 = vunpack.c.h.b16 %v479
    %v1153 = vunpack.c.l.b16 %v480
    %v1154 = vunpack.c.h.b16 %v480
    %v1155 = vunpack.c.l.b16 %v481
    %v1156 = vunpack.c.h.b16 %v481
    %v1157 = vunpack.c.l.b16 %v482
    %v1158 = vunpack.c.h.b16 %v482
    %v1159 = vunpack.c.l.b16 %v483
    %v1160 = vunpack.c.h.b16 %v483
    %v1161 = vunpack.c.l.b16 %v484
    %v1162 = vunpack.c.h.b16 %v484
    %v1163 = vunpack.c.l.b16 %v485
    %v1164 = vunpack.c.h.b16 %v485
    %v1165 = vunpack.c.l.b16 %v486
    %v1166 = vunpack.c.h.b16 %v486
    %v1167 = vunpack.c.l.b16 %v487
    %v1168 = vunpack.c.h.b16 %v487
    %v1169 = vunpack.c.l.b16 %v488
    %v1170 = vunpack.c.h.b16 %v488
    %v1171 = vunpack.c.l.b16 %v489
    %v1172 = vunpack.c.h.b16 %v489
    %v1173 = vunpack.c.l.b16 %v490
    %v1174 = vunpack.c.h.b16 %v490
    %v1175 = vunpack.c.l.b16 %v491
    %v1176 = vunpack.c.h.b16 %v491
    %v1177 = vunpack.c.l.b16 %v492
    %v1178 = vunpack.c.h.b16 %v492
    %v1179 = vunpack.c.l.b16 %v493
    %v1180 = vunpack.c.h.b16 %v493
    %v1181 = vunpack.c.l.b16 %v494
    %v1182 = vunpack.c.h.b16 %v494
    %v1183 = vunpack.c.l.b16 %v495
    %v1184 = vunpack.c.h.b16 %v495
    %v1185 = vunpack.c.l.b16 %v496
    %v1186 = vunpack.c.h.b16 %v496
    %v1187 = vunpack.c.l.b16 %v497
    %v1188 = vunpack.c.h.b16 %v497
    %v1189 = vunpack.c.l.b16 %v498
    %v1190 = vunpack.c.h.b16 %v498
    %v1191 = vunpack.c.l.b16 %v499
    %v1192 = vunpack.c.h.b16 %v499
    %v1193 = vunpack.c.l.b16 %v500
    %v1194 = vunpack.c.h.b16 %v500
    %v1195 = vunpack.c.l.b16 %v501
    %v1196 = vunpack.c.h.b16 %v501
    %v1197 = vunpack.c.l.b16 %v502
    %v1198 = vunpack.c.h.b16 %v502
    %v1199 = vunpack.c.l.b16 %v503
    %v1200 = vunpack.c.h.b16 %v503
    %v1201 = vunpack.c.l.b16 %v504
    %v1202 = vunpack.c.h.b16 %v504
    %v1203 = vunpack.c.l.b16 %v505
    %v1204 = vunpack.c.h.b16 %v505
    %v1205 = vunpack.c.l.b16 %v506
    %v1206 = vunpack.c.h.b16 %v506
    %v1207 = vunpack.c.l.b16 %v507
    %v1208 = vunpack.c.h.b16 %v507
    %v1209 = vunpack.c.l.b16 %v508
    %v1210 = vunpack.c.h.b16 %v508
    %v1211 = vunpack.c.l.b16 %v509
    %v1212 = vunpack.c.h.b16 %v509
    %v1213 = vunpack.c.l.b16 %v510
    %v1214 = vunpack.c.h.b16 %v510
    %v1215 = vunpack.c.l.b16 %v511
    %v1216 = vunpack.c.h.b16 %v511
    %v1217 = vunpack.c.l.b16 %v512
    %v1218 = vunpack.c.h.b16 %v512
    %v1219 = vunpack.c.l.b16 %v513
    %v1220 = vunpack.c.h.b16 %v513
    %v1221 = vunpack.c.l.b16 %v514
    %v1222 = vunpack.c.h.b16 %v514
    %v1223 = vunpack.c.l.b16 %v515
    %v1224 = vunpack.c.h.b16 %v515
    %v1225 = vunpack.c.l.b16 %v516
    %v1226 = vunpack.c.h.b16 %v516
    %v1227 = vunpack.c.l.b16 %v517
    %v1228 = vunpack.c.h.b16 %v517
    %v1229 = vunpack.c.l.b16 %v518
    %v1230 = vunpack.c.h.b16 %v518
    %v1231 = vunpack.c.l.b16 %v519
    %v1232 = vunpack.c.h.b16 %v519
    %v1233 = vunpack.c.l.b16 %v520
    %v1234 = vunpack.c.h.b16 %v520
    %v1235 = vunpack.c.l.b16 %v521
    %v1236 = vunpack.c.h.b16 %v521
    %v1237 = vunpack.c.l.b16 %v522
    %v1238 = vunpack.c.h.b16 %v522
    %v1239 = vunpack.c.l.b16 %v523
    %v1240 = vunpack.c.h.b16 %v523
    %v1241 = vunpack.c.l.b16 %v524
    %v1242 = vunpack.c.h.b16 %v524
    %v1243 = vunpack.c.l.b16 %v525
    %v1244 = vunpack.c.h.b16 %v525
    %v1245 = vunpack.c.l.b16 %v526
    %v1246 = vunpack.c.h.b16 %v526
    %v1247 = vunpack.c.l.b16 %v527
    %v1248 = vunpack.c.h.b16 %v527
    %v1249 = vunpack.c.l.b16 %v528
    %v1250 = vunpack.c.h.b16 %v528
    %v1251 = vunpack.c.l.b16 %v529
    %v1252 = vunpack.c.h.b16 %v529
    %v1253 = vunpack.c.l.b16 %v530
    %v1254 = vunpack.c.h.b16 %v530
    %v1255 = vunpack.c.l.b16 %v531
    %v1256 = vunpack.c.h.b16 %v531
    %v1257 = vunpack.c.l.b16 %v532
    %v1258 = vunpack.c.h.b16 %v532
    %v1259 = vunpack.c.l.b16 %v533
    %v1260 = vunpack.c.h.b16 %v533
    %v1261 = vunpack.c.l.b16 %v534
    %v1262 = vunpack.c.h.b16 %v534
    %v1263 = vunpack.c.l.b16 %v535
    %v1264 = vunpack.c.h.b16 %v535
    %v1265 = vunpack.c.l.b16 %v536
    %v1266 = vunpack.c.h.b16 %v536
    %v1267 = vunpack.c.l.b16 %v537
    %v1268 = vunpack.c.h.b16 %v537
    %v1269 = vunpack.c.l.b16 %v538
    %v1270 = vunpack.c.h.b16 %v538
    %v1271 = vunpack.c.l.b16 %v539
    %v1272 = vunpack.c.h.b16 %v539
    %v1273 = vunpack.c.l.b16 %v540
    %v1274 = vunpack.c.h.b16 %v540
    %v1275 = vunpack.c.l.b16 %v541
    %v1276 = vunpack.c.h.b16 %v541
    %v1277 = vunpack.c.l.b16 %v542
    %v1278 = vunpack.c.h.b16 %v542
    %v1279 = vunpack.c.l.b16 %v543
    %v1280 = vunpack.c.h.b16 %v543
    %v1281 = vunpack.c.l.b16 %v544
    %v1282 = vunpack.c.h.b16 %v544
    %v1283 = vunpack.c.l.b16 %v545
    %v1284 = vunpack.c.h.b16 %v545
    %v1285 = vunpack.c.l.b16 %v546
    %v1286 = vunpack.c.h.b16 %v546
    %v1287 = vunpack.c.l.b16 %v547
    %v1288 = vunpack.c.h.b16 %v547
    %v1289 = vunpack.c.l.b16 %v548
    %v1290 = vunpack.c.h.b16 %v548
    %v1291 = vunpack.c.l.b16 %v549
    %v1292 = vunpack.c.h.b16 %v549
    %v1293 = vunpack.c.l.b16 %v550
    %v1294 = vunpack.c.h.b16 %v550
    %v1295 = vunpack.c.l.b16 %v551
    %v1296 = vunpack.c.h.b16 %v551
    %v1297 = vunpack.c.l.b16 %v552
    %v1298 = vunpack.c.h.b16 %v552
    %v1299 = vunpack.c.l.b16 %v553
    %v1300 = vunpack.c.h.b16 %v553
    %v1301 = vunpack.c.l.b16 %v554
    %v1302 = vunpack.c.h.b16 %v554
    %v1303 = vunpack.c.l.b16 %v555
    %v1304 = vunpack.c.h.b16 %v555
    %v1305 = vunpack.c.l.b16 %v556
    %v1306 = vunpack.c.h.b16 %v556
    %v1307 = vunpack.c.l.b16 %v557
    %v1308 = vunpack.c.h.b16 %v557
    %v1309 = vunpack.c.l.b16 %v558
    %v1310 = vunpack.c.h.b16 %v558
    %v1311 = vunpack.c.l.b16 %v559
    %v1312 = vunpack.c.h.b16 %v559
    %v1313 = vunpack.c.l.b16 %v560
    %v1314 = vunpack.c.h.b16 %v560
    %v1315 = vunpack.c.l.b16 %v561
    %v1316 = vunpack.c.h.b16 %v561
    %v1317 = vunpack.c.l.b16 %v562
    %v1318 = vunpack.c.h.b16 %v562
    %v1319 = vunpack.c.l.b16 %v563
    %v1320 = vunpack.c.h.b16 %v563
    %v1321 = vunpack.c.l.b16 %v564
    %v1322 = vunpack.c.h.b16 %v564
    %v1323 = vunpack.c.l.b16 %v565
    %v1324 = vunpack.c.h.b16 %v565
    %v1325 = vunpack.c.l.b16 %v566
    %v1326 = vunpack.c.h.b16 %v566
    %v1327 = vunpack.c.l.b16 %v567
    %v1328 = vunpack.c.h.b16 %v567
    %v1329 = vunpack.c.l.b16 %v568
    %v1330 = vunpack.c.h.b16 %v568
    %v1331 = vunpack.c.l.b16 %v569
    %v1332 = vunpack.c.h.b16 %v569
    %v1333 = vunpack.c.l.b16 %v570
    %v1334 = vunpack.c.h.b16 %v570
    %v1335 = vunpack.c.l.b16 %v571
    %v1336 = vunpack.c.h.b16 %v571
    %v1337 = vunpack.c.l.b16 %v572
    %v1338 = vunpack.c.h.b16 %v572
    %v1339 = vunpack.c.l.b16 %v573
    %v1340 = vunpack.c.h.b16 %v573
    %v1341 = vunpack.c.l.b16 %v574
    %v1342 = vunpack.c.h.b16 %v574
    %v1343 = vunpack.c.l.b16 %v575
    %v1344 = vunpack.c.h.b16 %v575
    %v1345 = vunpack.c.l.b16 %v576
    %v1346 = vunpack.c.h.b16 %v576
    %v1347 = vunpack.c.l.b16 %v577
    %v1348 = vunpack.c.h.b16 %v577
    %v1349 = vunpack.c.l.b16 %v578
    %v1350 = vunpack.c.h.b16 %v578
    %v1351 = vunpack.c.l.b16 %v579
    %v1352 = vunpack.c.h.b16 %v579
    %v1353 = vunpack.c.l.b16 %v580
    %v1354 = vunpack.c.h.b16 %v580
    %v1355 = vunpack.c.l.b16 %v581
    %v1356 = vunpack.c.h.b16 %v581
    %v1357 = vunpack.c.l.b16 %v582
    %v1358 = vunpack.c.h.b16 %v582
    %v1359 = vunpack.c.l.b16 %v583
    %v1360 = vunpack.c.h.b16 %v583
    %v1361 = vunpack.c.l.b16 %v584
    %v1362 = vunpack.c.h.b16 %v584
    %v1363 = vunpack.c.l.b16 %v585
    %v1364 = vunpack.c.h.b16 %v585
    %v1365 = vunpack.c.l.b16 %v586
    %v1366 = vunpack.c.h.b16 %v586
    %v1367 = vunpack.c.l.b16 %v587
    %v1368 = vunpack.c.h.b16 %v587
    %v1369 = vunpack.c.l.b16 %v588
    %v1370 = vunpack.c.h.b16 %v588
    %v1371 = vunpack.c.l.b16 %v589
    %v1372 = vunpack.c.h.b16 %v589
    %v1373 = vunpack.c.l.b16 %v590
    %v1374 = vunpack.c.h.b16 %v590
    %v1375 = vunpack.c.l.b16 %v591
    %v1376 = vunpack.c.h.b16 %v591
    %v1377 = vunpack.c.l.b16 %v592
    %v1378 = vunpack.c.h.b16 %v592
    %v1379 = vunpack.c.l.b16 %v593
    %v1380 = vunpack.c.h.b16 %v593
    %v1381 = vunpack.c.l.b16 %v594
    %v1382 = vunpack.c.h.b16 %v594
    %v1383 = vunpack.c.l.b16 %v595
    %v1384 = vunpack.c.h.b16 %v595
    %v1385 = vunpack.c.l.b16 %v596
    %v1386 = vunpack.c.h.b16 %v596
    %v1387 = vunpack.c.l.b16 %v597
    %v1388 = vunpack.c.h.b16 %v597
    %v1389 = vunpack.c.l.b16 %v598
    %v1390 = vunpack.c.h.b16 %v598
    %v1391 = vunpack.c.l.b16 %v599
    %v1392 = vunpack.c.h.b16 %v599
    %v1393 = vunpack.c.l.b16 %v600
    %v1394 = vunpack.c.h.b16 %v600
    %v1395 = vunpack.c.l.b16 %v601
    %v1396 = vunpack.c.h.b16 %v601
    %v1397 = vunpack.c.l.b16 %v602
    %v1398 = vunpack.c.h.b16 %v602
    %v1399 = vunpack.c.l.b16 %v603
    %v1400 = vunpack.c.h.b16 %v603
    %v1401 = vunpack.c.l.b16 %v604
    %v1402 = vunpack.c.h.b16 %v604
    %v1403 = vunpack.c.l.b16 %v605
    %v1404 = vunpack.c.h.b16 %v605
    %v1405 = vunpack.c.l.b16 %v606
    %v1406 = vunpack.c.h.b16 %v606
    %v1407 = vunpack.c.l.b16 %v607
    %v1408 = vunpack.c.h.b16 %v607
    %v1409 = vunpack.c.l.b16 %v608
    %v1410 = vunpack.c.h.b16 %v608
    %v1411 = vunpack.c.l.b16 %v609
    %v1412 = vunpack.c.h.b16 %v609
    %v1413 = vunpack.c.l.b16 %v610
    %v1414 = vunpack.c.h.b16 %v610
    %v1415 = vunpack.c.l.b16 %v611
    %v1416 = vunpack.c.h.b16 %v611
    %v1417 = vunpack.c.l.b16 %v612
    %v1418 = vunpack.c.h.b16 %v612
    %v1419 = vunpack.c.l.b16 %v613
    %v1420 = vunpack.c.h.b16 %v613
    %v1421 = vunpack.c.l.b16 %v614
    %v1422 = vunpack.c.h.b16 %v614
    %v1423 = vunpack.c.l.b16 %v615
    %v1424 = vunpack.c.h.b16 %v615
    %v1425 = vunpack.c.l.b16 %v616
    %v1426 = vunpack.c.h.b16 %v616
    %v1427 = vunpack.c.l.b16 %v617
    %v1428 = vunpack.c.h.b16 %v617
    %v1429 = vunpack.c.l.b16 %v618
    %v1430 = vunpack.c.h.b16 %v618
    %v1431 = vunpack.c.l.b16 %v619
    %v1432 = vunpack.c.h.b16 %v619
    %v1433 = vunpack.c.l.b16 %v620
    %v1434 = vunpack.c.h.b16 %v620
    %v1435 = vunpack.c.l.b16 %v621
    %v1436 = vunpack.c.h.b16 %v621
    %v1437 = vunpack.c.l.b16 %v622
    %v1438 = vunpack.c.h.b16 %v622
    %v1439 = vunpack.c.l.b16 %v623
    %v1440 = vunpack.c.h.b16 %v623
    %v1441 = vunpack.c.l.b16 %v624
    %v1442 = vunpack.c.h.b16 %v624
    %v1443 = vunpack.c.l.b16 %v625
    %v1444 = vunpack.c.h.b16 %v625
    %v1445 = vunpack.c.l.b16 %v626
    %v1446 = vunpack.c.h.b16 %v626
    %v1447 = vunpack.c.l.b16 %v627
    %v1448 = vunpack.c.h.b16 %v627
    %v1449 = vunpack.c.l.b16 %v628
    %v1450 = vunpack.c.h.b16 %v628
    %v1451 = vunpack.c.l.b16 %v629
    %v1452 = vunpack.c.h.b16 %v629
    %v1453 = vunpack.c.l.b16 %v630
    %v1454 = vunpack.c.h.b16 %v630
    %v1455 = vunpack.c.l.b16 %v631
    %v1456 = vunpack.c.h.b16 %v631
    %v1457 = vunpack.c.l.b16 %v632
    %v1458 = vunpack.c.h.b16 %v632
    %v1459 = vunpack.c.l.b16 %v633
    %v1460 = vunpack.c.h.b16 %v633
    %v1461 = vunpack.c.l.b16 %v634
    %v1462 = vunpack.c.h.b16 %v634
    %v1463 = vunpack.c.l.b16 %v635
    %v1464 = vunpack.c.h.b16 %v635
    %v1465 = vunpack.c.l.b16 %v636
    %v1466 = vunpack.c.h.b16 %v636
    %v1467 = vunpack.c.l.b16 %v637
    %v1468 = vunpack.c.h.b16 %v637
    %v1469 = vunpack.c.l.b16 %v638
    %v1470 = vunpack.c.h.b16 %v638
    %v1471 = vunpack.c.l.b16 %v639
    %v1472 = vunpack.c.h.b16 %v639
    %v1473 = vunpack.c.l.b16 %v640
    %v1474 = vunpack.c.h.b16 %v640
    %v1475 = vunpack.c.l.b16 %v641
    %v1476 = vunpack.c.h.b16 %v641
    %v1477 = vunpack.c.l.b16 %v642
    %v1478 = vunpack.c.h.b16 %v642
    %v1479 = vunpack.c.l.b16 %v643
    %v1480 = vunpack.c.h.b16 %v643
    %v1481 = vunpack.c.l.b16 %v644
    %v1482 = vunpack.c.h.b16 %v644
    %v1483 = vunpack.c.l.b16 %v645
    %v1484 = vunpack.c.h.b16 %v645
    %v1485 = vunpack.c.l.b16 %v646
    %v1486 = vunpack.c.h.b16 %v646
    %v1487 = vunpack.c.l.b16 %v647
    %v1488 = vunpack.c.h.b16 %v647
    %v1489 = vunpack.c.l.b16 %v648
    %v1490 = vunpack.c.h.b16 %v648
    %v1491 = vunpack.c.l.b16 %v649
    %v1492 = vunpack.c.h.b16 %v649
    %v1493 = vunpack.c.l.b16 %v650
    %v1494 = vunpack.c.h.b16 %v650
    %v1495 = vunpack.c.l.b16 %v651
    %v1496 = vunpack.c.h.b16 %v651
    %v1497 = vunpack.c.l.b16 %v652
    %v1498 = vunpack.c.h.b16 %v652
    %v1499 = vunpack.c.l.b16 %v653
    %v1500 = vunpack.c.h.b16 %v653
    %v1501 = vunpack.c.l.b16 %v654
    %v1502 = vunpack.c.h.b16 %v654
    %v1503 = vunpack.c.l.b16 %v655
    %v1504 = vunpack.c.h.b16 %v655
    %v1505 = vunpack.c.l.b16 %v656
    %v1506 = vunpack.c.h.b16 %v656
    %v1507 = vunpack.c.l.b16 %v657
    %v1508 = vunpack.c.h.b16 %v657
    %v1509 = vunpack.c.l.b16 %v658
    %v1510 = vunpack.c.h.b16 %v658
    %v1511 = vunpack.c.l.b16 %v659
    %v1512 = vunpack.c.h.b16 %v659
    %v1513 = vunpack.c.l.b16 %v660
    %v1514 = vunpack.c.h.b16 %v660
    %v1515 = vunpack.c.l.b16 %v661
    %v1516 = vunpack.c.h.b16 %v661
    %v1517 = vunpack.c.l.b16 %v662
    %v1518 = vunpack.c.h.b16 %v662
    %v1519 = vunpack.c.l.b16 %v663
    %v1520 = vunpack.c.h.b16 %v663
    %v1521 = vunpack.c.l.b16 %v664
    %v1522 = vunpack.c.h.b16 %v664
    %v1523 = vunpack.c.l.b16 %v665
    %v1524 = vunpack.c.h.b16 %v665
    %v1525 = vunpack.c.l.b16 %v666
    %v1526 = vunpack.c.h.b16 %v666
    %v1527 = vunpack.c.l.b16 %v667
    %v1528 = vunpack.c.h.b16 %v667
    %v1529 = vunpack.c.l.b16 %v668
    %v1530 = vunpack.c.h.b16 %v668
    %v1531 = vunpack.c.l.b16 %v669
    %v1532 = vunpack.c.h.b16 %v669
    %v1533 = vunpack.c.l.b16 %v670
    %v1534 = vunpack.c.h.b16 %v670
    %v1535 = vunpack.c.l.b16 %v671
    %v1536 = vunpack.c.h.b16 %v671
    %v1537 = vunpack.c.l.b16 %v672
    %v1538 = vunpack.c.h.b16 %v672
    %v1539 = vunpack.c.l.b16 %v673
    %v1540 = vunpack.c.h.b16 %v673
    %v1541 = vunpack.c.l.b16 %v674
    %v1542 = vunpack.c.h.b16 %v674
    %v1543 = vunpack.c.l.b16 %v675
    %v1544 = vunpack.c.h.b16 %v675
    %v1545 = vunpack.c.l.b16 %v676
    %v1546 = vunpack.c.h.b16 %v676
    %v1547 = vunpack.c.l.b16 %v677
    %v1548 = vunpack.c.h.b16 %v677
    %v1549 = vunpack.c.l.b16 %v678
    %v1550 = vunpack.c.h.b16 %v678
    %v1551 = vunpack.c.l.b16 %v679
    %v1552 = vunpack.c.h.b16 %v679
    %v1553 = vunpack.c.l.b16 %v680
    %v1554 = vunpack.c.h.b16 %v680
    %v1555 = vunpack.c.l.b16 %v681
    %v1556 = vunpack.c.h.b16 %v681
    %v1557 = vunpack.c.l.b16 %v682
    %v1558 = vunpack.c.h.b16 %v682
    %v1559 = vunpack.c.l.b16 %v683
    %v1560 = vunpack.c.h.b16 %v683
    %v1561 = vunpack.c.l.b16 %v684
    %v1562 = vunpack.c.h.b16 %v684
    %v1563 = vpack.c.b16 %v993, %v987
    %v1564 = vpack.c.b16 %v994, %v988
    %v1565 = vpack.c.b16 %v995, %v989
    %v1566 = vpack.c.b16 %v996, %v990
    %v1567 = vpack.c.b16 %v997, %v991
    %v1568 = vpack.c.b16 %v998, %v992
    %v1569 = vpack.c.b16 %v1005, %v999
    %v1570 = vpack.c.b16 %v1006, %v1000
    %v1571 = vpack.c.b16 %v1007, %v1001
    %v1572 = vpack.c.b16 %v1008, %v1002
    %v1573 = vpack.c.b16 %v1009, %v1003
    %v1574 = vpack.c.b16 %v1010, %v1004
    %v1575 = vpack.c.b16 %v1017, %v1011
    %v1576 = vpack.c.b16 %v1018, %v1012
    %v1577 = vpack.c.b16 %v1019, %v1013
    %v1578 = vpack.c.b16 %v1020, %v1014
    %v1579 = vpack.c.b16 %v1021, %v1015
    %v1580 = vpack.c.b16 %v1022, %v1016
    %v1581 = vpack.c.b16 %v1029, %v1023
    %v1582 = vpack.c.b16 %v1030, %v1024
    %v1583 = vpack.c.b16 %v1031, %v1025
    %v1584 = vpack.c.b16 %v1032, %v1026
    %v1585 = vpack.c.b16 %v1033, %v1027
    %v1586 = vpack.c.b16 %v1034, %v1028
    %v1587 = vpack.c.b16 %v1041, %v1035
    %v1588 = vpack.c.b16 %v1042, %v1036
    %v1589 = vpack.c.b16 %v1043, %v1037
    %v1590 = vpack.c.b16 %v1044, %v1038
    %v1591 = vpack.c.b16 %v1045, %v1039
    %v1592 = vpack.c.b16 %v1046, %v1040
    %v1593 = vpack.c.b16 %v1053, %v1047
    %v1594 = vpack.c.b16 %v1054, %v1048
    %v1595 = vpack.c.b16 %v1055, %v1049
    %v1596 = vpack.c.b16 %v1056, %v1050
    %v1597 = vpack.c.b16 %v1057, %v1051
    %v1598 = vpack.c.b16 %v1058, %v1052
    %v1599 = vpack.c.b16 %v1065, %v1059
    %v1600 = vpack.c.b16 %v1066, %v1060
    %v1601 = vpack.c.b16 %v1067, %v1061
    %v1602 = vpack.c.b16 %v1068, %v1062
    %v1603 = vpack.c.b16 %v1069, %v1063
    %v1604 = vpack.c.b16 %v1070, %v1064
    %v1605 = vpack.c.b16 %v1077, %v1071
    %v1606 = vpack.c.b16 %v1078, %v1072
    %v1607 = vpack.c.b16 %v1079, %v1073
    %v1608 = vpack.c.b16 %v1080, %v1074
    %v1609 = vpack.c.b16 %v1081, %v1075
    %v1610 = vpack.c.b16 %v1082, %v1076
    %v1611 = vpack.c.b16 %v1089, %v1083
    %v1612 = vpack.c.b16 %v1090, %v1084
    %v1613 = vpack.c.b16 %v1091, %v1085
    %v1614 = vpack.c.b16 %v1092, %v1086
    %v1615 = vpack.c.b16 %v1093, %v1087
    %v1616 = vpack.c.b16 %v1094, %v1088
    %v1617 = vpack.c.b16 %v1101, %v1095
    %v1618 = vpack.c.b16 %v1102, %v1096
    %v1619 = vpack.c.b16 %v1103, %v1097
    %v1620 = vpack.c.b16 %v1104, %v1098
    %v1621 = vpack.c.b16 %v1105, %v1099
    %v1622 = vpack.c.b16 %v1106, %v1100
    %v1623 = vpack.c.b16 %v1113, %v1107
    %v1624 = vpack.c.b16 %v1114, %v1108
    %v1625 = vpack.c.b16 %v1115, %v1109
    %v1626 = vpack.c.b16 %v1116, %v1110
    %v1627 = vpack.c.b16 %v1117, %v1111
    %v1628 = vpack.c.b16 %v1118, %v1112
    %v1629 = vpack.c.b16 %v1125, %v1119
    %v1630 = vpack.c.b16 %v1126, %v1120
    %v1631 = vpack.c.b16 %v1127, %v1121
    %v1632 = vpack.c.b16 %v1128, %v1122
    %v1633 = vpack.c.b16 %v1129, %v1123
    %v1634 = vpack.c.b16 %v1130, %v1124
    %v1635 = vpack.c.b16 %v1137, %v1131
    %v1636 = vpack.c.b16 %v1138, %v1132
    %v1637 = vpack.c.b16 %v1139, %v1133
    %v1638 = vpack.c.b16 %v1140, %v1134
    %v1639 = vpack.c.b16 %v1141, %v1135
    %v1640 = vpack.c.b16 %v1142, %v1136
    %v1641 = vpack.c.b16 %v1149, %v1143
    %v1642 = vpack.c.b16 %v1150, %v1144
    %v1643 = vpack.c.b16 %v1151, %v1145
    %v1644 = vpack.c.b16 %v1152, %v1146
    %v1645 = vpack.c.b16 %v1153, %v1147
    %v1646 = vpack.c.b16 %v1154, %v1148
    %v1647 = vpack.c.b16 %v1161, %v1155
    %v1648 = vpack.c.b16 %v1162, %v1156
    %v1649 = vpack.c.b16 %v1163, %v1157
    %v1650 = vpack.c.b16 %v1164, %v1158
    %v1651 = vpack.c.b16 %v1165, %v1159
    %v1652 = vpack.c.b16 %v1166, %v1160
    %v1653 = vpack.c.b16 %v1173, %v1167
    %v1654 = vpack.c.b16 %v1174, %v1168
    %v1655 = vpack.c.b16 %v1175, %v1169
    %v1656 = vpack.c.b16 %v1176, %v1170
    %v1657 = vpack.c.b16 %v1177, %v1171
    %v1658 = vpack.c.b16 %v1178, %v1172
    %v1659 = vpack.c.b16 %v1185, %v1179
    %v1660 = vpack.c.b16 %v1186, %v1180
    %v1661 = vpack.c.b16 %v1187, %v1181
    %v1662 = vpack.c.b16 %v1188, %v1182
    %v1663 = vpack.c.b16 %v1189, %v1183
    %v1664 = vpack.c.b16 %v1190, %v1184
    %v1665 = vpack.c.b16 %v1197, %v1191
    %v1666 = vpack.c.b16 %v1198, %v1192
    %v1667 = vpack.c.b16 %v1199, %v1193
    %v1668 = vpack.c.b16 %v1200, %v1194
    %v1669 = vpack.c.b16 %v1201, %v1195
    %v1670 = vpack.c.b16 %v1202, %v1196
    %v1671 = vpack.c.b16 %v1209, %v1203
    %v1672 = vpack.c.b16 %v1210, %v1204
    %v1673 = vpack.c.b16 %v1211, %v1205
    %v1674 = vpack.c.b16 %v1212, %v1206
    %v1675 = vpack.c.b16 %v1213, %v1207
    %v1676 = vpack.c.b16 %v1214, %v1208
    %v1677 = vpack.c.b16 %v1221, %v1215
    %v1678 = vpack.c.b16 %v1222, %v1216
    %v1679 = vpack.c.b16 %v1223, %v1217
    %v1680 = vpack.c.b16 %v1224, %v1218
    %v1681 = vpack.c.b16 %v1225, %v1219
    %v1682 = vpack.c.b16 %v1226, %v1220
    %v1683 = vpack.c.b16 %v1233, %v1227
    %v1684 = vpack.c.b16 %v1234, %v1228
    %v1685 = vpack.c.b16 %v1235, %v1229
    %v1686 = vpack.c.b16 %v1236, %v1230
    %v1687 = vpack.c.b16 %v1237, %v1231
    %v1688 = vpack.c.b16 %v1238, %v1232
    %v1689 = vpack.c.b16 %v1245, %v1239
    %v1690 = vpack.c.b16 %v1246, %v1240
    %v1691 = vpack.c.b16 %v1247, %v1241
    %v1692 = vpack.c.b16 %v1248, %v1242
    %v1693 = vpack.c.b16 %v1249, %v1243
    %v1694 = vpack.c.b16 %v1250, %v1244
    %v1695 = vpack.c.b16 %v1257, %v1251
    %v1696 = vpack.c.b16 %v1258, %v1252
    %v1697 = vpack.c.b16 %v1259, %v1253
    %v1698 = vpack.c.b16 %v1260, %v1254
    %v1699 = vpack.c.b16 %v1261, %v1255
    %v1700 = vpack.c.b16 %v1262, %v1256
    %v1701 = vpack.c.b16 %v1269, %v1263
    %v1702 = vpack.c.b16 %v1270, %v1264
    %v1703 = vpack.c.b16 %v1271, %v1265
    %v1704 = vpack.c.b16 %v1272, %v1266
    %v1705 = vpack.c.b16 %v1273, %v1267
    %v1706 = vpack.c.b16 %v1274, %v1268
    %v1707 = vpack.c.b16 %v1281, %v1275
    %v1708 = vpack.c.b16 %v1282, %v1276
    %v1709 = vpack.c.b16 %v1283, %v1277
    %v1710 = vpack.c.b16 %v1284, %v1278
    %v1711 = vpack.c.b16 %v1285, %v1279
    %v1712 = vpack.c.b16 %v1286, %v1280
    %v1713 = vpack.c.b16 %v1293, %v1287
    %v1714 = vpack.c.b16 %v1294, %v1288
    %v1715 = vpack.c.b16 %v1295, %v1289
    %v1716 = vpack.c.b16 %v1296, %v1290
    %v1717 = vpack.c.b16 %v1297, %v1291
    %v1718 = vpack.c.b16 %v1298, %v1292
    %v1719 = vpack.c.b16 %v1305, %v1299
    %v1720 = vpack.c.b16 %v1306, %v1300
    %v1721 = vpack.c.b16 %v1307, %v1301
    %v1722 = vpack.c.b16 %v1308, %v1302
    %v1723 = vpack.c.b16 %v1309, %v1303
    %v1724 = vpack.c.b16 %v1310, %v1304
    %v1725 = vpack.c.b16 %v1317, %v1311
    %v1726 = vpack.c.b16 %v1318, %v1312
    %v1727 = vpack.c.b16 %v1319, %v1313
    %v1728 = vpack.c.b16 %v1320, %v1314
    %v1729 = vpack.c.b16 %v1321, %v1315
    %v1730 = vpack.c.b16 %v1322, %v1316
    %v1731 = vpack.c.b16 %v1329, %v1323
    %v1732 = vpack.c.b16 %v1330, %v1324
    %v1733 = vpack.c.b16 %v1331, %v1325
    %v1734 = vpack.c.b16 %v1332, %v1326
    %v1735 = vpack.c.b16 %v1333, %v1327
    %v1736 = vpack.c.b16 %v1334, %v1328
    %v1737 = vpack.c.b16 %v1341, %v1335
    %v1738 = vpack.c.b16 %v1342, %v1336
    %v1739 = vpack.c.b16 %v1343, %v1337
    %v1740 = vpack.c.b16 %v1344, %v1338
    %v1741 = vpack.c.b16 %v1345, %v1339
    %v1742 = vpack.c.b16 %v1346, %v1340
    %v1743 = vpack.c.b16 %v1353, %v1347
    %v1744 = vpack.c.b16 %v1354, %v1348
    %v1745 = vpack.c.b16 %v1355, %v1349
    %v1746 = vpack.c.b16 %v1356, %v1350
    %v1747 = vpack.c.b16 %v1357, %v1351
    %v1748 = vpack.c.b16 %v1358, %v1352
    %v1749 = vpack.c.b16 %v1365, %v1359
    %v1750 = vpack.c.b16 %v1366, %v1360
    %v1751 = vpack.c.b16 %v1367, %v1361
    %v1752 = vpack.c.b16 %v1368, %v1362
    %v1753 = vpack.c.b16 %v1369, %v1363
    %v1754 = vpack.c.b16 %v1370, %v1364
    %v1755 = vpack.c.b16 %v1377, %v1371
    %v1756 = vpack.c.b16 %v1378, %v1372
    %v1757 = vpack.c.b16 %v1379, %v1373
    %v1758 = vpack.c.b16 %v1380, %v1374
    %v1759 = vpack.c.b16 %v1381, %v1375
    %v1760 = vpack.c.b16 %v1382, %v1376
    %v1761 = vpack.c.b16 %v1389, %v1383
    %v1762 = vpack.c.b16 %v1390, %v1384
    %v1763 = vpack.c.b16 %v1391, %v1385
    %v1764 = vpack.c.b16 %v1392, %v1386
    %v1765 = vpack.c.b16 %v1393, %v1387
    %v1766 = vpack.c.b16 %v1394, %v1388
    %v1767 = vpack.c.b16 %v1401, %v1395
    %v1768 = vpack.c.b16 %v1402, %v1396
    %v1769 = vpack.c.b16 %v1403, %v1397
    %v1770 = vpack.c.b16 %v1404, %v1398
    %v1771 = vpack.c.b16 %v1405, %v1399
    %v1772 = vpack.c.b16 %v1406, %v1400
    %v1773 = vpack.c.b16 %v1413, %v1407
    %v1774 = vpack.c.b16 %v1414, %v1408
    %v1775 = vpack.c.b16 %v1415, %v1409
    %v1776 = vpack.c.b16 %v1416, %v1410
    %v1777 = vpack.c.b16 %v1417, %v1411
    %v1778 = vpack.c.b16 %v1418, %v1412
    %v1779 = vpack.c.b16 %v1425, %v1419
    %v1780 = vpack.c.b16 %v1426, %v1420
    %v1781 = vpack.c.b16 %v1427, %v1421
    %v1782 = vpack.c.b16 %v1428, %v1422
    %v1783 = vpack.c.b16 %v1429, %v1423
    %v1784 = vpack.c.b16 %v1430, %v1424
    %v1785 = vpack.c.b16 %v1437, %v1431
    %v1786 = vpack.c.b16 %v1438, %v1432
    %v1787 = vpack.c.b16 %v1439, %v1433
    %v1788 = vpack.c.b16 %v1440, %v1434
    %v1789 = vpack.c.b16 %v1441, %v1435
    %v1790 = vpack.c.b16 %v1442, %v1436
    %v1791 = vpack.c.b16 %v1449, %v1443
    %v1792 = vpack.c.b16 %v1450, %v1444
    %v1793 = vpack.c.b16 %v1451, %v1445
    %v1794 = vpack.c.b16 %v1452, %v1446
    %v1795 = vpack.c.b16 %v1453, %v1447
    %v1796 = vpack.c.b16 %v1454, %v1448
    %v1797 = vpack.c.b16 %v1461, %v1455
    %v1798 = vpack.c.b16 %v1462, %v1456
    %v1799 = vpack.c.b16 %v1463, %v1457
    %v1800 = vpack.c.b16 %v1464, %v1458
    %v1801 = vpack.c.b16 %v1465, %v1459
    %v1802 = vpack.c.b16 %v1466, %v1460
    %v1803 = vpack.c.b16 %v1473, %v1467
    %v1804 = vpack.c.b16 %v1474, %v1468
    %v1805 = vpack.c.b16 %v1475, %v1469
    %v1806 = vpack.c.b16 %v1476, %v1470
    %v1807 = vpack.c.b16 %v1477, %v1471
    %v1808 = vpack.c.b16 %v1478, %v1472
    %v1809 = vpack.c.b16 %v1485, %v1479
    %v1810 = vpack.c.b16 %v1486, %v1480
    %v1811 = vpack.c.b16 %v1487, %v1481
    %v1812 = vpack.c.b16 %v1488, %v1482
    %v1813 = vpack.c.b16 %v1489, %v1483
    %v1814 = vpack.c.b16 %v1490, %v1484
    %v1815 = vpack.c.b16 %v1497, %v1491
    %v1816 = vpack.c.b16 %v1498, %v1492
    %v1817 = vpack.c.b16 %v1499, %v1493
    %v1818 = vpack.c.b16 %v1500, %v1494
    %v1819 = vpack.c.b16 %v1501, %v1495
    %v1820 = vpack.c.b16 %v1502, %v1496
    %v1821 = vpack.c.b16 %v1509, %v1503
    %v1822 = vpack.c.b16 %v1510, %v1504
    %v1823 = vpack.c.b16 %v1511, %v1505
    %v1824 = vpack.c.b16 %v1512, %v1506
    %v1825 = vpack.c.b16 %v1513, %v1507
    %v1826 = vpack.c.b16 %v1514, %v1508
    %v1827 = vpack.c.b16 %v1521, %v1515
    %v1828 = vpack.c.b16 %v1522, %v1516
    %v1829 = vpack.c.b16 %v1523, %v1517
    %v1830 = vpack.c.b16 %v1524, %v1518
    %v1831 = vpack.c.b16 %v1525, %v1519
    %v1832 = vpack.c.b16 %v1526, %v1520
    %v1833 = vpack.c.b16 %v1533, %v1527
    %v1834 = vpack.c.b16 %v1534, %v1528
    %v1835 = vpack.c.b16 %v1535, %v1529
    %v1836 = vpack.c.b16 %v1536, %v1530
    %v1837 = vpack.c.b16 %v1537, %v1531
    %v1838 = vpack.c.b16 %v1538, %v1532
    %v1839 = vpack.c.b16 %v1545, %v1539
    %v1840 = vpack.c.b16 %v1546, %v1540
    %v1841 = vpack.c.b16 %v1547, %v1541
    %v1842 = vpack.c.b16 %v1548, %v1542
    %v1843 = vpack.c.b16 %v1549, %v1543
    %v1844 = vpack.c.b16 %v1550, %v1544
    %v1845 = vpack.c.b16 %v1557, %v1551
    %v1846 = vpack.c.b16 %v1558, %v1552
    %v1847 = vpack.c.b16 %v1559, %v1553
    %v1848 = vpack.c.b16 %v1560, %v1554
    %v1849 = vpack.c.b16 %v1561, %v1555
    %v1850 = vpack.c.b16 %v1562, %v1556
    %2139 = vmatpush.bf16.msra.mxu0 %v1605
    %2140 = vmatpush.bf16.msra.mxu0 %v1599
    %2141 = vmatpush.bf16.msra.mxu0 %v1593
    %2142 = vmatpush.bf16.msra.mxu0 %v1587
    %2143 = vmatpush.bf16.msra.mxu0 %v1581
    %2144 = vmatpush.bf16.msra.mxu0 %v1575
    %2145 = vmatpush.bf16.msra.mxu0 %v1569
    %2146 = vmatpush.bf16.msra.mxu0 %v1563
    %2147 = vmatmul.bf16.gmra.mxu0 %v391
    %v2148 = vpop.f32.mrf.mxu0
    %v2149 = vadd.f32 %v687, %v2148
    %v2150 = vpop.f32.mrf.mxu0
    %2151 = vdwg.mxu0
    %2152 = vmatpush.bf16.msra.mxu0 %v1653
    %2153 = vmatpush.bf16.msra.mxu0 %v1647
    %2154 = vmatpush.bf16.msra.mxu0 %v1641
    %2155 = vmatpush.bf16.msra.mxu0 %v1635
    %2156 = vmatpush.bf16.msra.mxu0 %v1629
    %2157 = vmatpush.bf16.msra.mxu0 %v1623
    %2158 = vmatpush.bf16.msra.mxu0 %v1617
    %2159 = vmatpush.bf16.msra.mxu0 %v1611
    %2160 = vmatmul.bf16.gmra.mxu0 %v392
    %v2161 = vpop.f32.mrf.mxu0
    %v2162 = vadd.f32 %v2149, %v2161
    %v2163 = vpop.f32.mrf.mxu0
    %2164 = vdwg.mxu0
    %2165 = vmatpush.bf16.msra.mxu0 %v1701
    %2166 = vmatpush.bf16.msra.mxu0 %v1695
    %2167 = vmatpush.bf16.msra.mxu0 %v1689
    %2168 = vmatpush.bf16.msra.mxu0 %v1683
    %2169 = vmatpush.bf16.msra.mxu0 %v1677
    %2170 = vmatpush.bf16.msra.mxu0 %v1671
    %2171 = vmatpush.bf16.msra.mxu0 %v1665
    %2172 = vmatpush.bf16.msra.mxu0 %v1659
    %2173 = vmatmul.bf16.gmra.mxu0 %v393
    %v2174 = vpop.f32.mrf.mxu0
    %v2175 = vadd.f32 %v2162, %v2174
    %v2176 = vpop.f32.mrf.mxu0
    %2177 = vdwg.mxu0
    %2178 = vmatpush.bf16.msra.mxu0 %v1749
    %2179 = vmatpush.bf16.msra.mxu0 %v1743
    %2180 = vmatpush.bf16.msra.mxu0 %v1737
    %2181 = vmatpush.bf16.msra.mxu0 %v1731
    %2182 = vmatpush.bf16.msra.mxu0 %v1725
    %2183 = vmatpush.bf16.msra.mxu0 %v1719
    %2184 = vmatpush.bf16.msra.mxu0 %v1713
    %2185 = vmatpush.bf16.msra.mxu0 %v1707
    %2186 = vmatmul.bf16.gmra.mxu0 %v394
    %v2187 = vpop.f32.mrf.mxu0
    %v2188 = vadd.f32 %v2175, %v2187
    %v2189 = vpop.f32.mrf.mxu0
    %2190 = vdwg.mxu0
    %2191 = vmatpush.bf16.msra.mxu0 %v1797
    %2192 = vmatpush.bf16.msra.mxu0 %v1791
    %2193 = vmatpush.bf16.msra.mxu0 %v1785
    %2194 = vmatpush.bf16.msra.mxu0 %v1779
    %2195 = vmatpush.bf16.msra.mxu0 %v1773
    %2196 = vmatpush.bf16.msra.mxu0 %v1767
    %2197 = vmatpush.bf16.msra.mxu0 %v1761
    %2198 = vmatpush.bf16.msra.mxu0 %v1755
    %2199 = vmatmul.bf16.gmra.mxu0 %v395
    %v2200 = vpop.f32.mrf.mxu0
    %v2201 = vadd.f32 %v2188, %v2200
    %v2202 = vpop.f32.mrf.mxu0
    %2203 = vdwg.mxu0
    %2204 = vmatpush.bf16.msra.mxu0 %v1845
    %2205 = vmatpush.bf16.msra.mxu0 %v1839
    %2206 = vmatpush.bf16.msra.mxu0 %v1833
    %2207 = vmatpush.bf16.msra.mxu0 %v1827
    %2208 = vmatpush.bf16.msra.mxu0 %v1821
    %2209 = vmatpush.bf16.msra.mxu0 %v1815
    %2210 = vmatpush.bf16.msra.mxu0 %v1809
    %2211 = vmatpush.bf16.msra.mxu0 %v1803
    %2212 = vmatmul.bf16.gmra.mxu0 %v396
    %v2213 = vpop.f32.mrf.mxu0
    %v2214 = vadd.f32 %v2201, %v2213
    %v2215 = vpop.f32.mrf.mxu0
    %2216 = vdwg.mxu0
    %2217 = vmatpush.bf16.msra.mxu0 %v1606
    %2218 = vmatpush.bf16.msra.mxu0 %v1600
    %2219 = vmatpush.bf16.msra.mxu0 %v1594
    %2220 = vmatpush.bf16.msra.mxu0 %v1588
    %2221 = vmatpush.bf16.msra.mxu0 %v1582
    %2222 = vmatpush.bf16.msra.mxu0 %v1576
    %2223 = vmatpush.bf16.msra.mxu0 %v1570
    %2224 = vmatpush.bf16.msra.mxu0 %v1564
    %2225 = vmatmul.bf16.gmra.mxu0 %v391
    %v2226 = vpop.f32.mrf.mxu0
    %v2227 = vadd.f32 %v688, %v2226
    %v2228 = vpop.f32.mrf.mxu0
    %2229 = vdwg.mxu0
    %2230 = vmatpush.bf16.msra.mxu0 %v1654
    %2231 = vmatpush.bf16.msra.mxu0 %v1648
    %2232 = vmatpush.bf16.msra.mxu0 %v1642
    %2233 = vmatpush.bf16.msra.mxu0 %v1636
    %2234 = vmatpush.bf16.msra.mxu0 %v1630
    %2235 = vmatpush.bf16.msra.mxu0 %v1624
    %2236 = vmatpush.bf16.msra.mxu0 %v1618
    %2237 = vmatpush.bf16.msra.mxu0 %v1612
    %2238 = vmatmul.bf16.gmra.mxu0 %v392
    %v2239 = vpop.f32.mrf.mxu0
    %v2240 = vadd.f32 %v2227, %v2239
    %v2241 = vpop.f32.mrf.mxu0
    %2242 = vdwg.mxu0
    %2243 = vmatpush.bf16.msra.mxu0 %v1702
    %2244 = vmatpush.bf16.msra.mxu0 %v1696
    %2245 = vmatpush.bf16.msra.mxu0 %v1690
    %2246 = vmatpush.bf16.msra.mxu0 %v1684
    %2247 = vmatpush.bf16.msra.mxu0 %v1678
    %2248 = vmatpush.bf16.msra.mxu0 %v1672
    %2249 = vmatpush.bf16.msra.mxu0 %v1666
    %2250 = vmatpush.bf16.msra.mxu0 %v1660
    %2251 = vmatmul.bf16.gmra.mxu0 %v393
    %v2252 = vpop.f32.mrf.mxu0
    %v2253 = vadd.f32 %v2240, %v2252
    %v2254 = vpop.f32.mrf.mxu0
    %2255 = vdwg.mxu0
    %2256 = vmatpush.bf16.msra.mxu0 %v1750
    %2257 = vmatpush.bf16.msra.mxu0 %v1744
    %2258 = vmatpush.bf16.msra.mxu0 %v1738
    %2259 = vmatpush.bf16.msra.mxu0 %v1732
    %2260 = vmatpush.bf16.msra.mxu0 %v1726
    %2261 = vmatpush.bf16.msra.mxu0 %v1720
    %2262 = vmatpush.bf16.msra.mxu0 %v1714
    %2263 = vmatpush.bf16.msra.mxu0 %v1708
    %2264 = vmatmul.bf16.gmra.mxu0 %v394
    %v2265 = vpop.f32.mrf.mxu0
    %v2266 = vadd.f32 %v2253, %v2265
    %v2267 = vpop.f32.mrf.mxu0
    %2268 = vdwg.mxu0
    %2269 = vmatpush.bf16.msra.mxu0 %v1798
    %2270 = vmatpush.bf16.msra.mxu0 %v1792
    %2271 = vmatpush.bf16.msra.mxu0 %v1786
    %2272 = vmatpush.bf16.msra.mxu0 %v1780
    %2273 = vmatpush.bf16.msra.mxu0 %v1774
    %2274 = vmatpush.bf16.msra.mxu0 %v1768
    %2275 = vmatpush.bf16.msra.mxu0 %v1762
    %2276 = vmatpush.bf16.msra.mxu0 %v1756
    %2277 = vmatmul.bf16.gmra.mxu0 %v395
    %v2278 = vpop.f32.mrf.mxu0
    %v2279 = vadd.f32 %v2266, %v2278
    %v2280 = vpop.f32.mrf.mxu0
    %2281 = vdwg.mxu0
    %2282 = vmatpush.bf16.msra.mxu0 %v1846
    %2283 = vmatpush.bf16.msra.mxu0 %v1840
    %2284 = vmatpush.bf16.msra.mxu0 %v1834
    %2285 = vmatpush.bf16.msra.mxu0 %v1828
    %2286 = vmatpush.bf16.msra.mxu0 %v1822
    %2287 = vmatpush.bf16.msra.mxu0 %v1816
    %2288 = vmatpush.bf16.msra.mxu0 %v1810
    %2289 = vmatpush.bf16.msra.mxu0 %v1804
    %2290 = vmatmul.bf16.gmra.mxu0 %v396
    %v2291 = vpop.f32.mrf.mxu0
    %v2292 = vadd.f32 %v2279, %v2291
    %v2293 = vpop.f32.mrf.mxu0
    %2294 = vdwg.mxu0
    %2295 = vmatpush.bf16.msra.mxu0 %v1607
    %2296 = vmatpush.bf16.msra.mxu0 %v1601
    %2297 = vmatpush.bf16.msra.mxu0 %v1595
    %2298 = vmatpush.bf16.msra.mxu0 %v1589
    %2299 = vmatpush.bf16.msra.mxu0 %v1583
    %2300 = vmatpush.bf16.msra.mxu0 %v1577
    %2301 = vmatpush.bf16.msra.mxu0 %v1571
    %2302 = vmatpush.bf16.msra.mxu0 %v1565
    %2303 = vmatmul.bf16.gmra.mxu0 %v391
    %v2304 = vpop.f32.mrf.mxu0
    %v2305 = vadd.f32 %v689, %v2304
    %v2306 = vpop.f32.mrf.mxu0
    %2307 = vdwg.mxu0
    %2308 = vmatpush.bf16.msra.mxu0 %v1655
    %2309 = vmatpush.bf16.msra.mxu0 %v1649
    %2310 = vmatpush.bf16.msra.mxu0 %v1643
    %2311 = vmatpush.bf16.msra.mxu0 %v1637
    %2312 = vmatpush.bf16.msra.mxu0 %v1631
    %2313 = vmatpush.bf16.msra.mxu0 %v1625
    %2314 = vmatpush.bf16.msra.mxu0 %v1619
    %2315 = vmatpush.bf16.msra.mxu0 %v1613
    %2316 = vmatmul.bf16.gmra.mxu0 %v392
    %v2317 = vpop.f32.mrf.mxu0
    %v2318 = vadd.f32 %v2305, %v2317
    %v2319 = vpop.f32.mrf.mxu0
    %2320 = vdwg.mxu0
    %2321 = vmatpush.bf16.msra.mxu0 %v1703
    %2322 = vmatpush.bf16.msra.mxu0 %v1697
    %2323 = vmatpush.bf16.msra.mxu0 %v1691
    %2324 = vmatpush.bf16.msra.mxu0 %v1685
    %2325 = vmatpush.bf16.msra.mxu0 %v1679
    %2326 = vmatpush.bf16.msra.mxu0 %v1673
    %2327 = vmatpush.bf16.msra.mxu0 %v1667
    %2328 = vmatpush.bf16.msra.mxu0 %v1661
    %2329 = vmatmul.bf16.gmra.mxu0 %v393
    %v2330 = vpop.f32.mrf.mxu0
    %v2331 = vadd.f32 %v2318, %v2330
    %v2332 = vpop.f32.mrf.mxu0
    %2333 = vdwg.mxu0
    %2334 = vmatpush.bf16.msra.mxu0 %v1751
    %2335 = vmatpush.bf16.msra.mxu0 %v1745
    %2336 = vmatpush.bf16.msra.mxu0 %v1739
    %2337 = vmatpush.bf16.msra.mxu0 %v1733
    %2338 = vmatpush.bf16.msra.mxu0 %v1727
    %2339 = vmatpush.bf16.msra.mxu0 %v1721
    %2340 = vmatpush.bf16.msra.mxu0 %v1715
    %2341 = vmatpush.bf16.msra.mxu0 %v1709
    %2342 = vmatmul.bf16.gmra.mxu0 %v394
    %v2343 = vpop.f32.mrf.mxu0
    %v2344 = vadd.f32 %v2331, %v2343
    %v2345 = vpop.f32.mrf.mxu0
    %2346 = vdwg.mxu0
    %2347 = vmatpush.bf16.msra.mxu0 %v1799
    %2348 = vmatpush.bf16.msra.mxu0 %v1793
    %2349 = vmatpush.bf16.msra.mxu0 %v1787
    %2350 = vmatpush.bf16.msra.mxu0 %v1781
    %2351 = vmatpush.bf16.msra.mxu0 %v1775
    %2352 = vmatpush.bf16.msra.mxu0 %v1769
    %2353 = vmatpush.bf16.msra.mxu0 %v1763
    %2354 = vmatpush.bf16.msra.mxu0 %v1757
    %2355 = vmatmul.bf16.gmra.mxu0 %v395
    %v2356 = vpop.f32.mrf.mxu0
    %v2357 = vadd.f32 %v2344, %v2356
    %v2358 = vpop.f32.mrf.mxu0
    %2359 = vdwg.mxu0
    %2360 = vmatpush.bf16.msra.mxu0 %v1847
    %2361 = vmatpush.bf16.msra.mxu0 %v1841
    %2362 = vmatpush.bf16.msra.mxu0 %v1835
    %2363 = vmatpush.bf16.msra.mxu0 %v1829
    %2364 = vmatpush.bf16.msra.mxu0 %v1823
    %2365 = vmatpush.bf16.msra.mxu0 %v1817
    %2366 = vmatpush.bf16.msra.mxu0 %v1811
    %2367 = vmatpush.bf16.msra.mxu0 %v1805
    %2368 = vmatmul.bf16.gmra.mxu0 %v396
    %v2369 = vpop.f32.mrf.mxu0
    %v2370 = vadd.f32 %v2357, %v2369
    %v2371 = vpop.f32.mrf.mxu0
    %2372 = vdwg.mxu0
    %2373 = vmatpush.bf16.msra.mxu0 %v1608
    %2374 = vmatpush.bf16.msra.mxu0 %v1602
    %2375 = vmatpush.bf16.msra.mxu0 %v1596
    %2376 = vmatpush.bf16.msra.mxu0 %v1590
    %2377 = vmatpush.bf16.msra.mxu0 %v1584
    %2378 = vmatpush.bf16.msra.mxu0 %v1578
    %2379 = vmatpush.bf16.msra.mxu0 %v1572
    %2380 = vmatpush.bf16.msra.mxu0 %v1566
    %2381 = vmatmul.bf16.gmra.mxu0 %v391
    %v2382 = vpop.f32.mrf.mxu0
    %v2383 = vadd.f32 %v690, %v2382
    %v2384 = vpop.f32.mrf.mxu0
    %2385 = vdwg.mxu0
    %2386 = vmatpush.bf16.msra.mxu0 %v1656
    %2387 = vmatpush.bf16.msra.mxu0 %v1650
    %2388 = vmatpush.bf16.msra.mxu0 %v1644
    %2389 = vmatpush.bf16.msra.mxu0 %v1638
    %2390 = vmatpush.bf16.msra.mxu0 %v1632
    %2391 = vmatpush.bf16.msra.mxu0 %v1626
    %2392 = vmatpush.bf16.msra.mxu0 %v1620
    %2393 = vmatpush.bf16.msra.mxu0 %v1614
    %2394 = vmatmul.bf16.gmra.mxu0 %v392
    %v2395 = vpop.f32.mrf.mxu0
    %v2396 = vadd.f32 %v2383, %v2395
    %v2397 = vpop.f32.mrf.mxu0
    %2398 = vdwg.mxu0
    %2399 = vmatpush.bf16.msra.mxu0 %v1704
    %2400 = vmatpush.bf16.msra.mxu0 %v1698
    %2401 = vmatpush.bf16.msra.mxu0 %v1692
    %2402 = vmatpush.bf16.msra.mxu0 %v1686
    %2403 = vmatpush.bf16.msra.mxu0 %v1680
    %2404 = vmatpush.bf16.msra.mxu0 %v1674
    %2405 = vmatpush.bf16.msra.mxu0 %v1668
    %2406 = vmatpush.bf16.msra.mxu0 %v1662
    %2407 = vmatmul.bf16.gmra.mxu0 %v393
    %v2408 = vpop.f32.mrf.mxu0
    %v2409 = vadd.f32 %v2396, %v2408
    %v2410 = vpop.f32.mrf.mxu0
    %2411 = vdwg.mxu0
    %2412 = vmatpush.bf16.msra.mxu0 %v1752
    %2413 = vmatpush.bf16.msra.mxu0 %v1746
    %2414 = vmatpush.bf16.msra.mxu0 %v1740
    %2415 = vmatpush.bf16.msra.mxu0 %v1734
    %2416 = vmatpush.bf16.msra.mxu0 %v1728
    %2417 = vmatpush.bf16.msra.mxu0 %v1722
    %2418 = vmatpush.bf16.msra.mxu0 %v1716
    %2419 = vmatpush.bf16.msra.mxu0 %v1710
    %2420 = vmatmul.bf16.gmra.mxu0 %v394
    %v2421 = vpop.f32.mrf.mxu0
    %v2422 = vadd.f32 %v2409, %v2421
    %v2423 = vpop.f32.mrf.mxu0
    %2424 = vdwg.mxu0
    %2425 = vmatpush.bf16.msra.mxu0 %v1800
    %2426 = vmatpush.bf16.msra.mxu0 %v1794
    %2427 = vmatpush.bf16.msra.mxu0 %v1788
    %2428 = vmatpush.bf16.msra.mxu0 %v1782
    %2429 = vmatpush.bf16.msra.mxu0 %v1776
    %2430 = vmatpush.bf16.msra.mxu0 %v1770
    %2431 = vmatpush.bf16.msra.mxu0 %v1764
    %2432 = vmatpush.bf16.msra.mxu0 %v1758
    %2433 = vmatmul.bf16.gmra.mxu0 %v395
    %v2434 = vpop.f32.mrf.mxu0
    %v2435 = vadd.f32 %v2422, %v2434
    %v2436 = vpop.f32.mrf.mxu0
    %2437 = vdwg.mxu0
    %2438 = vmatpush.bf16.msra.mxu0 %v1848
    %2439 = vmatpush.bf16.msra.mxu0 %v1842
    %2440 = vmatpush.bf16.msra.mxu0 %v1836
    %2441 = vmatpush.bf16.msra.mxu0 %v1830
    %2442 = vmatpush.bf16.msra.mxu0 %v1824
    %2443 = vmatpush.bf16.msra.mxu0 %v1818
    %2444 = vmatpush.bf16.msra.mxu0 %v1812
    %2445 = vmatpush.bf16.msra.mxu0 %v1806
    %2446 = vmatmul.bf16.gmra.mxu0 %v396
    %v2447 = vpop.f32.mrf.mxu0
    %v2448 = vadd.f32 %v2435, %v2447
    %v2449 = vpop.f32.mrf.mxu0
    %2450 = vdwg.mxu0
    %2451 = vmatpush.bf16.msra.mxu0 %v1609
    %2452 = vmatpush.bf16.msra.mxu0 %v1603
    %2453 = vmatpush.bf16.msra.mxu0 %v1597
    %2454 = vmatpush.bf16.msra.mxu0 %v1591
    %2455 = vmatpush.bf16.msra.mxu0 %v1585
    %2456 = vmatpush.bf16.msra.mxu0 %v1579
    %2457 = vmatpush.bf16.msra.mxu0 %v1573
    %2458 = vmatpush.bf16.msra.mxu0 %v1567
    %2459 = vmatmul.bf16.gmra.mxu0 %v391
    %v2460 = vpop.f32.mrf.mxu0
    %v2461 = vadd.f32 %v691, %v2460
    %v2462 = vpop.f32.mrf.mxu0
    %2463 = vdwg.mxu0
    %2464 = vmatpush.bf16.msra.mxu0 %v1657
    %2465 = vmatpush.bf16.msra.mxu0 %v1651
    %2466 = vmatpush.bf16.msra.mxu0 %v1645
    %2467 = vmatpush.bf16.msra.mxu0 %v1639
    %2468 = vmatpush.bf16.msra.mxu0 %v1633
    %2469 = vmatpush.bf16.msra.mxu0 %v1627
    %2470 = vmatpush.bf16.msra.mxu0 %v1621
    %2471 = vmatpush.bf16.msra.mxu0 %v1615
    %2472 = vmatmul.bf16.gmra.mxu0 %v392
    %v2473 = vpop.f32.mrf.mxu0
    %v2474 = vadd.f32 %v2461, %v2473
    %v2475 = vpop.f32.mrf.mxu0
    %2476 = vdwg.mxu0
    %2477 = vmatpush.bf16.msra.mxu0 %v1705
    %2478 = vmatpush.bf16.msra.mxu0 %v1699
    %2479 = vmatpush.bf16.msra.mxu0 %v1693
    %2480 = vmatpush.bf16.msra.mxu0 %v1687
    %2481 = vmatpush.bf16.msra.mxu0 %v1681
    %2482 = vmatpush.bf16.msra.mxu0 %v1675
    %2483 = vmatpush.bf16.msra.mxu0 %v1669
    %2484 = vmatpush.bf16.msra.mxu0 %v1663
    %2485 = vmatmul.bf16.gmra.mxu0 %v393
    %v2486 = vpop.f32.mrf.mxu0
    %v2487 = vadd.f32 %v2474, %v2486
    %v2488 = vpop.f32.mrf.mxu0
    %2489 = vdwg.mxu0
    %2490 = vmatpush.bf16.msra.mxu0 %v1753
    %2491 = vmatpush.bf16.msra.mxu0 %v1747
    %2492 = vmatpush.bf16.msra.mxu0 %v1741
    %2493 = vmatpush.bf16.msra.mxu0 %v1735
    %2494 = vmatpush.bf16.msra.mxu0 %v1729
    %2495 = vmatpush.bf16.msra.mxu0 %v1723
    %2496 = vmatpush.bf16.msra.mxu0 %v1717
    %2497 = vmatpush.bf16.msra.mxu0 %v1711
    %2498 = vmatmul.bf16.gmra.mxu0 %v394
    %v2499 = vpop.f32.mrf.mxu0
    %v2500 = vadd.f32 %v2487, %v2499
    %v2501 = vpop.f32.mrf.mxu0
    %2502 = vdwg.mxu0
    %2503 = vmatpush.bf16.msra.mxu0 %v1801
    %2504 = vmatpush.bf16.msra.mxu0 %v1795
    %2505 = vmatpush.bf16.msra.mxu0 %v1789
    %2506 = vmatpush.bf16.msra.mxu0 %v1783
    %2507 = vmatpush.bf16.msra.mxu0 %v1777
    %2508 = vmatpush.bf16.msra.mxu0 %v1771
    %2509 = vmatpush.bf16.msra.mxu0 %v1765
    %2510 = vmatpush.bf16.msra.mxu0 %v1759
    %2511 = vmatmul.bf16.gmra.mxu0 %v395
    %v2512 = vpop.f32.mrf.mxu0
    %v2513 = vadd.f32 %v2500, %v2512
    %v2514 = vpop.f32.mrf.mxu0
    %2515 = vdwg.mxu0
    %2516 = vmatpush.bf16.msra.mxu0 %v1849
    %2517 = vmatpush.bf16.msra.mxu0 %v1843
    %2518 = vmatpush.bf16.msra.mxu0 %v1837
    %2519 = vmatpush.bf16.msra.mxu0 %v1831
    %2520 = vmatpush.bf16.msra.mxu0 %v1825
    %2521 = vmatpush.bf16.msra.mxu0 %v1819
    %2522 = vmatpush.bf16.msra.mxu0 %v1813
    %2523 = vmatpush.bf16.msra.mxu0 %v1807
    %2524 = vmatmul.bf16.gmra.mxu0 %v396
    %v2525 = vpop.f32.mrf.mxu0
    %v2526 = vadd.f32 %v2513, %v2525
    %v2527 = vpop.f32.mrf.mxu0
    %2528 = vdwg.mxu0
    %2529 = vmatpush.bf16.msra.mxu0 %v1610
    %2530 = vmatpush.bf16.msra.mxu0 %v1604
    %2531 = vmatpush.bf16.msra.mxu0 %v1598
    %2532 = vmatpush.bf16.msra.mxu0 %v1592
    %2533 = vmatpush.bf16.msra.mxu0 %v1586
    %2534 = vmatpush.bf16.msra.mxu0 %v1580
    %2535 = vmatpush.bf16.msra.mxu0 %v1574
    %2536 = vmatpush.bf16.msra.mxu0 %v1568
    %2537 = vmatmul.bf16.gmra.mxu0 %v391
    %v2538 = vpop.f32.mrf.mxu0
    %v2539 = vadd.f32 %v692, %v2538
    %v2540 = vpop.f32.mrf.mxu0
    %2541 = vdwg.mxu0
    %2542 = vmatpush.bf16.msra.mxu0 %v1658
    %2543 = vmatpush.bf16.msra.mxu0 %v1652
    %2544 = vmatpush.bf16.msra.mxu0 %v1646
    %2545 = vmatpush.bf16.msra.mxu0 %v1640
    %2546 = vmatpush.bf16.msra.mxu0 %v1634
    %2547 = vmatpush.bf16.msra.mxu0 %v1628
    %2548 = vmatpush.bf16.msra.mxu0 %v1622
    %2549 = vmatpush.bf16.msra.mxu0 %v1616
    %2550 = vmatmul.bf16.gmra.mxu0 %v392
    %v2551 = vpop.f32.mrf.mxu0
    %v2552 = vadd.f32 %v2539, %v2551
    %v2553 = vpop.f32.mrf.mxu0
    %2554 = vdwg.mxu0
    %2555 = vmatpush.bf16.msra.mxu0 %v1706
    %2556 = vmatpush.bf16.msra.mxu0 %v1700
    %2557 = vmatpush.bf16.msra.mxu0 %v1694
    %2558 = vmatpush.bf16.msra.mxu0 %v1688
    %2559 = vmatpush.bf16.msra.mxu0 %v1682
    %2560 = vmatpush.bf16.msra.mxu0 %v1676
    %2561 = vmatpush.bf16.msra.mxu0 %v1670
    %2562 = vmatpush.bf16.msra.mxu0 %v1664
    %2563 = vmatmul.bf16.gmra.mxu0 %v393
    %v2564 = vpop.f32.mrf.mxu0
    %v2565 = vadd.f32 %v2552, %v2564
    %v2566 = vpop.f32.mrf.mxu0
    %2567 = vdwg.mxu0
    %2568 = vmatpush.bf16.msra.mxu0 %v1754
    %2569 = vmatpush.bf16.msra.mxu0 %v1748
    %2570 = vmatpush.bf16.msra.mxu0 %v1742
    %2571 = vmatpush.bf16.msra.mxu0 %v1736
    %2572 = vmatpush.bf16.msra.mxu0 %v1730
    %2573 = vmatpush.bf16.msra.mxu0 %v1724
    %2574 = vmatpush.bf16.msra.mxu0 %v1718
    %2575 = vmatpush.bf16.msra.mxu0 %v1712
    %2576 = vmatmul.bf16.gmra.mxu0 %v394
    %v2577 = vpop.f32.mrf.mxu0
    %v2578 = vadd.f32 %v2565, %v2577
    %v2579 = vpop.f32.mrf.mxu0
    %2580 = vdwg.mxu0
    %2581 = vmatpush.bf16.msra.mxu0 %v1802
    %2582 = vmatpush.bf16.msra.mxu0 %v1796
    %2583 = vmatpush.bf16.msra.mxu0 %v1790
    %2584 = vmatpush.bf16.msra.mxu0 %v1784
    %2585 = vmatpush.bf16.msra.mxu0 %v1778
    %2586 = vmatpush.bf16.msra.mxu0 %v1772
    %2587 = vmatpush.bf16.msra.mxu0 %v1766
    %2588 = vmatpush.bf16.msra.mxu0 %v1760
    %2589 = vmatmul.bf16.gmra.mxu0 %v395
    %v2590 = vpop.f32.mrf.mxu0
    %v2591 = vadd.f32 %v2578, %v2590
    %v2592 = vpop.f32.mrf.mxu0
    %2593 = vdwg.mxu0
    %2594 = vmatpush.bf16.msra.mxu0 %v1850
    %2595 = vmatpush.bf16.msra.mxu0 %v1844
    %2596 = vmatpush.bf16.msra.mxu0 %v1838
    %2597 = vmatpush.bf16.msra.mxu0 %v1832
    %2598 = vmatpush.bf16.msra.mxu0 %v1826
    %2599 = vmatpush.bf16.msra.mxu0 %v1820
    %2600 = vmatpush.bf16.msra.mxu0 %v1814
    %2601 = vmatpush.bf16.msra.mxu0 %v1808
    %2602 = vmatmul.bf16.gmra.mxu0 %v396
    %v2603 = vpop.f32.mrf.mxu0
    %v2604 = vadd.f32 %v2591, %v2603
    %v2605 = vpop.f32.mrf.mxu0
    %2606 = vdwg.mxu0
    %v2607 = vmax.f32 %v2214, 0.0
    %v2608 = vmax.f32 %v2292, 0.0
    %v2609 = vmax.f32 %v2370, 0.0
    %v2610 = vmax.f32 %v2448, 0.0
    %v2611 = vmax.f32 %v2526, 0.0
    %v2612 = vmax.f32 %v2604, 0.0
    %v2613 = vpack.c.bf16 %v2607, %v2607
    %v2614 = vpack.c.bf16 %v2608, %v2608
    %v2615 = vpack.c.bf16 %v2609, %v2609
    %v2616 = vpack.c.bf16 %v2610, %v2610
    %v2617 = vpack.c.bf16 %v2611, %v2611
    %v2618 = vpack.c.bf16 %v2612, %v2612
    %v2619 = vld [vmem:[%s7] sm:$0xf]
    %v2620 = vld [vmem:[%s7 + $0x4] sm:$0xf]
    %v2621 = vld [vmem:[%s7 + $0x8] sm:$0xf]
    %v2622 = vld [vmem:[%s7 + $0xc] sm:$0xf]
    %v2623 = vld [vmem:[%s7 + $0x10] sm:$0xf]
    %v2624 = vld [vmem:[%s7 + $0x14] sm:$0xf]
    %v2625 = vld [vmem:[%s7 + $0x18] sm:$0xf]
    %v2626 = vld [vmem:[%s7 + $0x1c] sm:$0xf]
    %v2627 = vld [vmem:[%s7 + $0x20] sm:$0xf]
    %v2628 = vld [vmem:[%s7 + $0x24] sm:$0xf]
    %v2629 = vld [vmem:[%s7 + $0x28] sm:$0xf]
    %v2630 = vld [vmem:[%s7 + $0x2c] sm:$0xf]
    %v2631 = vld [vmem:[%s7 + $0x30] sm:$0xf]
    %v2632 = vld [vmem:[%s7 + $0x34] sm:$0xf]
    %v2633 = vld [vmem:[%s7 + $0x38] sm:$0xf]
    %v2634 = vld [vmem:[%s7 + $0x3c] sm:$0xf]
    %v2635 = vld [vmem:[%s7 + $0x40] sm:$0xf]
    %v2636 = vld [vmem:[%s7 + $0x44] sm:$0xf]
    %v2637 = vld [vmem:[%s7 + $0x48] sm:$0xf]
    %v2638 = vld [vmem:[%s7 + $0x4c] sm:$0xf]
    %v2639 = vld [vmem:[%s7 + $0x50] sm:$0xf]
    %v2640 = vld [vmem:[%s7 + $0x54] sm:$0xf]
    %v2641 = vld [vmem:[%s7 + $0x58] sm:$0xf]
    %v2642 = vld [vmem:[%s7 + $0x5c] sm:$0xf]
    %v2643 = vld [vmem:[%s7 + $0x60] sm:$0xf]
    %v2644 = vld [vmem:[%s7 + $0x64] sm:$0xf]
    %v2645 = vld [vmem:[%s7 + $0x68] sm:$0xf]
    %v2646 = vld [vmem:[%s7 + $0x6c] sm:$0xf]
    %v2647 = vld [vmem:[%s7 + $0x70] sm:$0xf]
    %v2648 = vld [vmem:[%s7 + $0x74] sm:$0xf]
    %v2649 = vld [vmem:[%s7 + $0x78] sm:$0xf]
    %v2650 = vld [vmem:[%s7 + $0x7c] sm:$0xf]
    %v2651 = vld [vmem:[%s7 + $0x80] sm:$0xf]
    %v2652 = vld [vmem:[%s7 + $0x84] sm:$0xf]
    %v2653 = vld [vmem:[%s7 + $0x88] sm:$0xf]
    %v2654 = vld [vmem:[%s7 + $0x8c] sm:$0xf]
    %v2655 = vld [vmem:[%s7 + $0x90] sm:$0xf]
    %v2656 = vld [vmem:[%s7 + $0x94] sm:$0xf]
    %v2657 = vld [vmem:[%s7 + $0x98] sm:$0xf]
    %v2658 = vld [vmem:[%s7 + $0x9c] sm:$0xf]
    %v2659 = vld [vmem:[%s7 + $0xa0] sm:$0xf]
    %v2660 = vld [vmem:[%s7 + $0xa4] sm:$0xf]
    %v2661 = vld [vmem:[%s7 + $0xa8] sm:$0xf]
    %v2662 = vld [vmem:[%s7 + $0xac] sm:$0xf]
    %v2663 = vld [vmem:[%s7 + $0xb0] sm:$0xf]
    %v2664 = vld [vmem:[%s7 + $0xb4] sm:$0xf]
    %v2665 = vld [vmem:[%s7 + $0xb8] sm:$0xf]
    %v2666 = vld [vmem:[%s7 + $0xbc] sm:$0xf]
    %v2667 = vld [vmem:[%s7 + $0xc0] sm:$0xf]
    %v2668 = vld [vmem:[%s7 + $0xc4] sm:$0xf]
    %v2669 = vld [vmem:[%s7 + $0xc8] sm:$0xf]
    %v2670 = vld [vmem:[%s7 + $0xcc] sm:$0xf]
    %v2671 = vld [vmem:[%s7 + $0xd0] sm:$0xf]
    %v2672 = vld [vmem:[%s7 + $0xd4] sm:$0xf]
    %v2673 = vld [vmem:[%s7 + $0xd8] sm:$0xf]
    %v2674 = vld [vmem:[%s7 + $0xdc] sm:$0xf]
    %v2675 = vld [vmem:[%s7 + $0xe0] sm:$0xf]
    %v2676 = vld [vmem:[%s7 + $0xe4] sm:$0xf]
    %v2677 = vld [vmem:[%s7 + $0xe8] sm:$0xf]
    %v2678 = vld [vmem:[%s7 + $0xec] sm:$0xf]
    %v2679 = vld [vmem:[%s7 + $0xf0] sm:$0xf]
    %v2680 = vld [vmem:[%s7 + $0xf4] sm:$0xf]
    %v2681 = vld [vmem:[%s7 + $0xf8] sm:$0xf]
    %v2682 = vld [vmem:[%s7 + $0xfc] sm:$0xf]
    %v2683 = vld [vmem:[%s7 + $0x100] sm:$0xf]
    %v2684 = vld [vmem:[%s7 + $0x104] sm:$0xf]
    %v2685 = vld [vmem:[%s7 + $0x108] sm:$0xf]
    %v2686 = vld [vmem:[%s7 + $0x10c] sm:$0xf]
    %v2687 = vld [vmem:[%s7 + $0x110] sm:$0xf]
    %v2688 = vld [vmem:[%s7 + $0x114] sm:$0xf]
    %v2689 = vld [vmem:[%s7 + $0x118] sm:$0xf]
    %v2690 = vld [vmem:[%s7 + $0x11c] sm:$0xf]
    %v2691 = vld [vmem:[%s7 + $0x120] sm:$0xf]
    %v2692 = vld [vmem:[%s7 + $0x124] sm:$0xf]
    %v2693 = vld [vmem:[%s7 + $0x128] sm:$0xf]
    %v2694 = vld [vmem:[%s7 + $0x12c] sm:$0xf]
    %v2695 = vld [vmem:[%s7 + $0x130] sm:$0xf]
    %v2696 = vld [vmem:[%s7 + $0x134] sm:$0xf]
    %v2697 = vld [vmem:[%s7 + $0x138] sm:$0xf]
    %v2698 = vld [vmem:[%s7 + $0x13c] sm:$0xf]
    %v2699 = vld [vmem:[%s7 + $0x140] sm:$0xf]
    %v2700 = vld [vmem:[%s7 + $0x144] sm:$0xf]
    %v2701 = vld [vmem:[%s7 + $0x148] sm:$0xf]
    %v2702 = vld [vmem:[%s7 + $0x14c] sm:$0xf]
    %v2703 = vld [vmem:[%s7 + $0x150] sm:$0xf]
    %v2704 = vld [vmem:[%s7 + $0x154] sm:$0xf]
    %v2705 = vld [vmem:[%s7 + $0x158] sm:$0xf]
    %v2706 = vld [vmem:[%s7 + $0x15c] sm:$0xf]
    %v2707 = vld [vmem:[%s7 + $0x160] sm:$0xf]
    %v2708 = vld [vmem:[%s7 + $0x164] sm:$0xf]
    %v2709 = vld [vmem:[%s7 + $0x168] sm:$0xf]
    %v2710 = vld [vmem:[%s7 + $0x16c] sm:$0xf]
    %v2711 = vld [vmem:[%s7 + $0x170] sm:$0xf]
    %v2712 = vld [vmem:[%s7 + $0x174] sm:$0xf]
    %v2713 = vld [vmem:[%s7 + $0x178] sm:$0xf]
    %v2714 = vld [vmem:[%s7 + $0x17c] sm:$0xf]
    %v2715 = vld [vmem:[#allocation9] sm:$0x1]
    %v2717 = vperm.slane %v2715, 0
    %v2815 = vunpack.c.l.b16 %v2619
    %v2816 = vunpack.c.l.b16 %v2620
    %v2817 = vunpack.c.l.b16 %v2621
    %v2818 = vunpack.c.l.b16 %v2622
    %v2819 = vunpack.c.l.b16 %v2623
    %v2820 = vunpack.c.l.b16 %v2624
    %v2821 = vunpack.c.l.b16 %v2625
    %v2822 = vunpack.c.l.b16 %v2626
    %v2823 = vunpack.c.l.b16 %v2627
    %v2824 = vunpack.c.l.b16 %v2628
    %v2825 = vunpack.c.l.b16 %v2629
    %v2826 = vunpack.c.l.b16 %v2630
    %v2827 = vunpack.c.l.b16 %v2631
    %v2828 = vunpack.c.l.b16 %v2632
    %v2829 = vunpack.c.l.b16 %v2633
    %v2830 = vunpack.c.l.b16 %v2634
    %v2831 = vunpack.c.l.b16 %v2635
    %v2832 = vunpack.c.l.b16 %v2636
    %v2833 = vunpack.c.l.b16 %v2637
    %v2834 = vunpack.c.l.b16 %v2638
    %v2835 = vunpack.c.l.b16 %v2639
    %v2836 = vunpack.c.l.b16 %v2640
    %v2837 = vunpack.c.l.b16 %v2641
    %v2838 = vunpack.c.l.b16 %v2642
    %v2839 = vunpack.c.l.b16 %v2643
    %v2840 = vunpack.c.l.b16 %v2644
    %v2841 = vunpack.c.l.b16 %v2645
    %v2842 = vunpack.c.l.b16 %v2646
    %v2843 = vunpack.c.l.b16 %v2647
    %v2844 = vunpack.c.l.b16 %v2648
    %v2845 = vunpack.c.l.b16 %v2649
    %v2846 = vunpack.c.l.b16 %v2650
    %v2847 = vunpack.c.l.b16 %v2651
    %v2848 = vunpack.c.l.b16 %v2652
    %v2849 = vunpack.c.l.b16 %v2653
    %v2850 = vunpack.c.l.b16 %v2654
    %v2851 = vunpack.c.l.b16 %v2655
    %v2852 = vunpack.c.l.b16 %v2656
    %v2853 = vunpack.c.l.b16 %v2657
    %v2854 = vunpack.c.l.b16 %v2658
    %v2855 = vunpack.c.l.b16 %v2659
    %v2856 = vunpack.c.l.b16 %v2660
    %v2857 = vunpack.c.l.b16 %v2661
    %v2858 = vunpack.c.l.b16 %v2662
    %v2859 = vunpack.c.l.b16 %v2663
    %v2860 = vunpack.c.l.b16 %v2664
    %v2861 = vunpack.c.l.b16 %v2665
    %v2862 = vunpack.c.l.b16 %v2666
    %v2863 = vunpack.c.l.b16 %v2667
    %v2864 = vunpack.c.l.b16 %v2668
    %v2865 = vunpack.c.l.b16 %v2669
    %v2866 = vunpack.c.l.b16 %v2670
    %v2867 = vunpack.c.l.b16 %v2671
    %v2868 = vunpack.c.l.b16 %v2672
    %v2869 = vunpack.c.l.b16 %v2673
    %v2870 = vunpack.c.l.b16 %v2674
    %v2871 = vunpack.c.l.b16 %v2675
    %v2872 = vunpack.c.l.b16 %v2676
    %v2873 = vunpack.c.l.b16 %v2677
    %v2874 = vunpack.c.l.b16 %v2678
    %v2875 = vunpack.c.l.b16 %v2679
    %v2876 = vunpack.c.l.b16 %v2680
    %v2877 = vunpack.c.l.b16 %v2681
    %v2878 = vunpack.c.l.b16 %v2682
    %v2879 = vunpack.c.l.b16 %v2683
    %v2880 = vunpack.c.l.b16 %v2684
    %v2881 = vunpack.c.l.b16 %v2685
    %v2882 = vunpack.c.l.b16 %v2686
    %v2883 = vunpack.c.l.b16 %v2687
    %v2884 = vunpack.c.l.b16 %v2688
    %v2885 = vunpack.c.l.b16 %v2689
    %v2886 = vunpack.c.l.b16 %v2690
    %v2887 = vunpack.c.l.b16 %v2691
    %v2888 = vunpack.c.l.b16 %v2692
    %v2889 = vunpack.c.l.b16 %v2693
    %v2890 = vunpack.c.l.b16 %v2694
    %v2891 = vunpack.c.l.b16 %v2695
    %v2892 = vunpack.c.l.b16 %v2696
    %v2893 = vunpack.c.l.b16 %v2697
    %v2894 = vunpack.c.l.b16 %v2698
    %v2895 = vunpack.c.l.b16 %v2699
    %v2896 = vunpack.c.l.b16 %v2700
    %v2897 = vunpack.c.l.b16 %v2701
    %v2898 = vunpack.c.l.b16 %v2702
    %v2899 = vunpack.c.l.b16 %v2703
    %v2900 = vunpack.c.l.b16 %v2704
    %v2901 = vunpack.c.l.b16 %v2705
    %v2902 = vunpack.c.l.b16 %v2706
    %v2903 = vunpack.c.l.b16 %v2707
    %v2904 = vunpack.c.l.b16 %v2708
    %v2905 = vunpack.c.l.b16 %v2709
    %v2906 = vunpack.c.l.b16 %v2710
    %v2907 = vunpack.c.l.b16 %v2711
    %v2908 = vunpack.c.l.b16 %v2712
    %v2909 = vunpack.c.l.b16 %v2713
    %v2910 = vunpack.c.l.b16 %v2714
    %v2911 = vpack.c.b16 %v2816, %v2815
    %v2912 = vpack.c.b16 %v2818, %v2817
    %v2913 = vpack.c.b16 %v2820, %v2819
    %v2914 = vpack.c.b16 %v2822, %v2821
    %v2915 = vpack.c.b16 %v2824, %v2823
    %v2916 = vpack.c.b16 %v2826, %v2825
    %v2917 = vpack.c.b16 %v2828, %v2827
    %v2918 = vpack.c.b16 %v2830, %v2829
    %v2919 = vpack.c.b16 %v2832, %v2831
    %v2920 = vpack.c.b16 %v2834, %v2833
    %v2921 = vpack.c.b16 %v2836, %v2835
    %v2922 = vpack.c.b16 %v2838, %v2837
    %v2923 = vpack.c.b16 %v2840, %v2839
    %v2924 = vpack.c.b16 %v2842, %v2841
    %v2925 = vpack.c.b16 %v2844, %v2843
    %v2926 = vpack.c.b16 %v2846, %v2845
    %v2927 = vpack.c.b16 %v2848, %v2847
    %v2928 = vpack.c.b16 %v2850, %v2849
    %v2929 = vpack.c.b16 %v2852, %v2851
    %v2930 = vpack.c.b16 %v2854, %v2853
    %v2931 = vpack.c.b16 %v2856, %v2855
    %v2932 = vpack.c.b16 %v2858, %v2857
    %v2933 = vpack.c.b16 %v2860, %v2859
    %v2934 = vpack.c.b16 %v2862, %v2861
    %v2935 = vpack.c.b16 %v2864, %v2863
    %v2936 = vpack.c.b16 %v2866, %v2865
    %v2937 = vpack.c.b16 %v2868, %v2867
    %v2938 = vpack.c.b16 %v2870, %v2869
    %v2939 = vpack.c.b16 %v2872, %v2871
    %v2940 = vpack.c.b16 %v2874, %v2873
    %v2941 = vpack.c.b16 %v2876, %v2875
    %v2942 = vpack.c.b16 %v2878, %v2877
    %v2943 = vpack.c.b16 %v2880, %v2879
    %v2944 = vpack.c.b16 %v2882, %v2881
    %v2945 = vpack.c.b16 %v2884, %v2883
    %v2946 = vpack.c.b16 %v2886, %v2885
    %v2947 = vpack.c.b16 %v2888, %v2887
    %v2948 = vpack.c.b16 %v2890, %v2889
    %v2949 = vpack.c.b16 %v2892, %v2891
    %v2950 = vpack.c.b16 %v2894, %v2893
    %v2951 = vpack.c.b16 %v2896, %v2895
    %v2952 = vpack.c.b16 %v2898, %v2897
    %v2953 = vpack.c.b16 %v2900, %v2899
    %v2954 = vpack.c.b16 %v2902, %v2901
    %v2955 = vpack.c.b16 %v2904, %v2903
    %v2956 = vpack.c.b16 %v2906, %v2905
    %v2957 = vpack.c.b16 %v2908, %v2907
    %v2958 = vpack.c.b16 %v2910, %v2909
    %3007 = vmatpush.bf16.msra.mxu0 %v2918
    %3008 = vmatpush.bf16.msra.mxu0 %v2917
    %3009 = vmatpush.bf16.msra.mxu0 %v2916
    %3010 = vmatpush.bf16.msra.mxu0 %v2915
    %3011 = vmatpush.bf16.msra.mxu0 %v2914
    %3012 = vmatpush.bf16.msra.mxu0 %v2913
    %3013 = vmatpush.bf16.msra.mxu0 %v2912
    %3014 = vmatpush.bf16.msra.mxu0 %v2911
    %3015 = vmatmul.bf16.gmra.mxu0 %v2613
    %v3016 = vpop.f32.mrf.mxu0
    %v3017 = vadd.f32 %v2717, %v3016
    %v3018 = vpop.f32.mrf.mxu0
    %3019 = vdwg.mxu0
    %3020 = vmatpush.bf16.msra.mxu0 %v2926
    %3021 = vmatpush.bf16.msra.mxu0 %v2925
    %3022 = vmatpush.bf16.msra.mxu0 %v2924
    %3023 = vmatpush.bf16.msra.mxu0 %v2923
    %3024 = vmatpush.bf16.msra.mxu0 %v2922
    %3025 = vmatpush.bf16.msra.mxu0 %v2921
    %3026 = vmatpush.bf16.msra.mxu0 %v2920
    %3027 = vmatpush.bf16.msra.mxu0 %v2919
    %3028 = vmatmul.bf16.gmra.mxu0 %v2614
    %v3029 = vpop.f32.mrf.mxu0
    %v3030 = vadd.f32 %v3017, %v3029
    %v3031 = vpop.f32.mrf.mxu0
    %3032 = vdwg.mxu0
    %3033 = vmatpush.bf16.msra.mxu0 %v2934
    %3034 = vmatpush.bf16.msra.mxu0 %v2933
    %3035 = vmatpush.bf16.msra.mxu0 %v2932
    %3036 = vmatpush.bf16.msra.mxu0 %v2931
    %3037 = vmatpush.bf16.msra.mxu0 %v2930
    %3038 = vmatpush.bf16.msra.mxu0 %v2929
    %3039 = vmatpush.bf16.msra.mxu0 %v2928
    %3040 = vmatpush.bf16.msra.mxu0 %v2927
    %3041 = vmatmul.bf16.gmra.mxu0 %v2615
    %v3042 = vpop.f32.mrf.mxu0
    %v3043 = vadd.f32 %v3030, %v3042
    %v3044 = vpop.f32.mrf.mxu0
    %3045 = vdwg.mxu0
    %3046 = vmatpush.bf16.msra.mxu0 %v2942
    %3047 = vmatpush.bf16.msra.mxu0 %v2941
    %3048 = vmatpush.bf16.msra.mxu0 %v2940
    %3049 = vmatpush.bf16.msra.mxu0 %v2939
    %3050 = vmatpush.bf16.msra.mxu0 %v2938
    %3051 = vmatpush.bf16.msra.mxu0 %v2937
    %3052 = vmatpush.bf16.msra.mxu0 %v2936
    %3053 = vmatpush.bf16.msra.mxu0 %v2935
    %3054 = vmatmul.bf16.gmra.mxu0 %v2616
    %v3055 = vpop.f32.mrf.mxu0
    %v3056 = vadd.f32 %v3043, %v3055
    %v3057 = vpop.f32.mrf.mxu0
    %3058 = vdwg.mxu0
    %3059 = vmatpush.bf16.msra.mxu0 %v2950
    %3060 = vmatpush.bf16.msra.mxu0 %v2949
    %3061 = vmatpush.bf16.msra.mxu0 %v2948
    %3062 = vmatpush.bf16.msra.mxu0 %v2947
    %3063 = vmatpush.bf16.msra.mxu0 %v2946
    %3064 = vmatpush.bf16.msra.mxu0 %v2945
    %3065 = vmatpush.bf16.msra.mxu0 %v2944
    %3066 = vmatpush.bf16.msra.mxu0 %v2943
    %3067 = vmatmul.bf16.gmra.mxu0 %v2617
    %v3068 = vpop.f32.mrf.mxu0
    %v3069 = vadd.f32 %v3056, %v3068
    %v3070 = vpop.f32.mrf.mxu0
    %3071 = vdwg.mxu0
    %3072 = vmatpush.bf16.msra.mxu0 %v2958
    %3073 = vmatpush.bf16.msra.mxu0 %v2957
    %3074 = vmatpush.bf16.msra.mxu0 %v2956
    %3075 = vmatpush.bf16.msra.mxu0 %v2955
    %3076 = vmatpush.bf16.msra.mxu0 %v2954
    %3077 = vmatpush.bf16.msra.mxu0 %v2953
    %3078 = vmatpush.bf16.msra.mxu0 %v2952
    %3079 = vmatpush.bf16.msra.mxu0 %v2951
    %3080 = vmatmul.bf16.gmra.mxu0 %v2618
    %v3081 = vpop.f32.mrf.mxu0
    %v3082 = vadd.f32 %v3069, %v3081
    %v3083 = vpop.f32.mrf.mxu0
    %3084 = vdwg.mxu0
    %v3085 = vlaneseq
    %v3086 = vand.u32 %v3085, 127
    %vm3087 = vcmp.ge.s32.totalorder %v3086, 4
    %vm3088 = vcmp.lt.s32.totalorder %v3086, 12
    %vm3089 = vmand %vm3087, %vm3088
    %vm3090 = vcmp.ge.s32.totalorder %v3086, 12
    %vm3091 = vcmp.lt.s32.totalorder %v3086, 20
    %vm3092 = vmand %vm3090, %vm3091
    %v3093 = vmax.f32 %v3082, -4.0
    %v3094 = vmin.f32 %v3093, 15.0
    %v3095 = vmul.f32 %v3094, 1.442695
    %v3096 = vpow.pop %v3095
    %v3097 = vsel %vm3092, %v3096, 0.0
    %v3098 = vsel %vm3089, %v3082, %v3097
    %v3099 = vmul.f32 %v3098, %v215
    %v3100 = vld [vmem:[#allocation10] sm:$0xff]
    %v3101 = vld [vmem:[#allocation10 + $0x8] sm:$0xff]
    %v3102 = vld [vmem:[#allocation10 + $0x10] sm:$0xff]
    %v3103 = vld [vmem:[#allocation10 + $0x18] sm:$0xff]
    %v3104 = vld [vmem:[#allocation10 + $0x20] sm:$0xff]
    %v3105 = vld [vmem:[#allocation10 + $0x28] sm:$0xff]
    %v3106 = vpack.c.bf16 %v3099, %v3099
    %v3107 = vld [vmem:[#allocation12] sm:$0xff]
    %v3108 = vld [vmem:[#allocation12 + $0x8] sm:$0xff]
    %v3109 = vld [vmem:[#allocation12 + $0x10] sm:$0xff]
    %v3110 = vld [vmem:[#allocation12 + $0x18] sm:$0xff]
    %v3111 = vld [vmem:[#allocation12 + $0x20] sm:$0xff]
    %v3112 = vld [vmem:[#allocation12 + $0x28] sm:$0xff]
    %v3113 = vld [vmem:[#allocation12 + $0x30] sm:$0xff]
    %v3114 = vld [vmem:[#allocation12 + $0x38] sm:$0xff]
    %v3115 = vld [vmem:[#allocation12 + $0x40] sm:$0xff]
    %v3125 = vunpack.c.l.b16 %v3107
    %v3126 = vunpack.c.h.b16 %v3107
    %v3127 = vunpack.c.l.b16 %v3108
    %v3128 = vunpack.c.h.b16 %v3108
    %v3129 = vunpack.c.l.b16 %v3109
    %v3130 = vunpack.c.h.b16 %v3109
    %v3131 = vunpack.c.l.b16 %v3110
    %v3132 = vunpack.c.h.b16 %v3110
    %v3133 = vunpack.c.l.b16 %v3111
    %v3134 = vunpack.c.h.b16 %v3111
    %v3135 = vunpack.c.l.b16 %v3112
    %v3136 = vunpack.c.h.b16 %v3112
    %v3137 = vunpack.c.l.b16 %v3113
    %v3138 = vunpack.c.h.b16 %v3113
    %v3139 = vunpack.c.l.b16 %v3114
    %v3140 = vunpack.c.h.b16 %v3114
    %v3141 = vunpack.c.l.b16 %v3115
    %v3142 = vunpack.c.h.b16 %v3115
    %v3143 = vpack.c.b16 %v3131, %v3125
    %v3144 = vpack.c.b16 %v3132, %v3126
    %v3145 = vpack.c.b16 %v3133, %v3127
    %v3146 = vpack.c.b16 %v3134, %v3128
    %v3147 = vpack.c.b16 %v3135, %v3129
    %v3148 = vpack.c.b16 %v3136, %v3130
    %v3149 = vpack.c.b16 %v3137, %v3137
    %v3150 = vpack.c.b16 %v3138, %v3138
    %v3151 = vpack.c.b16 %v3139, %v3139
    %v3152 = vpack.c.b16 %v3140, %v3140
    %v3153 = vpack.c.b16 %v3141, %v3141
    %v3154 = vpack.c.b16 %v3142, %v3142
    %vm3161 = vcmask 195584
    %v3163 = vsel %vm3161, %v3106, 0
    %vm3165 = vcmask 1043456
    %v3167 = vsel %vm3165, %v3149, 0
    %v3170 = vsel %vm3165, %v3150, 0
    %v3173 = vsel %vm3165, %v3151, 0
    %v3176 = vsel %vm3165, %v3152, 0
    %v3179 = vsel %vm3165, %v3153, 0
    %v3182 = vsel %vm3165, %v3154, 0
    %3184 = vmatpush.bf16.msra.mxu0 0
    %3185 = vmatpush.bf16.msra.mxu0 0
    %3186 = vmatpush.bf16.msra.mxu0 0
    %3187 = vmatpush.bf16.msra.mxu0 0
    %3188 = vmatpush.bf16.msra.mxu0 0
    %3189 = vmatpush.bf16.msra.mxu0 0
    %3190 = vmatpush.bf16.msra.mxu0 %v3167
    %3191 = vmatpush.bf16.msra.mxu0 %v3143
    %3192 = vmatmul.bf16.gmra.mxu0 %v3163
    %v3193 = vpop.f32.mrf.mxu0
    %v3194 = vadd.f32 0.0, %v3193
    %v3195 = vpop.f32.mrf.mxu0
    %3196 = vdwg.mxu0
    %3197 = vmatpush.bf16.msra.mxu0 0
    %3198 = vmatpush.bf16.msra.mxu0 0
    %3199 = vmatpush.bf16.msra.mxu0 0
    %3200 = vmatpush.bf16.msra.mxu0 0
    %3201 = vmatpush.bf16.msra.mxu0 0
    %3202 = vmatpush.bf16.msra.mxu0 0
    %3203 = vmatpush.bf16.msra.mxu0 %v3170
    %3204 = vmatpush.bf16.msra.mxu0 %v3144
    %3205 = vmatmul.bf16.gmra.mxu0 %v3163
    %v3206 = vpop.f32.mrf.mxu0
    %v3207 = vadd.f32 0.0, %v3206
    %v3208 = vpop.f32.mrf.mxu0
    %3209 = vdwg.mxu0
    %3210 = vmatpush.bf16.msra.mxu0 0
    %3211 = vmatpush.bf16.msra.mxu0 0
    %3212 = vmatpush.bf16.msra.mxu0 0
    %3213 = vmatpush.bf16.msra.mxu0 0
    %3214 = vmatpush.bf16.msra.mxu0 0
    %3215 = vmatpush.bf16.msra.mxu0 0
    %3216 = vmatpush.bf16.msra.mxu0 %v3173
    %3217 = vmatpush.bf16.msra.mxu0 %v3145
    %3218 = vmatmul.bf16.gmra.mxu0 %v3163
    %v3219 = vpop.f32.mrf.mxu0
    %v3220 = vadd.f32 0.0, %v3219
    %v3221 = vpop.f32.mrf.mxu0
    %3222 = vdwg.mxu0
    %3223 = vmatpush.bf16.msra.mxu0 0
    %3224 = vmatpush.bf16.msra.mxu0 0
    %3225 = vmatpush.bf16.msra.mxu0 0
    %3226 = vmatpush.bf16.msra.mxu0 0
    %3227 = vmatpush.bf16.msra.mxu0 0
    %3228 = vmatpush.bf16.msra.mxu0 0
    %3229 = vmatpush.bf16.msra.mxu0 %v3176
    %3230 = vmatpush.bf16.msra.mxu0 %v3146
    %3231 = vmatmul.bf16.gmra.mxu0 %v3163
    %v3232 = vpop.f32.mrf.mxu0
    %v3233 = vadd.f32 0.0, %v3232
    %v3234 = vpop.f32.mrf.mxu0
    %3235 = vdwg.mxu0
    %3236 = vmatpush.bf16.msra.mxu0 0
    %3237 = vmatpush.bf16.msra.mxu0 0
    %3238 = vmatpush.bf16.msra.mxu0 0
    %3239 = vmatpush.bf16.msra.mxu0 0
    %3240 = vmatpush.bf16.msra.mxu0 0
    %3241 = vmatpush.bf16.msra.mxu0 0
    %3242 = vmatpush.bf16.msra.mxu0 %v3179
    %3243 = vmatpush.bf16.msra.mxu0 %v3147
    %3244 = vmatmul.bf16.gmra.mxu0 %v3163
    %v3245 = vpop.f32.mrf.mxu0
    %v3246 = vadd.f32 0.0, %v3245
    %v3247 = vpop.f32.mrf.mxu0
    %3248 = vdwg.mxu0
    %3249 = vmatpush.bf16.msra.mxu0 0
    %3250 = vmatpush.bf16.msra.mxu0 0
    %3251 = vmatpush.bf16.msra.mxu0 0
    %3252 = vmatpush.bf16.msra.mxu0 0
    %3253 = vmatpush.bf16.msra.mxu0 0
    %3254 = vmatpush.bf16.msra.mxu0 0
    %3255 = vmatpush.bf16.msra.mxu0 %v3182
    %3256 = vmatpush.bf16.msra.mxu0 %v3148
    %3257 = vmatmul.bf16.gmra.mxu0 %v3163
    %v3258 = vpop.f32.mrf.mxu0
    %v3259 = vadd.f32 0.0, %v3258
    %v3260 = vpop.f32.mrf.mxu0
    %3261 = vdwg.mxu0
    %v3268 = vunpack.c.l.b16 %v3100
    %v3269 = vunpack.c.h.b16 %v3100
    %v3270 = vunpack.c.l.b16 %v3101
    %v3271 = vunpack.c.h.b16 %v3101
    %v3272 = vunpack.c.l.b16 %v3102
    %v3273 = vunpack.c.h.b16 %v3102
    %v3274 = vunpack.c.l.b16 %v3103
    %v3275 = vunpack.c.h.b16 %v3103
    %v3276 = vunpack.c.l.b16 %v3104
    %v3277 = vunpack.c.h.b16 %v3104
    %v3278 = vunpack.c.l.b16 %v3105
    %v3279 = vunpack.c.h.b16 %v3105
    %v3280 = vpack.c.b16 %v3274, %v3268
    %v3281 = vpack.c.b16 %v3275, %v3269
    %v3282 = vpack.c.b16 %v3276, %v3270
    %v3283 = vpack.c.b16 %v3277, %v3271
    %v3284 = vpack.c.b16 %v3278, %v3272
    %v3285 = vpack.c.b16 %v3279, %v3273
    %vm3292 = vcmask 130048
    %v3294 = vsel %vm3292, %v214, 0
    %3296 = vmatpush.bf16.msra.mxu0 0
    %3297 = vmatpush.bf16.msra.mxu0 0
    %3298 = vmatpush.bf16.msra.mxu0 0
    %3299 = vmatpush.bf16.msra.mxu0 0
    %3300 = vmatpush.bf16.msra.mxu0 0
    %3301 = vmatpush.bf16.msra.mxu0 0
    %3302 = vmatpush.bf16.msra.mxu0 0
    %3303 = vmatpush.bf16.msra.mxu0 %v3280
    %3304 = vmatmul.bf16.gmra.mxu0 %v3294
    %v3305 = vpop.f32.mrf.mxu0
    %v3306 = vadd.f32 %v3194, %v3305
    %v3307 = vpop.f32.mrf.mxu0
    %3308 = vdwg.mxu0
    %3309 = vmatpush.bf16.msra.mxu0 0
    %3310 = vmatpush.bf16.msra.mxu0 0
    %3311 = vmatpush.bf16.msra.mxu0 0
    %3312 = vmatpush.bf16.msra.mxu0 0
    %3313 = vmatpush.bf16.msra.mxu0 0
    %3314 = vmatpush.bf16.msra.mxu0 0
    %3315 = vmatpush.bf16.msra.mxu0 0
    %3316 = vmatpush.bf16.msra.mxu0 %v3281
    %3317 = vmatmul.bf16.gmra.mxu0 %v3294
    %v3318 = vpop.f32.mrf.mxu0
    %v3319 = vadd.f32 %v3207, %v3318
    %v3320 = vpop.f32.mrf.mxu0
    %3321 = vdwg.mxu0
    %3322 = vmatpush.bf16.msra.mxu0 0
    %3323 = vmatpush.bf16.msra.mxu0 0
    %3324 = vmatpush.bf16.msra.mxu0 0
    %3325 = vmatpush.bf16.msra.mxu0 0
    %3326 = vmatpush.bf16.msra.mxu0 0
    %3327 = vmatpush.bf16.msra.mxu0 0
    %3328 = vmatpush.bf16.msra.mxu0 0
    %3329 = vmatpush.bf16.msra.mxu0 %v3282
    %3330 = vmatmul.bf16.gmra.mxu0 %v3294
    %v3331 = vpop.f32.mrf.mxu0
    %v3332 = vadd.f32 %v3220, %v3331
    %v3333 = vpop.f32.mrf.mxu0
    %3334 = vdwg.mxu0
    %3335 = vmatpush.bf16.msra.mxu0 0
    %3336 = vmatpush.bf16.msra.mxu0 0
    %3337 = vmatpush.bf16.msra.mxu0 0
    %3338 = vmatpush.bf16.msra.mxu0 0
    %3339 = vmatpush.bf16.msra.mxu0 0
    %3340 = vmatpush.bf16.msra.mxu0 0
    %3341 = vmatpush.bf16.msra.mxu0 0
    %3342 = vmatpush.bf16.msra.mxu0 %v3283
    %3343 = vmatmul.bf16.gmra.mxu0 %v3294
    %v3344 = vpop.f32.mrf.mxu0
    %v3345 = vadd.f32 %v3233, %v3344
    %v3346 = vpop.f32.mrf.mxu0
    %3347 = vdwg.mxu0
    %3348 = vmatpush.bf16.msra.mxu0 0
    %3349 = vmatpush.bf16.msra.mxu0 0
    %3350 = vmatpush.bf16.msra.mxu0 0
    %3351 = vmatpush.bf16.msra.mxu0 0
    %3352 = vmatpush.bf16.msra.mxu0 0
    %3353 = vmatpush.bf16.msra.mxu0 0
    %3354 = vmatpush.bf16.msra.mxu0 0
    %3355 = vmatpush.bf16.msra.mxu0 %v3284
    %3356 = vmatmul.bf16.gmra.mxu0 %v3294
    %v3357 = vpop.f32.mrf.mxu0
    %v3358 = vadd.f32 %v3246, %v3357
    %v3359 = vpop.f32.mrf.mxu0
    %3360 = vdwg.mxu0
    %3361 = vmatpush.bf16.msra.mxu0 0
    %3362 = vmatpush.bf16.msra.mxu0 0
    %3363 = vmatpush.bf16.msra.mxu0 0
    %3364 = vmatpush.bf16.msra.mxu0 0
    %3365 = vmatpush.bf16.msra.mxu0 0
    %3366 = vmatpush.bf16.msra.mxu0 0
    %3367 = vmatpush.bf16.msra.mxu0 0
    %3368 = vmatpush.bf16.msra.mxu0 %v3285
    %3369 = vmatmul.bf16.gmra.mxu0 %v3294
    %v3370 = vpop.f32.mrf.mxu0
    %v3371 = vadd.f32 %v3259, %v3370
    %v3372 = vpop.f32.mrf.mxu0
    %3373 = vdwg.mxu0
    %v3374 = vld [vmem:[#allocation13] sm:$0x3f]
    %v3376 = vperm.slane %v3374, 0
    %v3377 = vperm.slane %v3374, 1
    %v3378 = vperm.slane %v3374, 2
    %v3379 = vperm.slane %v3374, 3
    %v3380 = vperm.slane %v3374, 4
    %v3381 = vperm.slane %v3374, 5
    %v3388 = vadd.f32 %v3306, %v3376
    %v3389 = vadd.f32 %v3319, %v3377
    %v3390 = vadd.f32 %v3332, %v3378
    %v3391 = vadd.f32 %v3345, %v3379
    %v3392 = vadd.f32 %v3358, %v3380
    %v3393 = vadd.f32 %v3371, %v3381
    %v3394 = vmax.f32 %v3388, 0.0
    %v3395 = vmax.f32 %v3389, 0.0
    %v3396 = vmax.f32 %v3390, 0.0
    %v3397 = vmax.f32 %v3391, 0.0
    %v3398 = vmax.f32 %v3392, 0.0
    %v3399 = vmax.f32 %v3393, 0.0
    %v3400 = vpack.c.bf16 %v3394, %v3394
    %v3401 = vpack.c.bf16 %v3395, %v3395
    %v3402 = vpack.c.bf16 %v3396, %v3396
    %v3403 = vpack.c.bf16 %v3397, %v3397
    %v3404 = vpack.c.bf16 %v3398, %v3398
    %v3405 = vpack.c.bf16 %v3399, %v3399
    %v3406 = vld [vmem:[#allocation15] sm:$0xff]
    %v3407 = vld [vmem:[#allocation15 + $0x8] sm:$0xff]
    %v3408 = vld [vmem:[#allocation15 + $0x10] sm:$0xff]
    %v3409 = vld [vmem:[#allocation15 + $0x18] sm:$0xff]
    %v3410 = vld [vmem:[#allocation15 + $0x20] sm:$0xff]
    %v3411 = vld [vmem:[#allocation15 + $0x28] sm:$0xff]
    %v3412 = vld [vmem:[#allocation15 + $0x30] sm:$0xff]
    %v3413 = vld [vmem:[#allocation15 + $0x38] sm:$0xff]
    %v3414 = vld [vmem:[#allocation15 + $0x40] sm:$0xff]
    %v3415 = vld [vmem:[#allocation15 + $0x48] sm:$0xff]
    %v3416 = vld [vmem:[#allocation15 + $0x50] sm:$0xff]
    %v3417 = vld [vmem:[#allocation15 + $0x58] sm:$0xff]
    %v3418 = vld [vmem:[#allocation15 + $0x60] sm:$0xff]
    %v3419 = vld [vmem:[#allocation15 + $0x68] sm:$0xff]
    %v3420 = vld [vmem:[#allocation15 + $0x70] sm:$0xff]
    %v3421 = vld [vmem:[#allocation15 + $0x78] sm:$0xff]
    %v3422 = vld [vmem:[#allocation15 + $0x80] sm:$0xff]
    %v3423 = vld [vmem:[#allocation15 + $0x88] sm:$0xff]
    %v3424 = vld [vmem:[#allocation15 + $0x90] sm:$0xff]
    %v3425 = vld [vmem:[#allocation15 + $0x98] sm:$0xff]
    %v3426 = vld [vmem:[#allocation15 + $0xa0] sm:$0xff]
    %v3427 = vld [vmem:[#allocation15 + $0xa8] sm:$0xff]
    %v3428 = vld [vmem:[#allocation15 + $0xb0] sm:$0xff]
    %v3429 = vld [vmem:[#allocation15 + $0xb8] sm:$0xff]
    %v3430 = vld [vmem:[#allocation15 + $0xc0] sm:$0xff]
    %v3431 = vld [vmem:[#allocation15 + $0xc8] sm:$0xff]
    %v3432 = vld [vmem:[#allocation15 + $0xd0] sm:$0xff]
    %v3433 = vld [vmem:[#allocation15 + $0xd8] sm:$0xff]
    %v3434 = vld [vmem:[#allocation15 + $0xe0] sm:$0xff]
    %v3435 = vld [vmem:[#allocation15 + $0xe8] sm:$0xff]
    %v3436 = vld [vmem:[#allocation15 + $0xf0] sm:$0xff]
    %v3437 = vld [vmem:[#allocation15 + $0xf8] sm:$0xff]
    %v3438 = vld [vmem:[#allocation15 + $0x100] sm:$0xff]
    %v3439 = vld [vmem:[#allocation15 + $0x108] sm:$0xff]
    %v3440 = vld [vmem:[#allocation15 + $0x110] sm:$0xff]
    %v3441 = vld [vmem:[#allocation15 + $0x118] sm:$0xff]
    %v3442 = vld [vmem:[#allocation15 + $0x120] sm:$0xff]
    %v3443 = vld [vmem:[#allocation15 + $0x128] sm:$0xff]
    %v3444 = vld [vmem:[#allocation15 + $0x130] sm:$0xff]
    %v3445 = vld [vmem:[#allocation15 + $0x138] sm:$0xff]
    %v3446 = vld [vmem:[#allocation15 + $0x140] sm:$0xff]
    %v3447 = vld [vmem:[#allocation15 + $0x148] sm:$0xff]
    %v3448 = vld [vmem:[#allocation15 + $0x150] sm:$0xff]
    %v3449 = vld [vmem:[#allocation15 + $0x158] sm:$0xff]
    %v3450 = vld [vmem:[#allocation15 + $0x160] sm:$0xff]
    %v3451 = vld [vmem:[#allocation15 + $0x168] sm:$0xff]
    %v3452 = vld [vmem:[#allocation15 + $0x170] sm:$0xff]
    %v3453 = vld [vmem:[#allocation15 + $0x178] sm:$0xff]
    %v3454 = vld [vmem:[#allocation15 + $0x180] sm:$0xff]
    %v3455 = vld [vmem:[#allocation15 + $0x188] sm:$0xff]
    %v3456 = vld [vmem:[#allocation15 + $0x190] sm:$0xff]
    %v3457 = vld [vmem:[#allocation15 + $0x198] sm:$0xff]
    %v3458 = vld [vmem:[#allocation15 + $0x1a0] sm:$0xff]
    %v3459 = vld [vmem:[#allocation15 + $0x1a8] sm:$0xff]
    %v3460 = vld [vmem:[#allocation15 + $0x1b0] sm:$0xff]
    %v3461 = vld [vmem:[#allocation15 + $0x1b8] sm:$0xff]
    %v3462 = vld [vmem:[#allocation15 + $0x1c0] sm:$0xff]
    %v3463 = vld [vmem:[#allocation15 + $0x1c8] sm:$0xff]
    %v3464 = vld [vmem:[#allocation15 + $0x1d0] sm:$0xff]
    %v3465 = vld [vmem:[#allocation15 + $0x1d8] sm:$0xff]
    %v3466 = vld [vmem:[#allocation15 + $0x1e0] sm:$0xff]
    %v3467 = vld [vmem:[#allocation15 + $0x1e8] sm:$0xff]
    %v3468 = vld [vmem:[#allocation15 + $0x1f0] sm:$0xff]
    %v3469 = vld [vmem:[#allocation15 + $0x1f8] sm:$0xff]
    %v3470 = vld [vmem:[#allocation15 + $0x200] sm:$0xff]
    %v3471 = vld [vmem:[#allocation15 + $0x208] sm:$0xff]
    %v3472 = vld [vmem:[#allocation15 + $0x210] sm:$0xff]
    %v3473 = vld [vmem:[#allocation15 + $0x218] sm:$0xff]
    %v3474 = vld [vmem:[#allocation15 + $0x220] sm:$0xff]
    %v3475 = vld [vmem:[#allocation15 + $0x228] sm:$0xff]
    %v3476 = vld [vmem:[#allocation15 + $0x230] sm:$0xff]
    %v3477 = vld [vmem:[#allocation15 + $0x238] sm:$0xff]
    %v3478 = vld [vmem:[#allocation15 + $0x240] sm:$0xff]
    %v3479 = vld [vmem:[#allocation15 + $0x248] sm:$0xff]
    %v3480 = vld [vmem:[#allocation15 + $0x250] sm:$0xff]
    %v3481 = vld [vmem:[#allocation15 + $0x258] sm:$0xff]
    %v3482 = vld [vmem:[#allocation15 + $0x260] sm:$0xff]
    %v3483 = vld [vmem:[#allocation15 + $0x268] sm:$0xff]
    %v3484 = vld [vmem:[#allocation15 + $0x270] sm:$0xff]
    %v3485 = vld [vmem:[#allocation15 + $0x278] sm:$0xff]
    %v3486 = vld [vmem:[#allocation15 + $0x280] sm:$0xff]
    %v3487 = vld [vmem:[#allocation15 + $0x288] sm:$0xff]
    %v3488 = vld [vmem:[#allocation15 + $0x290] sm:$0xff]
    %v3489 = vld [vmem:[#allocation15 + $0x298] sm:$0xff]
    %v3490 = vld [vmem:[#allocation15 + $0x2a0] sm:$0xff]
    %v3491 = vld [vmem:[#allocation15 + $0x2a8] sm:$0xff]
    %v3492 = vld [vmem:[#allocation15 + $0x2b0] sm:$0xff]
    %v3493 = vld [vmem:[#allocation15 + $0x2b8] sm:$0xff]
    %v3494 = vld [vmem:[#allocation15 + $0x2c0] sm:$0xff]
    %v3495 = vld [vmem:[#allocation15 + $0x2c8] sm:$0xff]
    %v3496 = vld [vmem:[#allocation15 + $0x2d0] sm:$0xff]
    %v3497 = vld [vmem:[#allocation15 + $0x2d8] sm:$0xff]
    %v3498 = vld [vmem:[#allocation15 + $0x2e0] sm:$0xff]
    %v3499 = vld [vmem:[#allocation15 + $0x2e8] sm:$0xff]
    %v3500 = vld [vmem:[#allocation15 + $0x2f0] sm:$0xff]
    %v3501 = vld [vmem:[#allocation15 + $0x2f8] sm:$0xff]
    %v3502 = vld [vmem:[#allocation15 + $0x300] sm:$0xff]
    %v3503 = vld [vmem:[#allocation15 + $0x308] sm:$0xff]
    %v3504 = vld [vmem:[#allocation15 + $0x310] sm:$0xff]
    %v3505 = vld [vmem:[#allocation15 + $0x318] sm:$0xff]
    %v3506 = vld [vmem:[#allocation15 + $0x320] sm:$0xff]
    %v3507 = vld [vmem:[#allocation15 + $0x328] sm:$0xff]
    %v3508 = vld [vmem:[#allocation15 + $0x330] sm:$0xff]
    %v3509 = vld [vmem:[#allocation15 + $0x338] sm:$0xff]
    %v3510 = vld [vmem:[#allocation15 + $0x340] sm:$0xff]
    %v3511 = vld [vmem:[#allocation15 + $0x348] sm:$0xff]
    %v3512 = vld [vmem:[#allocation15 + $0x350] sm:$0xff]
    %v3513 = vld [vmem:[#allocation15 + $0x358] sm:$0xff]
    %v3514 = vld [vmem:[#allocation15 + $0x360] sm:$0xff]
    %v3515 = vld [vmem:[#allocation15 + $0x368] sm:$0xff]
    %v3516 = vld [vmem:[#allocation15 + $0x370] sm:$0xff]
    %v3517 = vld [vmem:[#allocation15 + $0x378] sm:$0xff]
    %v3518 = vld [vmem:[#allocation15 + $0x380] sm:$0xff]
    %v3519 = vld [vmem:[#allocation15 + $0x388] sm:$0xff]
    %v3520 = vld [vmem:[#allocation15 + $0x390] sm:$0xff]
    %v3521 = vld [vmem:[#allocation15 + $0x398] sm:$0xff]
    %v3522 = vld [vmem:[#allocation15 + $0x3a0] sm:$0xff]
    %v3523 = vld [vmem:[#allocation15 + $0x3a8] sm:$0xff]
    %v3524 = vld [vmem:[#allocation15 + $0x3b0] sm:$0xff]
    %v3525 = vld [vmem:[#allocation15 + $0x3b8] sm:$0xff]
    %v3526 = vld [vmem:[#allocation15 + $0x3c0] sm:$0xff]
    %v3527 = vld [vmem:[#allocation15 + $0x3c8] sm:$0xff]
    %v3528 = vld [vmem:[#allocation15 + $0x3d0] sm:$0xff]
    %v3529 = vld [vmem:[#allocation15 + $0x3d8] sm:$0xff]
    %v3530 = vld [vmem:[#allocation15 + $0x3e0] sm:$0xff]
    %v3531 = vld [vmem:[#allocation15 + $0x3e8] sm:$0xff]
    %v3532 = vld [vmem:[#allocation15 + $0x3f0] sm:$0xff]
    %v3533 = vld [vmem:[#allocation15 + $0x3f8] sm:$0xff]
    %v3534 = vld [vmem:[#allocation15 + $0x400] sm:$0xff]
    %v3535 = vld [vmem:[#allocation15 + $0x408] sm:$0xff]
    %v3536 = vld [vmem:[#allocation15 + $0x410] sm:$0xff]
    %v3537 = vld [vmem:[#allocation15 + $0x418] sm:$0xff]
    %v3538 = vld [vmem:[#allocation15 + $0x420] sm:$0xff]
    %v3539 = vld [vmem:[#allocation15 + $0x428] sm:$0xff]
    %v3540 = vld [vmem:[#allocation15 + $0x430] sm:$0xff]
    %v3541 = vld [vmem:[#allocation15 + $0x438] sm:$0xff]
    %v3542 = vld [vmem:[#allocation15 + $0x440] sm:$0xff]
    %v3543 = vld [vmem:[#allocation15 + $0x448] sm:$0xff]
    %v3544 = vld [vmem:[#allocation15 + $0x450] sm:$0xff]
    %v3545 = vld [vmem:[#allocation15 + $0x458] sm:$0xff]
    %v3546 = vld [vmem:[#allocation15 + $0x460] sm:$0xff]
    %v3547 = vld [vmem:[#allocation15 + $0x468] sm:$0xff]
    %v3548 = vld [vmem:[#allocation15 + $0x470] sm:$0xff]
    %v3549 = vld [vmem:[#allocation15 + $0x478] sm:$0xff]
    %v3550 = vld [vmem:[#allocation15 + $0x480] sm:$0xff]
    %v3551 = vld [vmem:[#allocation15 + $0x488] sm:$0xff]
    %v3552 = vld [vmem:[#allocation15 + $0x490] sm:$0xff]
    %v3553 = vld [vmem:[#allocation15 + $0x498] sm:$0xff]
    %v3554 = vld [vmem:[#allocation15 + $0x4a0] sm:$0xff]
    %v3555 = vld [vmem:[#allocation15 + $0x4a8] sm:$0xff]
    %v3556 = vld [vmem:[#allocation15 + $0x4b0] sm:$0xff]
    %v3557 = vld [vmem:[#allocation15 + $0x4b8] sm:$0xff]
    %v3558 = vld [vmem:[#allocation15 + $0x4c0] sm:$0xff]
    %v3559 = vld [vmem:[#allocation15 + $0x4c8] sm:$0xff]
    %v3560 = vld [vmem:[#allocation15 + $0x4d0] sm:$0xff]
    %v3561 = vld [vmem:[#allocation15 + $0x4d8] sm:$0xff]
    %v3562 = vld [vmem:[#allocation15 + $0x4e0] sm:$0xff]
    %v3563 = vld [vmem:[#allocation15 + $0x4e8] sm:$0xff]
    %v3564 = vld [vmem:[#allocation15 + $0x4f0] sm:$0xff]
    %v3565 = vld [vmem:[#allocation15 + $0x4f8] sm:$0xff]
    %v3566 = vld [vmem:[#allocation15 + $0x500] sm:$0xff]
    %v3567 = vld [vmem:[#allocation15 + $0x508] sm:$0xff]
    %v3568 = vld [vmem:[#allocation15 + $0x510] sm:$0xff]
    %v3569 = vld [vmem:[#allocation15 + $0x518] sm:$0xff]
    %v3570 = vld [vmem:[#allocation15 + $0x520] sm:$0xff]
    %v3571 = vld [vmem:[#allocation15 + $0x528] sm:$0xff]
    %v3572 = vld [vmem:[#allocation15 + $0x530] sm:$0xff]
    %v3573 = vld [vmem:[#allocation15 + $0x538] sm:$0xff]
    %v3574 = vld [vmem:[#allocation15 + $0x540] sm:$0xff]
    %v3575 = vld [vmem:[#allocation15 + $0x548] sm:$0xff]
    %v3576 = vld [vmem:[#allocation15 + $0x550] sm:$0xff]
    %v3577 = vld [vmem:[#allocation15 + $0x558] sm:$0xff]
    %v3578 = vld [vmem:[#allocation15 + $0x560] sm:$0xff]
    %v3579 = vld [vmem:[#allocation15 + $0x568] sm:$0xff]
    %v3580 = vld [vmem:[#allocation15 + $0x570] sm:$0xff]
    %v3581 = vld [vmem:[#allocation15 + $0x578] sm:$0xff]
    %v3582 = vld [vmem:[#allocation15 + $0x580] sm:$0xff]
    %v3583 = vld [vmem:[#allocation15 + $0x588] sm:$0xff]
    %v3584 = vld [vmem:[#allocation15 + $0x590] sm:$0xff]
    %v3585 = vld [vmem:[#allocation15 + $0x598] sm:$0xff]
    %v3586 = vld [vmem:[#allocation15 + $0x5a0] sm:$0xff]
    %v3587 = vld [vmem:[#allocation15 + $0x5a8] sm:$0xff]
    %v3588 = vld [vmem:[#allocation15 + $0x5b0] sm:$0xff]
    %v3589 = vld [vmem:[#allocation15 + $0x5b8] sm:$0xff]
    %v3590 = vld [vmem:[#allocation15 + $0x5c0] sm:$0xff]
    %v3591 = vld [vmem:[#allocation15 + $0x5c8] sm:$0xff]
    %v3592 = vld [vmem:[#allocation15 + $0x5d0] sm:$0xff]
    %v3593 = vld [vmem:[#allocation15 + $0x5d8] sm:$0xff]
    %v3594 = vld [vmem:[#allocation15 + $0x5e0] sm:$0xff]
    %v3595 = vld [vmem:[#allocation15 + $0x5e8] sm:$0xff]
    %v3596 = vld [vmem:[#allocation15 + $0x5f0] sm:$0xff]
    %v3597 = vld [vmem:[#allocation15 + $0x5f8] sm:$0xff]
    %v3598 = vld [vmem:[#allocation15 + $0x600] sm:$0xff]
    %v3599 = vld [vmem:[#allocation15 + $0x608] sm:$0xff]
    %v3600 = vld [vmem:[#allocation15 + $0x610] sm:$0xff]
    %v3601 = vld [vmem:[#allocation15 + $0x618] sm:$0xff]
    %v3602 = vld [vmem:[#allocation15 + $0x620] sm:$0xff]
    %v3603 = vld [vmem:[#allocation15 + $0x628] sm:$0xff]
    %v3604 = vld [vmem:[#allocation15 + $0x630] sm:$0xff]
    %v3605 = vld [vmem:[#allocation15 + $0x638] sm:$0xff]
    %v3606 = vld [vmem:[#allocation15 + $0x640] sm:$0xff]
    %v3607 = vld [vmem:[#allocation15 + $0x648] sm:$0xff]
    %v3608 = vld [vmem:[#allocation15 + $0x650] sm:$0xff]
    %v3609 = vld [vmem:[#allocation15 + $0x658] sm:$0xff]
    %v3610 = vld [vmem:[#allocation15 + $0x660] sm:$0xff]
    %v3611 = vld [vmem:[#allocation15 + $0x668] sm:$0xff]
    %v3612 = vld [vmem:[#allocation15 + $0x670] sm:$0xff]
    %v3613 = vld [vmem:[#allocation15 + $0x678] sm:$0xff]
    %v3614 = vld [vmem:[#allocation15 + $0x680] sm:$0xff]
    %v3615 = vld [vmem:[#allocation15 + $0x688] sm:$0xff]
    %v3616 = vld [vmem:[#allocation15 + $0x690] sm:$0xff]
    %v3617 = vld [vmem:[#allocation15 + $0x698] sm:$0xff]
    %v3618 = vld [vmem:[#allocation15 + $0x6a0] sm:$0xff]
    %v3619 = vld [vmem:[#allocation15 + $0x6a8] sm:$0xff]
    %v3620 = vld [vmem:[#allocation15 + $0x6b0] sm:$0xff]
    %v3621 = vld [vmem:[#allocation15 + $0x6b8] sm:$0xff]
    %v3622 = vld [vmem:[#allocation15 + $0x6c0] sm:$0xff]
    %v3623 = vld [vmem:[#allocation15 + $0x6c8] sm:$0xff]
    %v3624 = vld [vmem:[#allocation15 + $0x6d0] sm:$0xff]
    %v3625 = vld [vmem:[#allocation15 + $0x6d8] sm:$0xff]
    %v3626 = vld [vmem:[#allocation15 + $0x6e0] sm:$0xff]
    %v3627 = vld [vmem:[#allocation15 + $0x6e8] sm:$0xff]
    %v3628 = vld [vmem:[#allocation15 + $0x6f0] sm:$0xff]
    %v3629 = vld [vmem:[#allocation15 + $0x6f8] sm:$0xff]
    %v3630 = vld [vmem:[#allocation15 + $0x700] sm:$0xff]
    %v3631 = vld [vmem:[#allocation15 + $0x708] sm:$0xff]
    %v3632 = vld [vmem:[#allocation15 + $0x710] sm:$0xff]
    %v3633 = vld [vmem:[#allocation15 + $0x718] sm:$0xff]
    %v3634 = vld [vmem:[#allocation15 + $0x720] sm:$0xff]
    %v3635 = vld [vmem:[#allocation15 + $0x728] sm:$0xff]
    %v3636 = vld [vmem:[#allocation15 + $0x730] sm:$0xff]
    %v3637 = vld [vmem:[#allocation15 + $0x738] sm:$0xff]
    %v3638 = vld [vmem:[#allocation15 + $0x740] sm:$0xff]
    %v3639 = vld [vmem:[#allocation15 + $0x748] sm:$0xff]
    %v3640 = vld [vmem:[#allocation15 + $0x750] sm:$0xff]
    %v3641 = vld [vmem:[#allocation15 + $0x758] sm:$0xff]
    %v3642 = vld [vmem:[#allocation15 + $0x760] sm:$0xff]
    %v3643 = vld [vmem:[#allocation15 + $0x768] sm:$0xff]
    %v3644 = vld [vmem:[#allocation15 + $0x770] sm:$0xff]
    %v3645 = vld [vmem:[#allocation15 + $0x778] sm:$0xff]
    %v3646 = vld [vmem:[#allocation15 + $0x780] sm:$0xff]
    %v3647 = vld [vmem:[#allocation15 + $0x788] sm:$0xff]
    %v3648 = vld [vmem:[#allocation15 + $0x790] sm:$0xff]
    %v3649 = vld [vmem:[#allocation15 + $0x798] sm:$0xff]
    %v3650 = vld [vmem:[#allocation15 + $0x7a0] sm:$0xff]
    %v3651 = vld [vmem:[#allocation15 + $0x7a8] sm:$0xff]
    %v3652 = vld [vmem:[#allocation15 + $0x7b0] sm:$0xff]
    %v3653 = vld [vmem:[#allocation15 + $0x7b8] sm:$0xff]
    %v3654 = vld [vmem:[#allocation15 + $0x7c0] sm:$0xff]
    %v3655 = vld [vmem:[#allocation15 + $0x7c8] sm:$0xff]
    %v3656 = vld [vmem:[#allocation15 + $0x7d0] sm:$0xff]
    %v3657 = vld [vmem:[#allocation15 + $0x7d8] sm:$0xff]
    %v3658 = vld [vmem:[#allocation15 + $0x7e0] sm:$0xff]
    %v3659 = vld [vmem:[#allocation15 + $0x7e8] sm:$0xff]
    %v3660 = vld [vmem:[#allocation15 + $0x7f0] sm:$0xff]
    %v3661 = vld [vmem:[#allocation15 + $0x7f8] sm:$0xff]
    %v3662 = vld [vmem:[#allocation15 + $0x800] sm:$0xff]
    %v3663 = vld [vmem:[#allocation15 + $0x808] sm:$0xff]
    %v3664 = vld [vmem:[#allocation15 + $0x810] sm:$0xff]
    %v3665 = vld [vmem:[#allocation15 + $0x818] sm:$0xff]
    %v3666 = vld [vmem:[#allocation15 + $0x820] sm:$0xff]
    %v3667 = vld [vmem:[#allocation15 + $0x828] sm:$0xff]
    %v3668 = vld [vmem:[#allocation15 + $0x830] sm:$0xff]
    %v3669 = vld [vmem:[#allocation15 + $0x838] sm:$0xff]
    %v3670 = vld [vmem:[#allocation15 + $0x840] sm:$0xff]
    %v3671 = vld [vmem:[#allocation15 + $0x848] sm:$0xff]
    %v3672 = vld [vmem:[#allocation15 + $0x850] sm:$0xff]
    %v3673 = vld [vmem:[#allocation15 + $0x858] sm:$0xff]
    %v3674 = vld [vmem:[#allocation15 + $0x860] sm:$0xff]
    %v3675 = vld [vmem:[#allocation15 + $0x868] sm:$0xff]
    %v3676 = vld [vmem:[#allocation15 + $0x870] sm:$0xff]
    %v3677 = vld [vmem:[#allocation15 + $0x878] sm:$0xff]
    %v3678 = vld [vmem:[#allocation15 + $0x880] sm:$0xff]
    %v3679 = vld [vmem:[#allocation15 + $0x888] sm:$0xff]
    %v3680 = vld [vmem:[#allocation15 + $0x890] sm:$0xff]
    %v3681 = vld [vmem:[#allocation15 + $0x898] sm:$0xff]
    %v3682 = vld [vmem:[#allocation15 + $0x8a0] sm:$0xff]
    %v3683 = vld [vmem:[#allocation15 + $0x8a8] sm:$0xff]
    %v3684 = vld [vmem:[#allocation15 + $0x8b0] sm:$0xff]
    %v3685 = vld [vmem:[#allocation15 + $0x8b8] sm:$0xff]
    %v3686 = vld [vmem:[#allocation15 + $0x8c0] sm:$0xff]
    %v3687 = vld [vmem:[#allocation15 + $0x8c8] sm:$0xff]
    %v3688 = vld [vmem:[#allocation15 + $0x8d0] sm:$0xff]
    %v3689 = vld [vmem:[#allocation15 + $0x8d8] sm:$0xff]
    %v3690 = vld [vmem:[#allocation15 + $0x8e0] sm:$0xff]
    %v3691 = vld [vmem:[#allocation15 + $0x8e8] sm:$0xff]
    %v3692 = vld [vmem:[#allocation15 + $0x8f0] sm:$0xff]
    %v3693 = vld [vmem:[#allocation15 + $0x8f8] sm:$0xff]
    %v3694 = vld [vmem:[#allocation16] sm:$0x3f]
    %v3696 = vperm.slane %v3694, 0
    %v3697 = vperm.slane %v3694, 1
    %v3698 = vperm.slane %v3694, 2
    %v3699 = vperm.slane %v3694, 3
    %v3700 = vperm.slane %v3694, 4
    %v3701 = vperm.slane %v3694, 5
    %v3996 = vunpack.c.l.b16 %v3406
    %v3997 = vunpack.c.h.b16 %v3406
    %v3998 = vunpack.c.l.b16 %v3407
    %v3999 = vunpack.c.h.b16 %v3407
    %v4000 = vunpack.c.l.b16 %v3408
    %v4001 = vunpack.c.h.b16 %v3408
    %v4002 = vunpack.c.l.b16 %v3409
    %v4003 = vunpack.c.h.b16 %v3409
    %v4004 = vunpack.c.l.b16 %v3410
    %v4005 = vunpack.c.h.b16 %v3410
    %v4006 = vunpack.c.l.b16 %v3411
    %v4007 = vunpack.c.h.b16 %v3411
    %v4008 = vunpack.c.l.b16 %v3412
    %v4009 = vunpack.c.h.b16 %v3412
    %v4010 = vunpack.c.l.b16 %v3413
    %v4011 = vunpack.c.h.b16 %v3413
    %v4012 = vunpack.c.l.b16 %v3414
    %v4013 = vunpack.c.h.b16 %v3414
    %v4014 = vunpack.c.l.b16 %v3415
    %v4015 = vunpack.c.h.b16 %v3415
    %v4016 = vunpack.c.l.b16 %v3416
    %v4017 = vunpack.c.h.b16 %v3416
    %v4018 = vunpack.c.l.b16 %v3417
    %v4019 = vunpack.c.h.b16 %v3417
    %v4020 = vunpack.c.l.b16 %v3418
    %v4021 = vunpack.c.h.b16 %v3418
    %v4022 = vunpack.c.l.b16 %v3419
    %v4023 = vunpack.c.h.b16 %v3419
    %v4024 = vunpack.c.l.b16 %v3420
    %v4025 = vunpack.c.h.b16 %v3420
    %v4026 = vunpack.c.l.b16 %v3421
    %v4027 = vunpack.c.h.b16 %v3421
    %v4028 = vunpack.c.l.b16 %v3422
    %v4029 = vunpack.c.h.b16 %v3422
    %v4030 = vunpack.c.l.b16 %v3423
    %v4031 = vunpack.c.h.b16 %v3423
    %v4032 = vunpack.c.l.b16 %v3424
    %v4033 = vunpack.c.h.b16 %v3424
    %v4034 = vunpack.c.l.b16 %v3425
    %v4035 = vunpack.c.h.b16 %v3425
    %v4036 = vunpack.c.l.b16 %v3426
    %v4037 = vunpack.c.h.b16 %v3426
    %v4038 = vunpack.c.l.b16 %v3427
    %v4039 = vunpack.c.h.b16 %v3427
    %v4040 = vunpack.c.l.b16 %v3428
    %v4041 = vunpack.c.h.b16 %v3428
    %v4042 = vunpack.c.l.b16 %v3429
    %v4043 = vunpack.c.h.b16 %v3429
    %v4044 = vunpack.c.l.b16 %v3430
    %v4045 = vunpack.c.h.b16 %v3430
    %v4046 = vunpack.c.l.b16 %v3431
    %v4047 = vunpack.c.h.b16 %v3431
    %v4048 = vunpack.c.l.b16 %v3432
    %v4049 = vunpack.c.h.b16 %v3432
    %v4050 = vunpack.c.l.b16 %v3433
    %v4051 = vunpack.c.h.b16 %v3433
    %v4052 = vunpack.c.l.b16 %v3434
    %v4053 = vunpack.c.h.b16 %v3434
    %v4054 = vunpack.c.l.b16 %v3435
    %v4055 = vunpack.c.h.b16 %v3435
    %v4056 = vunpack.c.l.b16 %v3436
    %v4057 = vunpack.c.h.b16 %v3436
    %v4058 = vunpack.c.l.b16 %v3437
    %v4059 = vunpack.c.h.b16 %v3437
    %v4060 = vunpack.c.l.b16 %v3438
    %v4061 = vunpack.c.h.b16 %v3438
    %v4062 = vunpack.c.l.b16 %v3439
    %v4063 = vunpack.c.h.b16 %v3439
    %v4064 = vunpack.c.l.b16 %v3440
    %v4065 = vunpack.c.h.b16 %v3440
    %v4066 = vunpack.c.l.b16 %v3441
    %v4067 = vunpack.c.h.b16 %v3441
    %v4068 = vunpack.c.l.b16 %v3442
    %v4069 = vunpack.c.h.b16 %v3442
    %v4070 = vunpack.c.l.b16 %v3443
    %v4071 = vunpack.c.h.b16 %v3443
    %v4072 = vunpack.c.l.b16 %v3444
    %v4073 = vunpack.c.h.b16 %v3444
    %v4074 = vunpack.c.l.b16 %v3445
    %v4075 = vunpack.c.h.b16 %v3445
    %v4076 = vunpack.c.l.b16 %v3446
    %v4077 = vunpack.c.h.b16 %v3446
    %v4078 = vunpack.c.l.b16 %v3447
    %v4079 = vunpack.c.h.b16 %v3447
    %v4080 = vunpack.c.l.b16 %v3448
    %v4081 = vunpack.c.h.b16 %v3448
    %v4082 = vunpack.c.l.b16 %v3449
    %v4083 = vunpack.c.h.b16 %v3449
    %v4084 = vunpack.c.l.b16 %v3450
    %v4085 = vunpack.c.h.b16 %v3450
    %v4086 = vunpack.c.l.b16 %v3451
    %v4087 = vunpack.c.h.b16 %v3451
    %v4088 = vunpack.c.l.b16 %v3452
    %v4089 = vunpack.c.h.b16 %v3452
    %v4090 = vunpack.c.l.b16 %v3453
    %v4091 = vunpack.c.h.b16 %v3453
    %v4092 = vunpack.c.l.b16 %v3454
    %v4093 = vunpack.c.h.b16 %v3454
    %v4094 = vunpack.c.l.b16 %v3455
    %v4095 = vunpack.c.h.b16 %v3455
    %v4096 = vunpack.c.l.b16 %v3456
    %v4097 = vunpack.c.h.b16 %v3456
    %v4098 = vunpack.c.l.b16 %v3457
    %v4099 = vunpack.c.h.b16 %v3457
    %v4100 = vunpack.c.l.b16 %v3458
    %v4101 = vunpack.c.h.b16 %v3458
    %v4102 = vunpack.c.l.b16 %v3459
    %v4103 = vunpack.c.h.b16 %v3459
    %v4104 = vunpack.c.l.b16 %v3460
    %v4105 = vunpack.c.h.b16 %v3460
    %v4106 = vunpack.c.l.b16 %v3461
    %v4107 = vunpack.c.h.b16 %v3461
    %v4108 = vunpack.c.l.b16 %v3462
    %v4109 = vunpack.c.h.b16 %v3462
    %v4110 = vunpack.c.l.b16 %v3463
    %v4111 = vunpack.c.h.b16 %v3463
    %v4112 = vunpack.c.l.b16 %v3464
    %v4113 = vunpack.c.h.b16 %v3464
    %v4114 = vunpack.c.l.b16 %v3465
    %v4115 = vunpack.c.h.b16 %v3465
    %v4116 = vunpack.c.l.b16 %v3466
    %v4117 = vunpack.c.h.b16 %v3466
    %v4118 = vunpack.c.l.b16 %v3467
    %v4119 = vunpack.c.h.b16 %v3467
    %v4120 = vunpack.c.l.b16 %v3468
    %v4121 = vunpack.c.h.b16 %v3468
    %v4122 = vunpack.c.l.b16 %v3469
    %v4123 = vunpack.c.h.b16 %v3469
    %v4124 = vunpack.c.l.b16 %v3470
    %v4125 = vunpack.c.h.b16 %v3470
    %v4126 = vunpack.c.l.b16 %v3471
    %v4127 = vunpack.c.h.b16 %v3471
    %v4128 = vunpack.c.l.b16 %v3472
    %v4129 = vunpack.c.h.b16 %v3472
    %v4130 = vunpack.c.l.b16 %v3473
    %v4131 = vunpack.c.h.b16 %v3473
    %v4132 = vunpack.c.l.b16 %v3474
    %v4133 = vunpack.c.h.b16 %v3474
    %v4134 = vunpack.c.l.b16 %v3475
    %v4135 = vunpack.c.h.b16 %v3475
    %v4136 = vunpack.c.l.b16 %v3476
    %v4137 = vunpack.c.h.b16 %v3476
    %v4138 = vunpack.c.l.b16 %v3477
    %v4139 = vunpack.c.h.b16 %v3477
    %v4140 = vunpack.c.l.b16 %v3478
    %v4141 = vunpack.c.h.b16 %v3478
    %v4142 = vunpack.c.l.b16 %v3479
    %v4143 = vunpack.c.h.b16 %v3479
    %v4144 = vunpack.c.l.b16 %v3480
    %v4145 = vunpack.c.h.b16 %v3480
    %v4146 = vunpack.c.l.b16 %v3481
    %v4147 = vunpack.c.h.b16 %v3481
    %v4148 = vunpack.c.l.b16 %v3482
    %v4149 = vunpack.c.h.b16 %v3482
    %v4150 = vunpack.c.l.b16 %v3483
    %v4151 = vunpack.c.h.b16 %v3483
    %v4152 = vunpack.c.l.b16 %v3484
    %v4153 = vunpack.c.h.b16 %v3484
    %v4154 = vunpack.c.l.b16 %v3485
    %v4155 = vunpack.c.h.b16 %v3485
    %v4156 = vunpack.c.l.b16 %v3486
    %v4157 = vunpack.c.h.b16 %v3486
    %v4158 = vunpack.c.l.b16 %v3487
    %v4159 = vunpack.c.h.b16 %v3487
    %v4160 = vunpack.c.l.b16 %v3488
    %v4161 = vunpack.c.h.b16 %v3488
    %v4162 = vunpack.c.l.b16 %v3489
    %v4163 = vunpack.c.h.b16 %v3489
    %v4164 = vunpack.c.l.b16 %v3490
    %v4165 = vunpack.c.h.b16 %v3490
    %v4166 = vunpack.c.l.b16 %v3491
    %v4167 = vunpack.c.h.b16 %v3491
    %v4168 = vunpack.c.l.b16 %v3492
    %v4169 = vunpack.c.h.b16 %v3492
    %v4170 = vunpack.c.l.b16 %v3493
    %v4171 = vunpack.c.h.b16 %v3493
    %v4172 = vunpack.c.l.b16 %v3494
    %v4173 = vunpack.c.h.b16 %v3494
    %v4174 = vunpack.c.l.b16 %v3495
    %v4175 = vunpack.c.h.b16 %v3495
    %v4176 = vunpack.c.l.b16 %v3496
    %v4177 = vunpack.c.h.b16 %v3496
    %v4178 = vunpack.c.l.b16 %v3497
    %v4179 = vunpack.c.h.b16 %v3497
    %v4180 = vunpack.c.l.b16 %v3498
    %v4181 = vunpack.c.h.b16 %v3498
    %v4182 = vunpack.c.l.b16 %v3499
    %v4183 = vunpack.c.h.b16 %v3499
    %v4184 = vunpack.c.l.b16 %v3500
    %v4185 = vunpack.c.h.b16 %v3500
    %v4186 = vunpack.c.l.b16 %v3501
    %v4187 = vunpack.c.h.b16 %v3501
    %v4188 = vunpack.c.l.b16 %v3502
    %v4189 = vunpack.c.h.b16 %v3502
    %v4190 = vunpack.c.l.b16 %v3503
    %v4191 = vunpack.c.h.b16 %v3503
    %v4192 = vunpack.c.l.b16 %v3504
    %v4193 = vunpack.c.h.b16 %v3504
    %v4194 = vunpack.c.l.b16 %v3505
    %v4195 = vunpack.c.h.b16 %v3505
    %v4196 = vunpack.c.l.b16 %v3506
    %v4197 = vunpack.c.h.b16 %v3506
    %v4198 = vunpack.c.l.b16 %v3507
    %v4199 = vunpack.c.h.b16 %v3507
    %v4200 = vunpack.c.l.b16 %v3508
    %v4201 = vunpack.c.h.b16 %v3508
    %v4202 = vunpack.c.l.b16 %v3509
    %v4203 = vunpack.c.h.b16 %v3509
    %v4204 = vunpack.c.l.b16 %v3510
    %v4205 = vunpack.c.h.b16 %v3510
    %v4206 = vunpack.c.l.b16 %v3511
    %v4207 = vunpack.c.h.b16 %v3511
    %v4208 = vunpack.c.l.b16 %v3512
    %v4209 = vunpack.c.h.b16 %v3512
    %v4210 = vunpack.c.l.b16 %v3513
    %v4211 = vunpack.c.h.b16 %v3513
    %v4212 = vunpack.c.l.b16 %v3514
    %v4213 = vunpack.c.h.b16 %v3514
    %v4214 = vunpack.c.l.b16 %v3515
    %v4215 = vunpack.c.h.b16 %v3515
    %v4216 = vunpack.c.l.b16 %v3516
    %v4217 = vunpack.c.h.b16 %v3516
    %v4218 = vunpack.c.l.b16 %v3517
    %v4219 = vunpack.c.h.b16 %v3517
    %v4220 = vunpack.c.l.b16 %v3518
    %v4221 = vunpack.c.h.b16 %v3518
    %v4222 = vunpack.c.l.b16 %v3519
    %v4223 = vunpack.c.h.b16 %v3519
    %v4224 = vunpack.c.l.b16 %v3520
    %v4225 = vunpack.c.h.b16 %v3520
    %v4226 = vunpack.c.l.b16 %v3521
    %v4227 = vunpack.c.h.b16 %v3521
    %v4228 = vunpack.c.l.b16 %v3522
    %v4229 = vunpack.c.h.b16 %v3522
    %v4230 = vunpack.c.l.b16 %v3523
    %v4231 = vunpack.c.h.b16 %v3523
    %v4232 = vunpack.c.l.b16 %v3524
    %v4233 = vunpack.c.h.b16 %v3524
    %v4234 = vunpack.c.l.b16 %v3525
    %v4235 = vunpack.c.h.b16 %v3525
    %v4236 = vunpack.c.l.b16 %v3526
    %v4237 = vunpack.c.h.b16 %v3526
    %v4238 = vunpack.c.l.b16 %v3527
    %v4239 = vunpack.c.h.b16 %v3527
    %v4240 = vunpack.c.l.b16 %v3528
    %v4241 = vunpack.c.h.b16 %v3528
    %v4242 = vunpack.c.l.b16 %v3529
    %v4243 = vunpack.c.h.b16 %v3529
    %v4244 = vunpack.c.l.b16 %v3530
    %v4245 = vunpack.c.h.b16 %v3530
    %v4246 = vunpack.c.l.b16 %v3531
    %v4247 = vunpack.c.h.b16 %v3531
    %v4248 = vunpack.c.l.b16 %v3532
    %v4249 = vunpack.c.h.b16 %v3532
    %v4250 = vunpack.c.l.b16 %v3533
    %v4251 = vunpack.c.h.b16 %v3533
    %v4252 = vunpack.c.l.b16 %v3534
    %v4253 = vunpack.c.h.b16 %v3534
    %v4254 = vunpack.c.l.b16 %v3535
    %v4255 = vunpack.c.h.b16 %v3535
    %v4256 = vunpack.c.l.b16 %v3536
    %v4257 = vunpack.c.h.b16 %v3536
    %v4258 = vunpack.c.l.b16 %v3537
    %v4259 = vunpack.c.h.b16 %v3537
    %v4260 = vunpack.c.l.b16 %v3538
    %v4261 = vunpack.c.h.b16 %v3538
    %v4262 = vunpack.c.l.b16 %v3539
    %v4263 = vunpack.c.h.b16 %v3539
    %v4264 = vunpack.c.l.b16 %v3540
    %v4265 = vunpack.c.h.b16 %v3540
    %v4266 = vunpack.c.l.b16 %v3541
    %v4267 = vunpack.c.h.b16 %v3541
    %v4268 = vunpack.c.l.b16 %v3542
    %v4269 = vunpack.c.h.b16 %v3542
    %v4270 = vunpack.c.l.b16 %v3543
    %v4271 = vunpack.c.h.b16 %v3543
    %v4272 = vunpack.c.l.b16 %v3544
    %v4273 = vunpack.c.h.b16 %v3544
    %v4274 = vunpack.c.l.b16 %v3545
    %v4275 = vunpack.c.h.b16 %v3545
    %v4276 = vunpack.c.l.b16 %v3546
    %v4277 = vunpack.c.h.b16 %v3546
    %v4278 = vunpack.c.l.b16 %v3547
    %v4279 = vunpack.c.h.b16 %v3547
    %v4280 = vunpack.c.l.b16 %v3548
    %v4281 = vunpack.c.h.b16 %v3548
    %v4282 = vunpack.c.l.b16 %v3549
    %v4283 = vunpack.c.h.b16 %v3549
    %v4284 = vunpack.c.l.b16 %v3550
    %v4285 = vunpack.c.h.b16 %v3550
    %v4286 = vunpack.c.l.b16 %v3551
    %v4287 = vunpack.c.h.b16 %v3551
    %v4288 = vunpack.c.l.b16 %v3552
    %v4289 = vunpack.c.h.b16 %v3552
    %v4290 = vunpack.c.l.b16 %v3553
    %v4291 = vunpack.c.h.b16 %v3553
    %v4292 = vunpack.c.l.b16 %v3554
    %v4293 = vunpack.c.h.b16 %v3554
    %v4294 = vunpack.c.l.b16 %v3555
    %v4295 = vunpack.c.h.b16 %v3555
    %v4296 = vunpack.c.l.b16 %v3556
    %v4297 = vunpack.c.h.b16 %v3556
    %v4298 = vunpack.c.l.b16 %v3557
    %v4299 = vunpack.c.h.b16 %v3557
    %v4300 = vunpack.c.l.b16 %v3558
    %v4301 = vunpack.c.h.b16 %v3558
    %v4302 = vunpack.c.l.b16 %v3559
    %v4303 = vunpack.c.h.b16 %v3559
    %v4304 = vunpack.c.l.b16 %v3560
    %v4305 = vunpack.c.h.b16 %v3560
    %v4306 = vunpack.c.l.b16 %v3561
    %v4307 = vunpack.c.h.b16 %v3561
    %v4308 = vunpack.c.l.b16 %v3562
    %v4309 = vunpack.c.h.b16 %v3562
    %v4310 = vunpack.c.l.b16 %v3563
    %v4311 = vunpack.c.h.b16 %v3563
    %v4312 = vunpack.c.l.b16 %v3564
    %v4313 = vunpack.c.h.b16 %v3564
    %v4314 = vunpack.c.l.b16 %v3565
    %v4315 = vunpack.c.h.b16 %v3565
    %v4316 = vunpack.c.l.b16 %v3566
    %v4317 = vunpack.c.h.b16 %v3566
    %v4318 = vunpack.c.l.b16 %v3567
    %v4319 = vunpack.c.h.b16 %v3567
    %v4320 = vunpack.c.l.b16 %v3568
    %v4321 = vunpack.c.h.b16 %v3568
    %v4322 = vunpack.c.l.b16 %v3569
    %v4323 = vunpack.c.h.b16 %v3569
    %v4324 = vunpack.c.l.b16 %v3570
    %v4325 = vunpack.c.h.b16 %v3570
    %v4326 = vunpack.c.l.b16 %v3571
    %v4327 = vunpack.c.h.b16 %v3571
    %v4328 = vunpack.c.l.b16 %v3572
    %v4329 = vunpack.c.h.b16 %v3572
    %v4330 = vunpack.c.l.b16 %v3573
    %v4331 = vunpack.c.h.b16 %v3573
    %v4332 = vunpack.c.l.b16 %v3574
    %v4333 = vunpack.c.h.b16 %v3574
    %v4334 = vunpack.c.l.b16 %v3575
    %v4335 = vunpack.c.h.b16 %v3575
    %v4336 = vunpack.c.l.b16 %v3576
    %v4337 = vunpack.c.h.b16 %v3576
    %v4338 = vunpack.c.l.b16 %v3577
    %v4339 = vunpack.c.h.b16 %v3577
    %v4340 = vunpack.c.l.b16 %v3578
    %v4341 = vunpack.c.h.b16 %v3578
    %v4342 = vunpack.c.l.b16 %v3579
    %v4343 = vunpack.c.h.b16 %v3579
    %v4344 = vunpack.c.l.b16 %v3580
    %v4345 = vunpack.c.h.b16 %v3580
    %v4346 = vunpack.c.l.b16 %v3581
    %v4347 = vunpack.c.h.b16 %v3581
    %v4348 = vunpack.c.l.b16 %v3582
    %v4349 = vunpack.c.h.b16 %v3582
    %v4350 = vunpack.c.l.b16 %v3583
    %v4351 = vunpack.c.h.b16 %v3583
    %v4352 = vunpack.c.l.b16 %v3584
    %v4353 = vunpack.c.h.b16 %v3584
    %v4354 = vunpack.c.l.b16 %v3585
    %v4355 = vunpack.c.h.b16 %v3585
    %v4356 = vunpack.c.l.b16 %v3586
    %v4357 = vunpack.c.h.b16 %v3586
    %v4358 = vunpack.c.l.b16 %v3587
    %v4359 = vunpack.c.h.b16 %v3587
    %v4360 = vunpack.c.l.b16 %v3588
    %v4361 = vunpack.c.h.b16 %v3588
    %v4362 = vunpack.c.l.b16 %v3589
    %v4363 = vunpack.c.h.b16 %v3589
    %v4364 = vunpack.c.l.b16 %v3590
    %v4365 = vunpack.c.h.b16 %v3590
    %v4366 = vunpack.c.l.b16 %v3591
    %v4367 = vunpack.c.h.b16 %v3591
    %v4368 = vunpack.c.l.b16 %v3592
    %v4369 = vunpack.c.h.b16 %v3592
    %v4370 = vunpack.c.l.b16 %v3593
    %v4371 = vunpack.c.h.b16 %v3593
    %v4372 = vunpack.c.l.b16 %v3594
    %v4373 = vunpack.c.h.b16 %v3594
    %v4374 = vunpack.c.l.b16 %v3595
    %v4375 = vunpack.c.h.b16 %v3595
    %v4376 = vunpack.c.l.b16 %v3596
    %v4377 = vunpack.c.h.b16 %v3596
    %v4378 = vunpack.c.l.b16 %v3597
    %v4379 = vunpack.c.h.b16 %v3597
    %v4380 = vunpack.c.l.b16 %v3598
    %v4381 = vunpack.c.h.b16 %v3598
    %v4382 = vunpack.c.l.b16 %v3599
    %v4383 = vunpack.c.h.b16 %v3599
    %v4384 = vunpack.c.l.b16 %v3600
    %v4385 = vunpack.c.h.b16 %v3600
    %v4386 = vunpack.c.l.b16 %v3601
    %v4387 = vunpack.c.h.b16 %v3601
    %v4388 = vunpack.c.l.b16 %v3602
    %v4389 = vunpack.c.h.b16 %v3602
    %v4390 = vunpack.c.l.b16 %v3603
    %v4391 = vunpack.c.h.b16 %v3603
    %v4392 = vunpack.c.l.b16 %v3604
    %v4393 = vunpack.c.h.b16 %v3604
    %v4394 = vunpack.c.l.b16 %v3605
    %v4395 = vunpack.c.h.b16 %v3605
    %v4396 = vunpack.c.l.b16 %v3606
    %v4397 = vunpack.c.h.b16 %v3606
    %v4398 = vunpack.c.l.b16 %v3607
    %v4399 = vunpack.c.h.b16 %v3607
    %v4400 = vunpack.c.l.b16 %v3608
    %v4401 = vunpack.c.h.b16 %v3608
    %v4402 = vunpack.c.l.b16 %v3609
    %v4403 = vunpack.c.h.b16 %v3609
    %v4404 = vunpack.c.l.b16 %v3610
    %v4405 = vunpack.c.h.b16 %v3610
    %v4406 = vunpack.c.l.b16 %v3611
    %v4407 = vunpack.c.h.b16 %v3611
    %v4408 = vunpack.c.l.b16 %v3612
    %v4409 = vunpack.c.h.b16 %v3612
    %v4410 = vunpack.c.l.b16 %v3613
    %v4411 = vunpack.c.h.b16 %v3613
    %v4412 = vunpack.c.l.b16 %v3614
    %v4413 = vunpack.c.h.b16 %v3614
    %v4414 = vunpack.c.l.b16 %v3615
    %v4415 = vunpack.c.h.b16 %v3615
    %v4416 = vunpack.c.l.b16 %v3616
    %v4417 = vunpack.c.h.b16 %v3616
    %v4418 = vunpack.c.l.b16 %v3617
    %v4419 = vunpack.c.h.b16 %v3617
    %v4420 = vunpack.c.l.b16 %v3618
    %v4421 = vunpack.c.h.b16 %v3618
    %v4422 = vunpack.c.l.b16 %v3619
    %v4423 = vunpack.c.h.b16 %v3619
    %v4424 = vunpack.c.l.b16 %v3620
    %v4425 = vunpack.c.h.b16 %v3620
    %v4426 = vunpack.c.l.b16 %v3621
    %v4427 = vunpack.c.h.b16 %v3621
    %v4428 = vunpack.c.l.b16 %v3622
    %v4429 = vunpack.c.h.b16 %v3622
    %v4430 = vunpack.c.l.b16 %v3623
    %v4431 = vunpack.c.h.b16 %v3623
    %v4432 = vunpack.c.l.b16 %v3624
    %v4433 = vunpack.c.h.b16 %v3624
    %v4434 = vunpack.c.l.b16 %v3625
    %v4435 = vunpack.c.h.b16 %v3625
    %v4436 = vunpack.c.l.b16 %v3626
    %v4437 = vunpack.c.h.b16 %v3626
    %v4438 = vunpack.c.l.b16 %v3627
    %v4439 = vunpack.c.h.b16 %v3627
    %v4440 = vunpack.c.l.b16 %v3628
    %v4441 = vunpack.c.h.b16 %v3628
    %v4442 = vunpack.c.l.b16 %v3629
    %v4443 = vunpack.c.h.b16 %v3629
    %v4444 = vunpack.c.l.b16 %v3630
    %v4445 = vunpack.c.h.b16 %v3630
    %v4446 = vunpack.c.l.b16 %v3631
    %v4447 = vunpack.c.h.b16 %v3631
    %v4448 = vunpack.c.l.b16 %v3632
    %v4449 = vunpack.c.h.b16 %v3632
    %v4450 = vunpack.c.l.b16 %v3633
    %v4451 = vunpack.c.h.b16 %v3633
    %v4452 = vunpack.c.l.b16 %v3634
    %v4453 = vunpack.c.h.b16 %v3634
    %v4454 = vunpack.c.l.b16 %v3635
    %v4455 = vunpack.c.h.b16 %v3635
    %v4456 = vunpack.c.l.b16 %v3636
    %v4457 = vunpack.c.h.b16 %v3636
    %v4458 = vunpack.c.l.b16 %v3637
    %v4459 = vunpack.c.h.b16 %v3637
    %v4460 = vunpack.c.l.b16 %v3638
    %v4461 = vunpack.c.h.b16 %v3638
    %v4462 = vunpack.c.l.b16 %v3639
    %v4463 = vunpack.c.h.b16 %v3639
    %v4464 = vunpack.c.l.b16 %v3640
    %v4465 = vunpack.c.h.b16 %v3640
    %v4466 = vunpack.c.l.b16 %v3641
    %v4467 = vunpack.c.h.b16 %v3641
    %v4468 = vunpack.c.l.b16 %v3642
    %v4469 = vunpack.c.h.b16 %v3642
    %v4470 = vunpack.c.l.b16 %v3643
    %v4471 = vunpack.c.h.b16 %v3643
    %v4472 = vunpack.c.l.b16 %v3644
    %v4473 = vunpack.c.h.b16 %v3644
    %v4474 = vunpack.c.l.b16 %v3645
    %v4475 = vunpack.c.h.b16 %v3645
    %v4476 = vunpack.c.l.b16 %v3646
    %v4477 = vunpack.c.h.b16 %v3646
    %v4478 = vunpack.c.l.b16 %v3647
    %v4479 = vunpack.c.h.b16 %v3647
    %v4480 = vunpack.c.l.b16 %v3648
    %v4481 = vunpack.c.h.b16 %v3648
    %v4482 = vunpack.c.l.b16 %v3649
    %v4483 = vunpack.c.h.b16 %v3649
    %v4484 = vunpack.c.l.b16 %v3650
    %v4485 = vunpack.c.h.b16 %v3650
    %v4486 = vunpack.c.l.b16 %v3651
    %v4487 = vunpack.c.h.b16 %v3651
    %v4488 = vunpack.c.l.b16 %v3652
    %v4489 = vunpack.c.h.b16 %v3652
    %v4490 = vunpack.c.l.b16 %v3653
    %v4491 = vunpack.c.h.b16 %v3653
    %v4492 = vunpack.c.l.b16 %v3654
    %v4493 = vunpack.c.h.b16 %v3654
    %v4494 = vunpack.c.l.b16 %v3655
    %v4495 = vunpack.c.h.b16 %v3655
    %v4496 = vunpack.c.l.b16 %v3656
    %v4497 = vunpack.c.h.b16 %v3656
    %v4498 = vunpack.c.l.b16 %v3657
    %v4499 = vunpack.c.h.b16 %v3657
    %v4500 = vunpack.c.l.b16 %v3658
    %v4501 = vunpack.c.h.b16 %v3658
    %v4502 = vunpack.c.l.b16 %v3659
    %v4503 = vunpack.c.h.b16 %v3659
    %v4504 = vunpack.c.l.b16 %v3660
    %v4505 = vunpack.c.h.b16 %v3660
    %v4506 = vunpack.c.l.b16 %v3661
    %v4507 = vunpack.c.h.b16 %v3661
    %v4508 = vunpack.c.l.b16 %v3662
    %v4509 = vunpack.c.h.b16 %v3662
    %v4510 = vunpack.c.l.b16 %v3663
    %v4511 = vunpack.c.h.b16 %v3663
    %v4512 = vunpack.c.l.b16 %v3664
    %v4513 = vunpack.c.h.b16 %v3664
    %v4514 = vunpack.c.l.b16 %v3665
    %v4515 = vunpack.c.h.b16 %v3665
    %v4516 = vunpack.c.l.b16 %v3666
    %v4517 = vunpack.c.h.b16 %v3666
    %v4518 = vunpack.c.l.b16 %v3667
    %v4519 = vunpack.c.h.b16 %v3667
    %v4520 = vunpack.c.l.b16 %v3668
    %v4521 = vunpack.c.h.b16 %v3668
    %v4522 = vunpack.c.l.b16 %v3669
    %v4523 = vunpack.c.h.b16 %v3669
    %v4524 = vunpack.c.l.b16 %v3670
    %v4525 = vunpack.c.h.b16 %v3670
    %v4526 = vunpack.c.l.b16 %v3671
    %v4527 = vunpack.c.h.b16 %v3671
    %v4528 = vunpack.c.l.b16 %v3672
    %v4529 = vunpack.c.h.b16 %v3672
    %v4530 = vunpack.c.l.b16 %v3673
    %v4531 = vunpack.c.h.b16 %v3673
    %v4532 = vunpack.c.l.b16 %v3674
    %v4533 = vunpack.c.h.b16 %v3674
    %v4534 = vunpack.c.l.b16 %v3675
    %v4535 = vunpack.c.h.b16 %v3675
    %v4536 = vunpack.c.l.b16 %v3676
    %v4537 = vunpack.c.h.b16 %v3676
    %v4538 = vunpack.c.l.b16 %v3677
    %v4539 = vunpack.c.h.b16 %v3677
    %v4540 = vunpack.c.l.b16 %v3678
    %v4541 = vunpack.c.h.b16 %v3678
    %v4542 = vunpack.c.l.b16 %v3679
    %v4543 = vunpack.c.h.b16 %v3679
    %v4544 = vunpack.c.l.b16 %v3680
    %v4545 = vunpack.c.h.b16 %v3680
    %v4546 = vunpack.c.l.b16 %v3681
    %v4547 = vunpack.c.h.b16 %v3681
    %v4548 = vunpack.c.l.b16 %v3682
    %v4549 = vunpack.c.h.b16 %v3682
    %v4550 = vunpack.c.l.b16 %v3683
    %v4551 = vunpack.c.h.b16 %v3683
    %v4552 = vunpack.c.l.b16 %v3684
    %v4553 = vunpack.c.h.b16 %v3684
    %v4554 = vunpack.c.l.b16 %v3685
    %v4555 = vunpack.c.h.b16 %v3685
    %v4556 = vunpack.c.l.b16 %v3686
    %v4557 = vunpack.c.h.b16 %v3686
    %v4558 = vunpack.c.l.b16 %v3687
    %v4559 = vunpack.c.h.b16 %v3687
    %v4560 = vunpack.c.l.b16 %v3688
    %v4561 = vunpack.c.h.b16 %v3688
    %v4562 = vunpack.c.l.b16 %v3689
    %v4563 = vunpack.c.h.b16 %v3689
    %v4564 = vunpack.c.l.b16 %v3690
    %v4565 = vunpack.c.h.b16 %v3690
    %v4566 = vunpack.c.l.b16 %v3691
    %v4567 = vunpack.c.h.b16 %v3691
    %v4568 = vunpack.c.l.b16 %v3692
    %v4569 = vunpack.c.h.b16 %v3692
    %v4570 = vunpack.c.l.b16 %v3693
    %v4571 = vunpack.c.h.b16 %v3693
    %v4572 = vpack.c.b16 %v4002, %v3996
    %v4573 = vpack.c.b16 %v4003, %v3997
    %v4574 = vpack.c.b16 %v4004, %v3998
    %v4575 = vpack.c.b16 %v4005, %v3999
    %v4576 = vpack.c.b16 %v4006, %v4000
    %v4577 = vpack.c.b16 %v4007, %v4001
    %v4578 = vpack.c.b16 %v4014, %v4008
    %v4579 = vpack.c.b16 %v4015, %v4009
    %v4580 = vpack.c.b16 %v4016, %v4010
    %v4581 = vpack.c.b16 %v4017, %v4011
    %v4582 = vpack.c.b16 %v4018, %v4012
    %v4583 = vpack.c.b16 %v4019, %v4013
    %v4584 = vpack.c.b16 %v4026, %v4020
    %v4585 = vpack.c.b16 %v4027, %v4021
    %v4586 = vpack.c.b16 %v4028, %v4022
    %v4587 = vpack.c.b16 %v4029, %v4023
    %v4588 = vpack.c.b16 %v4030, %v4024
    %v4589 = vpack.c.b16 %v4031, %v4025
    %v4590 = vpack.c.b16 %v4038, %v4032
    %v4591 = vpack.c.b16 %v4039, %v4033
    %v4592 = vpack.c.b16 %v4040, %v4034
    %v4593 = vpack.c.b16 %v4041, %v4035
    %v4594 = vpack.c.b16 %v4042, %v4036
    %v4595 = vpack.c.b16 %v4043, %v4037
    %v4596 = vpack.c.b16 %v4050, %v4044
    %v4597 = vpack.c.b16 %v4051, %v4045
    %v4598 = vpack.c.b16 %v4052, %v4046
    %v4599 = vpack.c.b16 %v4053, %v4047
    %v4600 = vpack.c.b16 %v4054, %v4048
    %v4601 = vpack.c.b16 %v4055, %v4049
    %v4602 = vpack.c.b16 %v4062, %v4056
    %v4603 = vpack.c.b16 %v4063, %v4057
    %v4604 = vpack.c.b16 %v4064, %v4058
    %v4605 = vpack.c.b16 %v4065, %v4059
    %v4606 = vpack.c.b16 %v4066, %v4060
    %v4607 = vpack.c.b16 %v4067, %v4061
    %v4608 = vpack.c.b16 %v4074, %v4068
    %v4609 = vpack.c.b16 %v4075, %v4069
    %v4610 = vpack.c.b16 %v4076, %v4070
    %v4611 = vpack.c.b16 %v4077, %v4071
    %v4612 = vpack.c.b16 %v4078, %v4072
    %v4613 = vpack.c.b16 %v4079, %v4073
    %v4614 = vpack.c.b16 %v4086, %v4080
    %v4615 = vpack.c.b16 %v4087, %v4081
    %v4616 = vpack.c.b16 %v4088, %v4082
    %v4617 = vpack.c.b16 %v4089, %v4083
    %v4618 = vpack.c.b16 %v4090, %v4084
    %v4619 = vpack.c.b16 %v4091, %v4085
    %v4620 = vpack.c.b16 %v4098, %v4092
    %v4621 = vpack.c.b16 %v4099, %v4093
    %v4622 = vpack.c.b16 %v4100, %v4094
    %v4623 = vpack.c.b16 %v4101, %v4095
    %v4624 = vpack.c.b16 %v4102, %v4096
    %v4625 = vpack.c.b16 %v4103, %v4097
    %v4626 = vpack.c.b16 %v4110, %v4104
    %v4627 = vpack.c.b16 %v4111, %v4105
    %v4628 = vpack.c.b16 %v4112, %v4106
    %v4629 = vpack.c.b16 %v4113, %v4107
    %v4630 = vpack.c.b16 %v4114, %v4108
    %v4631 = vpack.c.b16 %v4115, %v4109
    %v4632 = vpack.c.b16 %v4122, %v4116
    %v4633 = vpack.c.b16 %v4123, %v4117
    %v4634 = vpack.c.b16 %v4124, %v4118
    %v4635 = vpack.c.b16 %v4125, %v4119
    %v4636 = vpack.c.b16 %v4126, %v4120
    %v4637 = vpack.c.b16 %v4127, %v4121
    %v4638 = vpack.c.b16 %v4134, %v4128
    %v4639 = vpack.c.b16 %v4135, %v4129
    %v4640 = vpack.c.b16 %v4136, %v4130
    %v4641 = vpack.c.b16 %v4137, %v4131
    %v4642 = vpack.c.b16 %v4138, %v4132
    %v4643 = vpack.c.b16 %v4139, %v4133
    %v4644 = vpack.c.b16 %v4146, %v4140
    %v4645 = vpack.c.b16 %v4147, %v4141
    %v4646 = vpack.c.b16 %v4148, %v4142
    %v4647 = vpack.c.b16 %v4149, %v4143
    %v4648 = vpack.c.b16 %v4150, %v4144
    %v4649 = vpack.c.b16 %v4151, %v4145
    %v4650 = vpack.c.b16 %v4158, %v4152
    %v4651 = vpack.c.b16 %v4159, %v4153
    %v4652 = vpack.c.b16 %v4160, %v4154
    %v4653 = vpack.c.b16 %v4161, %v4155
    %v4654 = vpack.c.b16 %v4162, %v4156
    %v4655 = vpack.c.b16 %v4163, %v4157
    %v4656 = vpack.c.b16 %v4170, %v4164
    %v4657 = vpack.c.b16 %v4171, %v4165
    %v4658 = vpack.c.b16 %v4172, %v4166
    %v4659 = vpack.c.b16 %v4173, %v4167
    %v4660 = vpack.c.b16 %v4174, %v4168
    %v4661 = vpack.c.b16 %v4175, %v4169
    %v4662 = vpack.c.b16 %v4182, %v4176
    %v4663 = vpack.c.b16 %v4183, %v4177
    %v4664 = vpack.c.b16 %v4184, %v4178
    %v4665 = vpack.c.b16 %v4185, %v4179
    %v4666 = vpack.c.b16 %v4186, %v4180
    %v4667 = vpack.c.b16 %v4187, %v4181
    %v4668 = vpack.c.b16 %v4194, %v4188
    %v4669 = vpack.c.b16 %v4195, %v4189
    %v4670 = vpack.c.b16 %v4196, %v4190
    %v4671 = vpack.c.b16 %v4197, %v4191
    %v4672 = vpack.c.b16 %v4198, %v4192
    %v4673 = vpack.c.b16 %v4199, %v4193
    %v4674 = vpack.c.b16 %v4206, %v4200
    %v4675 = vpack.c.b16 %v4207, %v4201
    %v4676 = vpack.c.b16 %v4208, %v4202
    %v4677 = vpack.c.b16 %v4209, %v4203
    %v4678 = vpack.c.b16 %v4210, %v4204
    %v4679 = vpack.c.b16 %v4211, %v4205
    %v4680 = vpack.c.b16 %v4218, %v4212
    %v4681 = vpack.c.b16 %v4219, %v4213
    %v4682 = vpack.c.b16 %v4220, %v4214
    %v4683 = vpack.c.b16 %v4221, %v4215
    %v4684 = vpack.c.b16 %v4222, %v4216
    %v4685 = vpack.c.b16 %v4223, %v4217
    %v4686 = vpack.c.b16 %v4230, %v4224
    %v4687 = vpack.c.b16 %v4231, %v4225
    %v4688 = vpack.c.b16 %v4232, %v4226
    %v4689 = vpack.c.b16 %v4233, %v4227
    %v4690 = vpack.c.b16 %v4234, %v4228
    %v4691 = vpack.c.b16 %v4235, %v4229
    %v4692 = vpack.c.b16 %v4242, %v4236
    %v4693 = vpack.c.b16 %v4243, %v4237
    %v4694 = vpack.c.b16 %v4244, %v4238
    %v4695 = vpack.c.b16 %v4245, %v4239
    %v4696 = vpack.c.b16 %v4246, %v4240
    %v4697 = vpack.c.b16 %v4247, %v4241
    %v4698 = vpack.c.b16 %v4254, %v4248
    %v4699 = vpack.c.b16 %v4255, %v4249
    %v4700 = vpack.c.b16 %v4256, %v4250
    %v4701 = vpack.c.b16 %v4257, %v4251
    %v4702 = vpack.c.b16 %v4258, %v4252
    %v4703 = vpack.c.b16 %v4259, %v4253
    %v4704 = vpack.c.b16 %v4266, %v4260
    %v4705 = vpack.c.b16 %v4267, %v4261
    %v4706 = vpack.c.b16 %v4268, %v4262
    %v4707 = vpack.c.b16 %v4269, %v4263
    %v4708 = vpack.c.b16 %v4270, %v4264
    %v4709 = vpack.c.b16 %v4271, %v4265
    %v4710 = vpack.c.b16 %v4278, %v4272
    %v4711 = vpack.c.b16 %v4279, %v4273
    %v4712 = vpack.c.b16 %v4280, %v4274
    %v4713 = vpack.c.b16 %v4281, %v4275
    %v4714 = vpack.c.b16 %v4282, %v4276
    %v4715 = vpack.c.b16 %v4283, %v4277
    %v4716 = vpack.c.b16 %v4290, %v4284
    %v4717 = vpack.c.b16 %v4291, %v4285
    %v4718 = vpack.c.b16 %v4292, %v4286
    %v4719 = vpack.c.b16 %v4293, %v4287
    %v4720 = vpack.c.b16 %v4294, %v4288
    %v4721 = vpack.c.b16 %v4295, %v4289
    %v4722 = vpack.c.b16 %v4302, %v4296
    %v4723 = vpack.c.b16 %v4303, %v4297
    %v4724 = vpack.c.b16 %v4304, %v4298
    %v4725 = vpack.c.b16 %v4305, %v4299
    %v4726 = vpack.c.b16 %v4306, %v4300
    %v4727 = vpack.c.b16 %v4307, %v4301
    %v4728 = vpack.c.b16 %v4314, %v4308
    %v4729 = vpack.c.b16 %v4315, %v4309
    %v4730 = vpack.c.b16 %v4316, %v4310
    %v4731 = vpack.c.b16 %v4317, %v4311
    %v4732 = vpack.c.b16 %v4318, %v4312
    %v4733 = vpack.c.b16 %v4319, %v4313
    %v4734 = vpack.c.b16 %v4326, %v4320
    %v4735 = vpack.c.b16 %v4327, %v4321
    %v4736 = vpack.c.b16 %v4328, %v4322
    %v4737 = vpack.c.b16 %v4329, %v4323
    %v4738 = vpack.c.b16 %v4330, %v4324
    %v4739 = vpack.c.b16 %v4331, %v4325
    %v4740 = vpack.c.b16 %v4338, %v4332
    %v4741 = vpack.c.b16 %v4339, %v4333
    %v4742 = vpack.c.b16 %v4340, %v4334
    %v4743 = vpack.c.b16 %v4341, %v4335
    %v4744 = vpack.c.b16 %v4342, %v4336
    %v4745 = vpack.c.b16 %v4343, %v4337
    %v4746 = vpack.c.b16 %v4350, %v4344
    %v4747 = vpack.c.b16 %v4351, %v4345
    %v4748 = vpack.c.b16 %v4352, %v4346
    %v4749 = vpack.c.b16 %v4353, %v4347
    %v4750 = vpack.c.b16 %v4354, %v4348
    %v4751 = vpack.c.b16 %v4355, %v4349
    %v4752 = vpack.c.b16 %v4362, %v4356
    %v4753 = vpack.c.b16 %v4363, %v4357
    %v4754 = vpack.c.b16 %v4364, %v4358
    %v4755 = vpack.c.b16 %v4365, %v4359
    %v4756 = vpack.c.b16 %v4366, %v4360
    %v4757 = vpack.c.b16 %v4367, %v4361
    %v4758 = vpack.c.b16 %v4374, %v4368
    %v4759 = vpack.c.b16 %v4375, %v4369
    %v4760 = vpack.c.b16 %v4376, %v4370
    %v4761 = vpack.c.b16 %v4377, %v4371
    %v4762 = vpack.c.b16 %v4378, %v4372
    %v4763 = vpack.c.b16 %v4379, %v4373
    %v4764 = vpack.c.b16 %v4386, %v4380
    %v4765 = vpack.c.b16 %v4387, %v4381
    %v4766 = vpack.c.b16 %v4388, %v4382
    %v4767 = vpack.c.b16 %v4389, %v4383
    %v4768 = vpack.c.b16 %v4390, %v4384
    %v4769 = vpack.c.b16 %v4391, %v4385
    %v4770 = vpack.c.b16 %v4398, %v4392
    %v4771 = vpack.c.b16 %v4399, %v4393
    %v4772 = vpack.c.b16 %v4400, %v4394
    %v4773 = vpack.c.b16 %v4401, %v4395
    %v4774 = vpack.c.b16 %v4402, %v4396
    %v4775 = vpack.c.b16 %v4403, %v4397
    %v4776 = vpack.c.b16 %v4410, %v4404
    %v4777 = vpack.c.b16 %v4411, %v4405
    %v4778 = vpack.c.b16 %v4412, %v4406
    %v4779 = vpack.c.b16 %v4413, %v4407
    %v4780 = vpack.c.b16 %v4414, %v4408
    %v4781 = vpack.c.b16 %v4415, %v4409
    %v4782 = vpack.c.b16 %v4422, %v4416
    %v4783 = vpack.c.b16 %v4423, %v4417
    %v4784 = vpack.c.b16 %v4424, %v4418
    %v4785 = vpack.c.b16 %v4425, %v4419
    %v4786 = vpack.c.b16 %v4426, %v4420
    %v4787 = vpack.c.b16 %v4427, %v4421
    %v4788 = vpack.c.b16 %v4434, %v4428
    %v4789 = vpack.c.b16 %v4435, %v4429
    %v4790 = vpack.c.b16 %v4436, %v4430
    %v4791 = vpack.c.b16 %v4437, %v4431
    %v4792 = vpack.c.b16 %v4438, %v4432
    %v4793 = vpack.c.b16 %v4439, %v4433
    %v4794 = vpack.c.b16 %v4446, %v4440
    %v4795 = vpack.c.b16 %v4447, %v4441
    %v4796 = vpack.c.b16 %v4448, %v4442
    %v4797 = vpack.c.b16 %v4449, %v4443
    %v4798 = vpack.c.b16 %v4450, %v4444
    %v4799 = vpack.c.b16 %v4451, %v4445
    %v4800 = vpack.c.b16 %v4458, %v4452
    %v4801 = vpack.c.b16 %v4459, %v4453
    %v4802 = vpack.c.b16 %v4460, %v4454
    %v4803 = vpack.c.b16 %v4461, %v4455
    %v4804 = vpack.c.b16 %v4462, %v4456
    %v4805 = vpack.c.b16 %v4463, %v4457
    %v4806 = vpack.c.b16 %v4470, %v4464
    %v4807 = vpack.c.b16 %v4471, %v4465
    %v4808 = vpack.c.b16 %v4472, %v4466
    %v4809 = vpack.c.b16 %v4473, %v4467
    %v4810 = vpack.c.b16 %v4474, %v4468
    %v4811 = vpack.c.b16 %v4475, %v4469
    %v4812 = vpack.c.b16 %v4482, %v4476
    %v4813 = vpack.c.b16 %v4483, %v4477
    %v4814 = vpack.c.b16 %v4484, %v4478
    %v4815 = vpack.c.b16 %v4485, %v4479
    %v4816 = vpack.c.b16 %v4486, %v4480
    %v4817 = vpack.c.b16 %v4487, %v4481
    %v4818 = vpack.c.b16 %v4494, %v4488
    %v4819 = vpack.c.b16 %v4495, %v4489
    %v4820 = vpack.c.b16 %v4496, %v4490
    %v4821 = vpack.c.b16 %v4497, %v4491
    %v4822 = vpack.c.b16 %v4498, %v4492
    %v4823 = vpack.c.b16 %v4499, %v4493
    %v4824 = vpack.c.b16 %v4506, %v4500
    %v4825 = vpack.c.b16 %v4507, %v4501
    %v4826 = vpack.c.b16 %v4508, %v4502
    %v4827 = vpack.c.b16 %v4509, %v4503
    %v4828 = vpack.c.b16 %v4510, %v4504
    %v4829 = vpack.c.b16 %v4511, %v4505
    %v4830 = vpack.c.b16 %v4518, %v4512
    %v4831 = vpack.c.b16 %v4519, %v4513
    %v4832 = vpack.c.b16 %v4520, %v4514
    %v4833 = vpack.c.b16 %v4521, %v4515
    %v4834 = vpack.c.b16 %v4522, %v4516
    %v4835 = vpack.c.b16 %v4523, %v4517
    %v4836 = vpack.c.b16 %v4530, %v4524
    %v4837 = vpack.c.b16 %v4531, %v4525
    %v4838 = vpack.c.b16 %v4532, %v4526
    %v4839 = vpack.c.b16 %v4533, %v4527
    %v4840 = vpack.c.b16 %v4534, %v4528
    %v4841 = vpack.c.b16 %v4535, %v4529
    %v4842 = vpack.c.b16 %v4542, %v4536
    %v4843 = vpack.c.b16 %v4543, %v4537
    %v4844 = vpack.c.b16 %v4544, %v4538
    %v4845 = vpack.c.b16 %v4545, %v4539
    %v4846 = vpack.c.b16 %v4546, %v4540
    %v4847 = vpack.c.b16 %v4547, %v4541
    %v4848 = vpack.c.b16 %v4554, %v4548
    %v4849 = vpack.c.b16 %v4555, %v4549
    %v4850 = vpack.c.b16 %v4556, %v4550
    %v4851 = vpack.c.b16 %v4557, %v4551
    %v4852 = vpack.c.b16 %v4558, %v4552
    %v4853 = vpack.c.b16 %v4559, %v4553
    %v4854 = vpack.c.b16 %v4566, %v4560
    %v4855 = vpack.c.b16 %v4567, %v4561
    %v4856 = vpack.c.b16 %v4568, %v4562
    %v4857 = vpack.c.b16 %v4569, %v4563
    %v4858 = vpack.c.b16 %v4570, %v4564
    %v4859 = vpack.c.b16 %v4571, %v4565
    %5148 = vmatpush.bf16.msra.mxu0 %v4614
    %5149 = vmatpush.bf16.msra.mxu0 %v4608
    %5150 = vmatpush.bf16.msra.mxu0 %v4602
    %5151 = vmatpush.bf16.msra.mxu0 %v4596
    %5152 = vmatpush.bf16.msra.mxu0 %v4590
    %5153 = vmatpush.bf16.msra.mxu0 %v4584
    %5154 = vmatpush.bf16.msra.mxu0 %v4578
    %5155 = vmatpush.bf16.msra.mxu0 %v4572
    %5156 = vmatmul.bf16.gmra.mxu0 %v3400
    %v5157 = vpop.f32.mrf.mxu0
    %v5158 = vadd.f32 %v3696, %v5157
    %v5159 = vpop.f32.mrf.mxu0
    %5160 = vdwg.mxu0
    %5161 = vmatpush.bf16.msra.mxu0 %v4662
    %5162 = vmatpush.bf16.msra.mxu0 %v4656
    %5163 = vmatpush.bf16.msra.mxu0 %v4650
    %5164 = vmatpush.bf16.msra.mxu0 %v4644
    %5165 = vmatpush.bf16.msra.mxu0 %v4638
    %5166 = vmatpush.bf16.msra.mxu0 %v4632
    %5167 = vmatpush.bf16.msra.mxu0 %v4626
    %5168 = vmatpush.bf16.msra.mxu0 %v4620
    %5169 = vmatmul.bf16.gmra.mxu0 %v3401
    %v5170 = vpop.f32.mrf.mxu0
    %v5171 = vadd.f32 %v5158, %v5170
    %v5172 = vpop.f32.mrf.mxu0
    %5173 = vdwg.mxu0
    %5174 = vmatpush.bf16.msra.mxu0 %v4710
    %5175 = vmatpush.bf16.msra.mxu0 %v4704
    %5176 = vmatpush.bf16.msra.mxu0 %v4698
    %5177 = vmatpush.bf16.msra.mxu0 %v4692
    %5178 = vmatpush.bf16.msra.mxu0 %v4686
    %5179 = vmatpush.bf16.msra.mxu0 %v4680
    %5180 = vmatpush.bf16.msra.mxu0 %v4674
    %5181 = vmatpush.bf16.msra.mxu0 %v4668
    %5182 = vmatmul.bf16.gmra.mxu0 %v3402
    %v5183 = vpop.f32.mrf.mxu0
    %v5184 = vadd.f32 %v5171, %v5183
    %v5185 = vpop.f32.mrf.mxu0
    %5186 = vdwg.mxu0
    %5187 = vmatpush.bf16.msra.mxu0 %v4758
    %5188 = vmatpush.bf16.msra.mxu0 %v4752
    %5189 = vmatpush.bf16.msra.mxu0 %v4746
    %5190 = vmatpush.bf16.msra.mxu0 %v4740
    %5191 = vmatpush.bf16.msra.mxu0 %v4734
    %5192 = vmatpush.bf16.msra.mxu0 %v4728
    %5193 = vmatpush.bf16.msra.mxu0 %v4722
    %5194 = vmatpush.bf16.msra.mxu0 %v4716
    %5195 = vmatmul.bf16.gmra.mxu0 %v3403
    %v5196 = vpop.f32.mrf.mxu0
    %v5197 = vadd.f32 %v5184, %v5196
    %v5198 = vpop.f32.mrf.mxu0
    %5199 = vdwg.mxu0
    %5200 = vmatpush.bf16.msra.mxu0 %v4806
    %5201 = vmatpush.bf16.msra.mxu0 %v4800
    %5202 = vmatpush.bf16.msra.mxu0 %v4794
    %5203 = vmatpush.bf16.msra.mxu0 %v4788
    %5204 = vmatpush.bf16.msra.mxu0 %v4782
    %5205 = vmatpush.bf16.msra.mxu0 %v4776
    %5206 = vmatpush.bf16.msra.mxu0 %v4770
    %5207 = vmatpush.bf16.msra.mxu0 %v4764
    %5208 = vmatmul.bf16.gmra.mxu0 %v3404
    %v5209 = vpop.f32.mrf.mxu0
    %v5210 = vadd.f32 %v5197, %v5209
    %v5211 = vpop.f32.mrf.mxu0
    %5212 = vdwg.mxu0
    %5213 = vmatpush.bf16.msra.mxu0 %v4854
    %5214 = vmatpush.bf16.msra.mxu0 %v4848
    %5215 = vmatpush.bf16.msra.mxu0 %v4842
    %5216 = vmatpush.bf16.msra.mxu0 %v4836
    %5217 = vmatpush.bf16.msra.mxu0 %v4830
    %5218 = vmatpush.bf16.msra.mxu0 %v4824
    %5219 = vmatpush.bf16.msra.mxu0 %v4818
    %5220 = vmatpush.bf16.msra.mxu0 %v4812
    %5221 = vmatmul.bf16.gmra.mxu0 %v3405
    %v5222 = vpop.f32.mrf.mxu0
    %v5223 = vadd.f32 %v5210, %v5222
    %v5224 = vpop.f32.mrf.mxu0
    %5225 = vdwg.mxu0
    %5226 = vmatpush.bf16.msra.mxu0 %v4615
    %5227 = vmatpush.bf16.msra.mxu0 %v4609
    %5228 = vmatpush.bf16.msra.mxu0 %v4603
    %5229 = vmatpush.bf16.msra.mxu0 %v4597
    %5230 = vmatpush.bf16.msra.mxu0 %v4591
    %5231 = vmatpush.bf16.msra.mxu0 %v4585
    %5232 = vmatpush.bf16.msra.mxu0 %v4579
    %5233 = vmatpush.bf16.msra.mxu0 %v4573
    %5234 = vmatmul.bf16.gmra.mxu0 %v3400
    %v5235 = vpop.f32.mrf.mxu0
    %v5236 = vadd.f32 %v3697, %v5235
    %v5237 = vpop.f32.mrf.mxu0
    %5238 = vdwg.mxu0
    %5239 = vmatpush.bf16.msra.mxu0 %v4663
    %5240 = vmatpush.bf16.msra.mxu0 %v4657
    %5241 = vmatpush.bf16.msra.mxu0 %v4651
    %5242 = vmatpush.bf16.msra.mxu0 %v4645
    %5243 = vmatpush.bf16.msra.mxu0 %v4639
    %5244 = vmatpush.bf16.msra.mxu0 %v4633
    %5245 = vmatpush.bf16.msra.mxu0 %v4627
    %5246 = vmatpush.bf16.msra.mxu0 %v4621
    %5247 = vmatmul.bf16.gmra.mxu0 %v3401
    %v5248 = vpop.f32.mrf.mxu0
    %v5249 = vadd.f32 %v5236, %v5248
    %v5250 = vpop.f32.mrf.mxu0
    %5251 = vdwg.mxu0
    %5252 = vmatpush.bf16.msra.mxu0 %v4711
    %5253 = vmatpush.bf16.msra.mxu0 %v4705
    %5254 = vmatpush.bf16.msra.mxu0 %v4699
    %5255 = vmatpush.bf16.msra.mxu0 %v4693
    %5256 = vmatpush.bf16.msra.mxu0 %v4687
    %5257 = vmatpush.bf16.msra.mxu0 %v4681
    %5258 = vmatpush.bf16.msra.mxu0 %v4675
    %5259 = vmatpush.bf16.msra.mxu0 %v4669
    %5260 = vmatmul.bf16.gmra.mxu0 %v3402
    %v5261 = vpop.f32.mrf.mxu0
    %v5262 = vadd.f32 %v5249, %v5261
    %v5263 = vpop.f32.mrf.mxu0
    %5264 = vdwg.mxu0
    %5265 = vmatpush.bf16.msra.mxu0 %v4759
    %5266 = vmatpush.bf16.msra.mxu0 %v4753
    %5267 = vmatpush.bf16.msra.mxu0 %v4747
    %5268 = vmatpush.bf16.msra.mxu0 %v4741
    %5269 = vmatpush.bf16.msra.mxu0 %v4735
    %5270 = vmatpush.bf16.msra.mxu0 %v4729
    %5271 = vmatpush.bf16.msra.mxu0 %v4723
    %5272 = vmatpush.bf16.msra.mxu0 %v4717
    %5273 = vmatmul.bf16.gmra.mxu0 %v3403
    %v5274 = vpop.f32.mrf.mxu0
    %v5275 = vadd.f32 %v5262, %v5274
    %v5276 = vpop.f32.mrf.mxu0
    %5277 = vdwg.mxu0
    %5278 = vmatpush.bf16.msra.mxu0 %v4807
    %5279 = vmatpush.bf16.msra.mxu0 %v4801
    %5280 = vmatpush.bf16.msra.mxu0 %v4795
    %5281 = vmatpush.bf16.msra.mxu0 %v4789
    %5282 = vmatpush.bf16.msra.mxu0 %v4783
    %5283 = vmatpush.bf16.msra.mxu0 %v4777
    %5284 = vmatpush.bf16.msra.mxu0 %v4771
    %5285 = vmatpush.bf16.msra.mxu0 %v4765
    %5286 = vmatmul.bf16.gmra.mxu0 %v3404
    %v5287 = vpop.f32.mrf.mxu0
    %v5288 = vadd.f32 %v5275, %v5287
    %v5289 = vpop.f32.mrf.mxu0
    %5290 = vdwg.mxu0
    %5291 = vmatpush.bf16.msra.mxu0 %v4855
    %5292 = vmatpush.bf16.msra.mxu0 %v4849
    %5293 = vmatpush.bf16.msra.mxu0 %v4843
    %5294 = vmatpush.bf16.msra.mxu0 %v4837
    %5295 = vmatpush.bf16.msra.mxu0 %v4831
    %5296 = vmatpush.bf16.msra.mxu0 %v4825
    %5297 = vmatpush.bf16.msra.mxu0 %v4819
    %5298 = vmatpush.bf16.msra.mxu0 %v4813
    %5299 = vmatmul.bf16.gmra.mxu0 %v3405
    %v5300 = vpop.f32.mrf.mxu0
    %v5301 = vadd.f32 %v5288, %v5300
    %v5302 = vpop.f32.mrf.mxu0
    %5303 = vdwg.mxu0
    %5304 = vmatpush.bf16.msra.mxu0 %v4616
    %5305 = vmatpush.bf16.msra.mxu0 %v4610
    %5306 = vmatpush.bf16.msra.mxu0 %v4604
    %5307 = vmatpush.bf16.msra.mxu0 %v4598
    %5308 = vmatpush.bf16.msra.mxu0 %v4592
    %5309 = vmatpush.bf16.msra.mxu0 %v4586
    %5310 = vmatpush.bf16.msra.mxu0 %v4580
    %5311 = vmatpush.bf16.msra.mxu0 %v4574
    %5312 = vmatmul.bf16.gmra.mxu0 %v3400
    %v5313 = vpop.f32.mrf.mxu0
    %v5314 = vadd.f32 %v3698, %v5313
    %v5315 = vpop.f32.mrf.mxu0
    %5316 = vdwg.mxu0
    %5317 = vmatpush.bf16.msra.mxu0 %v4664
    %5318 = vmatpush.bf16.msra.mxu0 %v4658
    %5319 = vmatpush.bf16.msra.mxu0 %v4652
    %5320 = vmatpush.bf16.msra.mxu0 %v4646
    %5321 = vmatpush.bf16.msra.mxu0 %v4640
    %5322 = vmatpush.bf16.msra.mxu0 %v4634
    %5323 = vmatpush.bf16.msra.mxu0 %v4628
    %5324 = vmatpush.bf16.msra.mxu0 %v4622
    %5325 = vmatmul.bf16.gmra.mxu0 %v3401
    %v5326 = vpop.f32.mrf.mxu0
    %v5327 = vadd.f32 %v5314, %v5326
    %v5328 = vpop.f32.mrf.mxu0
    %5329 = vdwg.mxu0
    %5330 = vmatpush.bf16.msra.mxu0 %v4712
    %5331 = vmatpush.bf16.msra.mxu0 %v4706
    %5332 = vmatpush.bf16.msra.mxu0 %v4700
    %5333 = vmatpush.bf16.msra.mxu0 %v4694
    %5334 = vmatpush.bf16.msra.mxu0 %v4688
    %5335 = vmatpush.bf16.msra.mxu0 %v4682
    %5336 = vmatpush.bf16.msra.mxu0 %v4676
    %5337 = vmatpush.bf16.msra.mxu0 %v4670
    %5338 = vmatmul.bf16.gmra.mxu0 %v3402
    %v5339 = vpop.f32.mrf.mxu0
    %v5340 = vadd.f32 %v5327, %v5339
    %v5341 = vpop.f32.mrf.mxu0
    %5342 = vdwg.mxu0
    %5343 = vmatpush.bf16.msra.mxu0 %v4760
    %5344 = vmatpush.bf16.msra.mxu0 %v4754
    %5345 = vmatpush.bf16.msra.mxu0 %v4748
    %5346 = vmatpush.bf16.msra.mxu0 %v4742
    %5347 = vmatpush.bf16.msra.mxu0 %v4736
    %5348 = vmatpush.bf16.msra.mxu0 %v4730
    %5349 = vmatpush.bf16.msra.mxu0 %v4724
    %5350 = vmatpush.bf16.msra.mxu0 %v4718
    %5351 = vmatmul.bf16.gmra.mxu0 %v3403
    %v5352 = vpop.f32.mrf.mxu0
    %v5353 = vadd.f32 %v5340, %v5352
    %v5354 = vpop.f32.mrf.mxu0
    %5355 = vdwg.mxu0
    %5356 = vmatpush.bf16.msra.mxu0 %v4808
    %5357 = vmatpush.bf16.msra.mxu0 %v4802
    %5358 = vmatpush.bf16.msra.mxu0 %v4796
    %5359 = vmatpush.bf16.msra.mxu0 %v4790
    %5360 = vmatpush.bf16.msra.mxu0 %v4784
    %5361 = vmatpush.bf16.msra.mxu0 %v4778
    %5362 = vmatpush.bf16.msra.mxu0 %v4772
    %5363 = vmatpush.bf16.msra.mxu0 %v4766
    %5364 = vmatmul.bf16.gmra.mxu0 %v3404
    %v5365 = vpop.f32.mrf.mxu0
    %v5366 = vadd.f32 %v5353, %v5365
    %v5367 = vpop.f32.mrf.mxu0
    %5368 = vdwg.mxu0
    %5369 = vmatpush.bf16.msra.mxu0 %v4856
    %5370 = vmatpush.bf16.msra.mxu0 %v4850
    %5371 = vmatpush.bf16.msra.mxu0 %v4844
    %5372 = vmatpush.bf16.msra.mxu0 %v4838
    %5373 = vmatpush.bf16.msra.mxu0 %v4832
    %5374 = vmatpush.bf16.msra.mxu0 %v4826
    %5375 = vmatpush.bf16.msra.mxu0 %v4820
    %5376 = vmatpush.bf16.msra.mxu0 %v4814
    %5377 = vmatmul.bf16.gmra.mxu0 %v3405
    %v5378 = vpop.f32.mrf.mxu0
    %v5379 = vadd.f32 %v5366, %v5378
    %v5380 = vpop.f32.mrf.mxu0
    %5381 = vdwg.mxu0
    %5382 = vmatpush.bf16.msra.mxu0 %v4617
    %5383 = vmatpush.bf16.msra.mxu0 %v4611
    %5384 = vmatpush.bf16.msra.mxu0 %v4605
    %5385 = vmatpush.bf16.msra.mxu0 %v4599
    %5386 = vmatpush.bf16.msra.mxu0 %v4593
    %5387 = vmatpush.bf16.msra.mxu0 %v4587
    %5388 = vmatpush.bf16.msra.mxu0 %v4581
    %5389 = vmatpush.bf16.msra.mxu0 %v4575
    %5390 = vmatmul.bf16.gmra.mxu0 %v3400
    %v5391 = vpop.f32.mrf.mxu0
    %v5392 = vadd.f32 %v3699, %v5391
    %v5393 = vpop.f32.mrf.mxu0
    %5394 = vdwg.mxu0
    %5395 = vmatpush.bf16.msra.mxu0 %v4665
    %5396 = vmatpush.bf16.msra.mxu0 %v4659
    %5397 = vmatpush.bf16.msra.mxu0 %v4653
    %5398 = vmatpush.bf16.msra.mxu0 %v4647
    %5399 = vmatpush.bf16.msra.mxu0 %v4641
    %5400 = vmatpush.bf16.msra.mxu0 %v4635
    %5401 = vmatpush.bf16.msra.mxu0 %v4629
    %5402 = vmatpush.bf16.msra.mxu0 %v4623
    %5403 = vmatmul.bf16.gmra.mxu0 %v3401
    %v5404 = vpop.f32.mrf.mxu0
    %v5405 = vadd.f32 %v5392, %v5404
    %v5406 = vpop.f32.mrf.mxu0
    %5407 = vdwg.mxu0
    %5408 = vmatpush.bf16.msra.mxu0 %v4713
    %5409 = vmatpush.bf16.msra.mxu0 %v4707
    %5410 = vmatpush.bf16.msra.mxu0 %v4701
    %5411 = vmatpush.bf16.msra.mxu0 %v4695
    %5412 = vmatpush.bf16.msra.mxu0 %v4689
    %5413 = vmatpush.bf16.msra.mxu0 %v4683
    %5414 = vmatpush.bf16.msra.mxu0 %v4677
    %5415 = vmatpush.bf16.msra.mxu0 %v4671
    %5416 = vmatmul.bf16.gmra.mxu0 %v3402
    %v5417 = vpop.f32.mrf.mxu0
    %v5418 = vadd.f32 %v5405, %v5417
    %v5419 = vpop.f32.mrf.mxu0
    %5420 = vdwg.mxu0
    %5421 = vmatpush.bf16.msra.mxu0 %v4761
    %5422 = vmatpush.bf16.msra.mxu0 %v4755
    %5423 = vmatpush.bf16.msra.mxu0 %v4749
    %5424 = vmatpush.bf16.msra.mxu0 %v4743
    %5425 = vmatpush.bf16.msra.mxu0 %v4737
    %5426 = vmatpush.bf16.msra.mxu0 %v4731
    %5427 = vmatpush.bf16.msra.mxu0 %v4725
    %5428 = vmatpush.bf16.msra.mxu0 %v4719
    %5429 = vmatmul.bf16.gmra.mxu0 %v3403
    %v5430 = vpop.f32.mrf.mxu0
    %v5431 = vadd.f32 %v5418, %v5430
    %v5432 = vpop.f32.mrf.mxu0
    %5433 = vdwg.mxu0
    %5434 = vmatpush.bf16.msra.mxu0 %v4809
    %5435 = vmatpush.bf16.msra.mxu0 %v4803
    %5436 = vmatpush.bf16.msra.mxu0 %v4797
    %5437 = vmatpush.bf16.msra.mxu0 %v4791
    %5438 = vmatpush.bf16.msra.mxu0 %v4785
    %5439 = vmatpush.bf16.msra.mxu0 %v4779
    %5440 = vmatpush.bf16.msra.mxu0 %v4773
    %5441 = vmatpush.bf16.msra.mxu0 %v4767
    %5442 = vmatmul.bf16.gmra.mxu0 %v3404
    %v5443 = vpop.f32.mrf.mxu0
    %v5444 = vadd.f32 %v5431, %v5443
    %v5445 = vpop.f32.mrf.mxu0
    %5446 = vdwg.mxu0
    %5447 = vmatpush.bf16.msra.mxu0 %v4857
    %5448 = vmatpush.bf16.msra.mxu0 %v4851
    %5449 = vmatpush.bf16.msra.mxu0 %v4845
    %5450 = vmatpush.bf16.msra.mxu0 %v4839
    %5451 = vmatpush.bf16.msra.mxu0 %v4833
    %5452 = vmatpush.bf16.msra.mxu0 %v4827
    %5453 = vmatpush.bf16.msra.mxu0 %v4821
    %5454 = vmatpush.bf16.msra.mxu0 %v4815
    %5455 = vmatmul.bf16.gmra.mxu0 %v3405
    %v5456 = vpop.f32.mrf.mxu0
    %v5457 = vadd.f32 %v5444, %v5456
    %v5458 = vpop.f32.mrf.mxu0
    %5459 = vdwg.mxu0
    %5460 = vmatpush.bf16.msra.mxu0 %v4618
    %5461 = vmatpush.bf16.msra.mxu0 %v4612
    %5462 = vmatpush.bf16.msra.mxu0 %v4606
    %5463 = vmatpush.bf16.msra.mxu0 %v4600
    %5464 = vmatpush.bf16.msra.mxu0 %v4594
    %5465 = vmatpush.bf16.msra.mxu0 %v4588
    %5466 = vmatpush.bf16.msra.mxu0 %v4582
    %5467 = vmatpush.bf16.msra.mxu0 %v4576
    %5468 = vmatmul.bf16.gmra.mxu0 %v3400
    %v5469 = vpop.f32.mrf.mxu0
    %v5470 = vadd.f32 %v3700, %v5469
    %v5471 = vpop.f32.mrf.mxu0
    %5472 = vdwg.mxu0
    %5473 = vmatpush.bf16.msra.mxu0 %v4666
    %5474 = vmatpush.bf16.msra.mxu0 %v4660
    %5475 = vmatpush.bf16.msra.mxu0 %v4654
    %5476 = vmatpush.bf16.msra.mxu0 %v4648
    %5477 = vmatpush.bf16.msra.mxu0 %v4642
    %5478 = vmatpush.bf16.msra.mxu0 %v4636
    %5479 = vmatpush.bf16.msra.mxu0 %v4630
    %5480 = vmatpush.bf16.msra.mxu0 %v4624
    %5481 = vmatmul.bf16.gmra.mxu0 %v3401
    %v5482 = vpop.f32.mrf.mxu0
    %v5483 = vadd.f32 %v5470, %v5482
    %v5484 = vpop.f32.mrf.mxu0
    %5485 = vdwg.mxu0
    %5486 = vmatpush.bf16.msra.mxu0 %v4714
    %5487 = vmatpush.bf16.msra.mxu0 %v4708
    %5488 = vmatpush.bf16.msra.mxu0 %v4702
    %5489 = vmatpush.bf16.msra.mxu0 %v4696
    %5490 = vmatpush.bf16.msra.mxu0 %v4690
    %5491 = vmatpush.bf16.msra.mxu0 %v4684
    %5492 = vmatpush.bf16.msra.mxu0 %v4678
    %5493 = vmatpush.bf16.msra.mxu0 %v4672
    %5494 = vmatmul.bf16.gmra.mxu0 %v3402
    %v5495 = vpop.f32.mrf.mxu0
    %v5496 = vadd.f32 %v5483, %v5495
    %v5497 = vpop.f32.mrf.mxu0
    %5498 = vdwg.mxu0
    %5499 = vmatpush.bf16.msra.mxu0 %v4762
    %5500 = vmatpush.bf16.msra.mxu0 %v4756
    %5501 = vmatpush.bf16.msra.mxu0 %v4750
    %5502 = vmatpush.bf16.msra.mxu0 %v4744
    %5503 = vmatpush.bf16.msra.mxu0 %v4738
    %5504 = vmatpush.bf16.msra.mxu0 %v4732
    %5505 = vmatpush.bf16.msra.mxu0 %v4726
    %5506 = vmatpush.bf16.msra.mxu0 %v4720
    %5507 = vmatmul.bf16.gmra.mxu0 %v3403
    %v5508 = vpop.f32.mrf.mxu0
    %v5509 = vadd.f32 %v5496, %v5508
    %v5510 = vpop.f32.mrf.mxu0
    %5511 = vdwg.mxu0
    %5512 = vmatpush.bf16.msra.mxu0 %v4810
    %5513 = vmatpush.bf16.msra.mxu0 %v4804
    %5514 = vmatpush.bf16.msra.mxu0 %v4798
    %5515 = vmatpush.bf16.msra.mxu0 %v4792
    %5516 = vmatpush.bf16.msra.mxu0 %v4786
    %5517 = vmatpush.bf16.msra.mxu0 %v4780
    %5518 = vmatpush.bf16.msra.mxu0 %v4774
    %5519 = vmatpush.bf16.msra.mxu0 %v4768
    %5520 = vmatmul.bf16.gmra.mxu0 %v3404
    %v5521 = vpop.f32.mrf.mxu0
    %v5522 = vadd.f32 %v5509, %v5521
    %v5523 = vpop.f32.mrf.mxu0
    %5524 = vdwg.mxu0
    %5525 = vmatpush.bf16.msra.mxu0 %v4858
    %5526 = vmatpush.bf16.msra.mxu0 %v4852
    %5527 = vmatpush.bf16.msra.mxu0 %v4846
    %5528 = vmatpush.bf16.msra.mxu0 %v4840
    %5529 = vmatpush.bf16.msra.mxu0 %v4834
    %5530 = vmatpush.bf16.msra.mxu0 %v4828
    %5531 = vmatpush.bf16.msra.mxu0 %v4822
    %5532 = vmatpush.bf16.msra.mxu0 %v4816
    %5533 = vmatmul.bf16.gmra.mxu0 %v3405
    %v5534 = vpop.f32.mrf.mxu0
    %v5535 = vadd.f32 %v5522, %v5534
    %v5536 = vpop.f32.mrf.mxu0
    %5537 = vdwg.mxu0
    %5538 = vmatpush.bf16.msra.mxu0 %v4619
    %5539 = vmatpush.bf16.msra.mxu0 %v4613
    %5540 = vmatpush.bf16.msra.mxu0 %v4607
    %5541 = vmatpush.bf16.msra.mxu0 %v4601
    %5542 = vmatpush.bf16.msra.mxu0 %v4595
    %5543 = vmatpush.bf16.msra.mxu0 %v4589
    %5544 = vmatpush.bf16.msra.mxu0 %v4583
    %5545 = vmatpush.bf16.msra.mxu0 %v4577
    %5546 = vmatmul.bf16.gmra.mxu0 %v3400
    %v5547 = vpop.f32.mrf.mxu0
    %v5548 = vadd.f32 %v3701, %v5547
    %v5549 = vpop.f32.mrf.mxu0
    %5550 = vdwg.mxu0
    %5551 = vmatpush.bf16.msra.mxu0 %v4667
    %5552 = vmatpush.bf16.msra.mxu0 %v4661
    %5553 = vmatpush.bf16.msra.mxu0 %v4655
    %5554 = vmatpush.bf16.msra.mxu0 %v4649
    %5555 = vmatpush.bf16.msra.mxu0 %v4643
    %5556 = vmatpush.bf16.msra.mxu0 %v4637
    %5557 = vmatpush.bf16.msra.mxu0 %v4631
    %5558 = vmatpush.bf16.msra.mxu0 %v4625
    %5559 = vmatmul.bf16.gmra.mxu0 %v3401
    %v5560 = vpop.f32.mrf.mxu0
    %v5561 = vadd.f32 %v5548, %v5560
    %v5562 = vpop.f32.mrf.mxu0
    %5563 = vdwg.mxu0
    %5564 = vmatpush.bf16.msra.mxu0 %v4715
    %5565 = vmatpush.bf16.msra.mxu0 %v4709
    %5566 = vmatpush.bf16.msra.mxu0 %v4703
    %5567 = vmatpush.bf16.msra.mxu0 %v4697
    %5568 = vmatpush.bf16.msra.mxu0 %v4691
    %5569 = vmatpush.bf16.msra.mxu0 %v4685
    %5570 = vmatpush.bf16.msra.mxu0 %v4679
    %5571 = vmatpush.bf16.msra.mxu0 %v4673
    %5572 = vmatmul.bf16.gmra.mxu0 %v3402
    %v5573 = vpop.f32.mrf.mxu0
    %v5574 = vadd.f32 %v5561, %v5573
    %v5575 = vpop.f32.mrf.mxu0
    %5576 = vdwg.mxu0
    %5577 = vmatpush.bf16.msra.mxu0 %v4763
    %5578 = vmatpush.bf16.msra.mxu0 %v4757
    %5579 = vmatpush.bf16.msra.mxu0 %v4751
    %5580 = vmatpush.bf16.msra.mxu0 %v4745
    %5581 = vmatpush.bf16.msra.mxu0 %v4739
    %5582 = vmatpush.bf16.msra.mxu0 %v4733
    %5583 = vmatpush.bf16.msra.mxu0 %v4727
    %5584 = vmatpush.bf16.msra.mxu0 %v4721
    %5585 = vmatmul.bf16.gmra.mxu0 %v3403
    %v5586 = vpop.f32.mrf.mxu0
    %v5587 = vadd.f32 %v5574, %v5586
    %v5588 = vpop.f32.mrf.mxu0
    %5589 = vdwg.mxu0
    %5590 = vmatpush.bf16.msra.mxu0 %v4811
    %5591 = vmatpush.bf16.msra.mxu0 %v4805
    %5592 = vmatpush.bf16.msra.mxu0 %v4799
    %5593 = vmatpush.bf16.msra.mxu0 %v4793
    %5594 = vmatpush.bf16.msra.mxu0 %v4787
    %5595 = vmatpush.bf16.msra.mxu0 %v4781
    %5596 = vmatpush.bf16.msra.mxu0 %v4775
    %5597 = vmatpush.bf16.msra.mxu0 %v4769
    %5598 = vmatmul.bf16.gmra.mxu0 %v3404
    %v5599 = vpop.f32.mrf.mxu0
    %v5600 = vadd.f32 %v5587, %v5599
    %v5601 = vpop.f32.mrf.mxu0
    %5602 = vdwg.mxu0
    %5603 = vmatpush.bf16.msra.mxu0 %v4859
    %5604 = vmatpush.bf16.msra.mxu0 %v4853
    %5605 = vmatpush.bf16.msra.mxu0 %v4847
    %5606 = vmatpush.bf16.msra.mxu0 %v4841
    %5607 = vmatpush.bf16.msra.mxu0 %v4835
    %5608 = vmatpush.bf16.msra.mxu0 %v4829
    %5609 = vmatpush.bf16.msra.mxu0 %v4823
    %5610 = vmatpush.bf16.msra.mxu0 %v4817
    %5611 = vmatmul.bf16.gmra.mxu0 %v3405
    %v5612 = vpop.f32.mrf.mxu0
    %v5613 = vadd.f32 %v5600, %v5612
    %v5614 = vpop.f32.mrf.mxu0
    %5615 = vdwg.mxu0
    %v5616 = vmax.f32 %v5223, 0.0
    %v5617 = vmax.f32 %v5301, 0.0
    %v5618 = vmax.f32 %v5379, 0.0
    %v5619 = vmax.f32 %v5457, 0.0
    %v5620 = vmax.f32 %v5535, 0.0
    %v5621 = vmax.f32 %v5613, 0.0
    %v5622 = vpack.c.bf16 %v5616, %v5616
    %v5623 = vpack.c.bf16 %v5617, %v5617
    %v5624 = vpack.c.bf16 %v5618, %v5618
    %v5625 = vpack.c.bf16 %v5619, %v5619
    %v5626 = vpack.c.bf16 %v5620, %v5620
    %v5627 = vpack.c.bf16 %v5621, %v5621
    %v5628 = vld [vmem:[%s14] sm:$0xf]
    %v5629 = vld [vmem:[%s14 + $0x4] sm:$0xf]
    %v5630 = vld [vmem:[%s14 + $0x8] sm:$0xf]
    %v5631 = vld [vmem:[%s14 + $0xc] sm:$0xf]
    %v5632 = vld [vmem:[%s14 + $0x10] sm:$0xf]
    %v5633 = vld [vmem:[%s14 + $0x14] sm:$0xf]
    %v5634 = vld [vmem:[%s14 + $0x18] sm:$0xf]
    %v5635 = vld [vmem:[%s14 + $0x1c] sm:$0xf]
    %v5636 = vld [vmem:[%s14 + $0x20] sm:$0xf]
    %v5637 = vld [vmem:[%s14 + $0x24] sm:$0xf]
    %v5638 = vld [vmem:[%s14 + $0x28] sm:$0xf]
    %v5639 = vld [vmem:[%s14 + $0x2c] sm:$0xf]
    %v5640 = vld [vmem:[%s14 + $0x30] sm:$0xf]
    %v5641 = vld [vmem:[%s14 + $0x34] sm:$0xf]
    %v5642 = vld [vmem:[%s14 + $0x38] sm:$0xf]
    %v5643 = vld [vmem:[%s14 + $0x3c] sm:$0xf]
    %v5644 = vld [vmem:[%s14 + $0x40] sm:$0xf]
    %v5645 = vld [vmem:[%s14 + $0x44] sm:$0xf]
    %v5646 = vld [vmem:[%s14 + $0x48] sm:$0xf]
    %v5647 = vld [vmem:[%s14 + $0x4c] sm:$0xf]
    %v5648 = vld [vmem:[%s14 + $0x50] sm:$0xf]
    %v5649 = vld [vmem:[%s14 + $0x54] sm:$0xf]
    %v5650 = vld [vmem:[%s14 + $0x58] sm:$0xf]
    %v5651 = vld [vmem:[%s14 + $0x5c] sm:$0xf]
    %v5652 = vld [vmem:[%s14 + $0x60] sm:$0xf]
    %v5653 = vld [vmem:[%s14 + $0x64] sm:$0xf]
    %v5654 = vld [vmem:[%s14 + $0x68] sm:$0xf]
    %v5655 = vld [vmem:[%s14 + $0x6c] sm:$0xf]
    %v5656 = vld [vmem:[%s14 + $0x70] sm:$0xf]
    %v5657 = vld [vmem:[%s14 + $0x74] sm:$0xf]
    %v5658 = vld [vmem:[%s14 + $0x78] sm:$0xf]
    %v5659 = vld [vmem:[%s14 + $0x7c] sm:$0xf]
    %v5660 = vld [vmem:[%s14 + $0x80] sm:$0xf]
    %v5661 = vld [vmem:[%s14 + $0x84] sm:$0xf]
    %v5662 = vld [vmem:[%s14 + $0x88] sm:$0xf]
    %v5663 = vld [vmem:[%s14 + $0x8c] sm:$0xf]
    %v5664 = vld [vmem:[%s14 + $0x90] sm:$0xf]
    %v5665 = vld [vmem:[%s14 + $0x94] sm:$0xf]
    %v5666 = vld [vmem:[%s14 + $0x98] sm:$0xf]
    %v5667 = vld [vmem:[%s14 + $0x9c] sm:$0xf]
    %v5668 = vld [vmem:[%s14 + $0xa0] sm:$0xf]
    %v5669 = vld [vmem:[%s14 + $0xa4] sm:$0xf]
    %v5670 = vld [vmem:[%s14 + $0xa8] sm:$0xf]
    %v5671 = vld [vmem:[%s14 + $0xac] sm:$0xf]
    %v5672 = vld [vmem:[%s14 + $0xb0] sm:$0xf]
    %v5673 = vld [vmem:[%s14 + $0xb4] sm:$0xf]
    %v5674 = vld [vmem:[%s14 + $0xb8] sm:$0xf]
    %v5675 = vld [vmem:[%s14 + $0xbc] sm:$0xf]
    %v5676 = vld [vmem:[%s14 + $0xc0] sm:$0xf]
    %v5677 = vld [vmem:[%s14 + $0xc4] sm:$0xf]
    %v5678 = vld [vmem:[%s14 + $0xc8] sm:$0xf]
    %v5679 = vld [vmem:[%s14 + $0xcc] sm:$0xf]
    %v5680 = vld [vmem:[%s14 + $0xd0] sm:$0xf]
    %v5681 = vld [vmem:[%s14 + $0xd4] sm:$0xf]
    %v5682 = vld [vmem:[%s14 + $0xd8] sm:$0xf]
    %v5683 = vld [vmem:[%s14 + $0xdc] sm:$0xf]
    %v5684 = vld [vmem:[%s14 + $0xe0] sm:$0xf]
    %v5685 = vld [vmem:[%s14 + $0xe4] sm:$0xf]
    %v5686 = vld [vmem:[%s14 + $0xe8] sm:$0xf]
    %v5687 = vld [vmem:[%s14 + $0xec] sm:$0xf]
    %v5688 = vld [vmem:[%s14 + $0xf0] sm:$0xf]
    %v5689 = vld [vmem:[%s14 + $0xf4] sm:$0xf]
    %v5690 = vld [vmem:[%s14 + $0xf8] sm:$0xf]
    %v5691 = vld [vmem:[%s14 + $0xfc] sm:$0xf]
    %v5692 = vld [vmem:[%s14 + $0x100] sm:$0xf]
    %v5693 = vld [vmem:[%s14 + $0x104] sm:$0xf]
    %v5694 = vld [vmem:[%s14 + $0x108] sm:$0xf]
    %v5695 = vld [vmem:[%s14 + $0x10c] sm:$0xf]
    %v5696 = vld [vmem:[%s14 + $0x110] sm:$0xf]
    %v5697 = vld [vmem:[%s14 + $0x114] sm:$0xf]
    %v5698 = vld [vmem:[%s14 + $0x118] sm:$0xf]
    %v5699 = vld [vmem:[%s14 + $0x11c] sm:$0xf]
    %v5700 = vld [vmem:[%s14 + $0x120] sm:$0xf]
    %v5701 = vld [vmem:[%s14 + $0x124] sm:$0xf]
    %v5702 = vld [vmem:[%s14 + $0x128] sm:$0xf]
    %v5703 = vld [vmem:[%s14 + $0x12c] sm:$0xf]
    %v5704 = vld [vmem:[%s14 + $0x130] sm:$0xf]
    %v5705 = vld [vmem:[%s14 + $0x134] sm:$0xf]
    %v5706 = vld [vmem:[%s14 + $0x138] sm:$0xf]
    %v5707 = vld [vmem:[%s14 + $0x13c] sm:$0xf]
    %v5708 = vld [vmem:[%s14 + $0x140] sm:$0xf]
    %v5709 = vld [vmem:[%s14 + $0x144] sm:$0xf]
    %v5710 = vld [vmem:[%s14 + $0x148] sm:$0xf]
    %v5711 = vld [vmem:[%s14 + $0x14c] sm:$0xf]
    %v5712 = vld [vmem:[%s14 + $0x150] sm:$0xf]
    %v5713 = vld [vmem:[%s14 + $0x154] sm:$0xf]
    %v5714 = vld [vmem:[%s14 + $0x158] sm:$0xf]
    %v5715 = vld [vmem:[%s14 + $0x15c] sm:$0xf]
    %v5716 = vld [vmem:[%s14 + $0x160] sm:$0xf]
    %v5717 = vld [vmem:[%s14 + $0x164] sm:$0xf]
    %v5718 = vld [vmem:[%s14 + $0x168] sm:$0xf]
    %v5719 = vld [vmem:[%s14 + $0x16c] sm:$0xf]
    %v5720 = vld [vmem:[%s14 + $0x170] sm:$0xf]
    %v5721 = vld [vmem:[%s14 + $0x174] sm:$0xf]
    %v5722 = vld [vmem:[%s14 + $0x178] sm:$0xf]
    %v5723 = vld [vmem:[%s14 + $0x17c] sm:$0xf]
    %v5724 = vld [vmem:[#allocation18] sm:$0x1]
    %v5726 = vperm.slane %v5724, 0
    %v5824 = vunpack.c.l.b16 %v5628
    %v5825 = vunpack.c.l.b16 %v5629
    %v5826 = vunpack.c.l.b16 %v5630
    %v5827 = vunpack.c.l.b16 %v5631
    %v5828 = vunpack.c.l.b16 %v5632
    %v5829 = vunpack.c.l.b16 %v5633
    %v5830 = vunpack.c.l.b16 %v5634
    %v5831 = vunpack.c.l.b16 %v5635
    %v5832 = vunpack.c.l.b16 %v5636
    %v5833 = vunpack.c.l.b16 %v5637
    %v5834 = vunpack.c.l.b16 %v5638
    %v5835 = vunpack.c.l.b16 %v5639
    %v5836 = vunpack.c.l.b16 %v5640
    %v5837 = vunpack.c.l.b16 %v5641
    %v5838 = vunpack.c.l.b16 %v5642
    %v5839 = vunpack.c.l.b16 %v5643
    %v5840 = vunpack.c.l.b16 %v5644
    %v5841 = vunpack.c.l.b16 %v5645
    %v5842 = vunpack.c.l.b16 %v5646
    %v5843 = vunpack.c.l.b16 %v5647
    %v5844 = vunpack.c.l.b16 %v5648
    %v5845 = vunpack.c.l.b16 %v5649
    %v5846 = vunpack.c.l.b16 %v5650
    %v5847 = vunpack.c.l.b16 %v5651
    %v5848 = vunpack.c.l.b16 %v5652
    %v5849 = vunpack.c.l.b16 %v5653
    %v5850 = vunpack.c.l.b16 %v5654
    %v5851 = vunpack.c.l.b16 %v5655
    %v5852 = vunpack.c.l.b16 %v5656
    %v5853 = vunpack.c.l.b16 %v5657
    %v5854 = vunpack.c.l.b16 %v5658
    %v5855 = vunpack.c.l.b16 %v5659
    %v5856 = vunpack.c.l.b16 %v5660
    %v5857 = vunpack.c.l.b16 %v5661
    %v5858 = vunpack.c.l.b16 %v5662
    %v5859 = vunpack.c.l.b16 %v5663
    %v5860 = vunpack.c.l.b16 %v5664
    %v5861 = vunpack.c.l.b16 %v5665
    %v5862 = vunpack.c.l.b16 %v5666
    %v5863 = vunpack.c.l.b16 %v5667
    %v5864 = vunpack.c.l.b16 %v5668
    %v5865 = vunpack.c.l.b16 %v5669
    %v5866 = vunpack.c.l.b16 %v5670
    %v5867 = vunpack.c.l.b16 %v5671
    %v5868 = vunpack.c.l.b16 %v5672
    %v5869 = vunpack.c.l.b16 %v5673
    %v5870 = vunpack.c.l.b16 %v5674
    %v5871 = vunpack.c.l.b16 %v5675
    %v5872 = vunpack.c.l.b16 %v5676
    %v5873 = vunpack.c.l.b16 %v5677
    %v5874 = vunpack.c.l.b16 %v5678
    %v5875 = vunpack.c.l.b16 %v5679
    %v5876 = vunpack.c.l.b16 %v5680
    %v5877 = vunpack.c.l.b16 %v5681
    %v5878 = vunpack.c.l.b16 %v5682
    %v5879 = vunpack.c.l.b16 %v5683
    %v5880 = vunpack.c.l.b16 %v5684
    %v5881 = vunpack.c.l.b16 %v5685
    %v5882 = vunpack.c.l.b16 %v5686
    %v5883 = vunpack.c.l.b16 %v5687
    %v5884 = vunpack.c.l.b16 %v5688
    %v5885 = vunpack.c.l.b16 %v5689
    %v5886 = vunpack.c.l.b16 %v5690
    %v5887 = vunpack.c.l.b16 %v5691
    %v5888 = vunpack.c.l.b16 %v5692
    %v5889 = vunpack.c.l.b16 %v5693
    %v5890 = vunpack.c.l.b16 %v5694
    %v5891 = vunpack.c.l.b16 %v5695
    %v5892 = vunpack.c.l.b16 %v5696
    %v5893 = vunpack.c.l.b16 %v5697
    %v5894 = vunpack.c.l.b16 %v5698
    %v5895 = vunpack.c.l.b16 %v5699
    %v5896 = vunpack.c.l.b16 %v5700
    %v5897 = vunpack.c.l.b16 %v5701
    %v5898 = vunpack.c.l.b16 %v5702
    %v5899 = vunpack.c.l.b16 %v5703
    %v5900 = vunpack.c.l.b16 %v5704
    %v5901 = vunpack.c.l.b16 %v5705
    %v5902 = vunpack.c.l.b16 %v5706
    %v5903 = vunpack.c.l.b16 %v5707
    %v5904 = vunpack.c.l.b16 %v5708
    %v5905 = vunpack.c.l.b16 %v5709
    %v5906 = vunpack.c.l.b16 %v5710
    %v5907 = vunpack.c.l.b16 %v5711
    %v5908 = vunpack.c.l.b16 %v5712
    %v5909 = vunpack.c.l.b16 %v5713
    %v5910 = vunpack.c.l.b16 %v5714
    %v5911 = vunpack.c.l.b16 %v5715
    %v5912 = vunpack.c.l.b16 %v5716
    %v5913 = vunpack.c.l.b16 %v5717
    %v5914 = vunpack.c.l.b16 %v5718
    %v5915 = vunpack.c.l.b16 %v5719
    %v5916 = vunpack.c.l.b16 %v5720
    %v5917 = vunpack.c.l.b16 %v5721
    %v5918 = vunpack.c.l.b16 %v5722
    %v5919 = vunpack.c.l.b16 %v5723
    %v5920 = vpack.c.b16 %v5825, %v5824
    %v5921 = vpack.c.b16 %v5827, %v5826
    %v5922 = vpack.c.b16 %v5829, %v5828
    %v5923 = vpack.c.b16 %v5831, %v5830
    %v5924 = vpack.c.b16 %v5833, %v5832
    %v5925 = vpack.c.b16 %v5835, %v5834
    %v5926 = vpack.c.b16 %v5837, %v5836
    %v5927 = vpack.c.b16 %v5839, %v5838
    %v5928 = vpack.c.b16 %v5841, %v5840
    %v5929 = vpack.c.b16 %v5843, %v5842
    %v5930 = vpack.c.b16 %v5845, %v5844
    %v5931 = vpack.c.b16 %v5847, %v5846
    %v5932 = vpack.c.b16 %v5849, %v5848
    %v5933 = vpack.c.b16 %v5851, %v5850
    %v5934 = vpack.c.b16 %v5853, %v5852
    %v5935 = vpack.c.b16 %v5855, %v5854
    %v5936 = vpack.c.b16 %v5857, %v5856
    %v5937 = vpack.c.b16 %v5859, %v5858
    %v5938 = vpack.c.b16 %v5861, %v5860
    %v5939 = vpack.c.b16 %v5863, %v5862
    %v5940 = vpack.c.b16 %v5865, %v5864
    %v5941 = vpack.c.b16 %v5867, %v5866
    %v5942 = vpack.c.b16 %v5869, %v5868
    %v5943 = vpack.c.b16 %v5871, %v5870
    %v5944 = vpack.c.b16 %v5873, %v5872
    %v5945 = vpack.c.b16 %v5875, %v5874
    %v5946 = vpack.c.b16 %v5877, %v5876
    %v5947 = vpack.c.b16 %v5879, %v5878
    %v5948 = vpack.c.b16 %v5881, %v5880
    %v5949 = vpack.c.b16 %v5883, %v5882
    %v5950 = vpack.c.b16 %v5885, %v5884
    %v5951 = vpack.c.b16 %v5887, %v5886
    %v5952 = vpack.c.b16 %v5889, %v5888
    %v5953 = vpack.c.b16 %v5891, %v5890
    %v5954 = vpack.c.b16 %v5893, %v5892
    %v5955 = vpack.c.b16 %v5895, %v5894
    %v5956 = vpack.c.b16 %v5897, %v5896
    %v5957 = vpack.c.b16 %v5899, %v5898
    %v5958 = vpack.c.b16 %v5901, %v5900
    %v5959 = vpack.c.b16 %v5903, %v5902
    %v5960 = vpack.c.b16 %v5905, %v5904
    %v5961 = vpack.c.b16 %v5907, %v5906
    %v5962 = vpack.c.b16 %v5909, %v5908
    %v5963 = vpack.c.b16 %v5911, %v5910
    %v5964 = vpack.c.b16 %v5913, %v5912
    %v5965 = vpack.c.b16 %v5915, %v5914
    %v5966 = vpack.c.b16 %v5917, %v5916
    %v5967 = vpack.c.b16 %v5919, %v5918
    %6016 = vmatpush.bf16.msra.mxu0 %v5927
    %6017 = vmatpush.bf16.msra.mxu0 %v5926
    %6018 = vmatpush.bf16.msra.mxu0 %v5925
    %6019 = vmatpush.bf16.msra.mxu0 %v5924
    %6020 = vmatpush.bf16.msra.mxu0 %v5923
    %6021 = vmatpush.bf16.msra.mxu0 %v5922
    %6022 = vmatpush.bf16.msra.mxu0 %v5921
    %6023 = vmatpush.bf16.msra.mxu0 %v5920
    %6024 = vmatmul.bf16.gmra.mxu0 %v5622
    %v6025 = vpop.f32.mrf.mxu0
    %v6026 = vadd.f32 %v5726, %v6025
    %v6027 = vpop.f32.mrf.mxu0
    %6028 = vdwg.mxu0
    %6029 = vmatpush.bf16.msra.mxu0 %v5935
    %6030 = vmatpush.bf16.msra.mxu0 %v5934
    %6031 = vmatpush.bf16.msra.mxu0 %v5933
    %6032 = vmatpush.bf16.msra.mxu0 %v5932
    %6033 = vmatpush.bf16.msra.mxu0 %v5931
    %6034 = vmatpush.bf16.msra.mxu0 %v5930
    %6035 = vmatpush.bf16.msra.mxu0 %v5929
    %6036 = vmatpush.bf16.msra.mxu0 %v5928
    %6037 = vmatmul.bf16.gmra.mxu0 %v5623
    %v6038 = vpop.f32.mrf.mxu0
    %v6039 = vadd.f32 %v6026, %v6038
    %v6040 = vpop.f32.mrf.mxu0
    %6041 = vdwg.mxu0
    %6042 = vmatpush.bf16.msra.mxu0 %v5943
    %6043 = vmatpush.bf16.msra.mxu0 %v5942
    %6044 = vmatpush.bf16.msra.mxu0 %v5941
    %6045 = vmatpush.bf16.msra.mxu0 %v5940
    %6046 = vmatpush.bf16.msra.mxu0 %v5939
    %6047 = vmatpush.bf16.msra.mxu0 %v5938
    %6048 = vmatpush.bf16.msra.mxu0 %v5937
    %6049 = vmatpush.bf16.msra.mxu0 %v5936
    %6050 = vmatmul.bf16.gmra.mxu0 %v5624
    %v6051 = vpop.f32.mrf.mxu0
    %v6052 = vadd.f32 %v6039, %v6051
    %v6053 = vpop.f32.mrf.mxu0
    %6054 = vdwg.mxu0
    %6055 = vmatpush.bf16.msra.mxu0 %v5951
    %6056 = vmatpush.bf16.msra.mxu0 %v5950
    %6057 = vmatpush.bf16.msra.mxu0 %v5949
    %6058 = vmatpush.bf16.msra.mxu0 %v5948
    %6059 = vmatpush.bf16.msra.mxu0 %v5947
    %6060 = vmatpush.bf16.msra.mxu0 %v5946
    %6061 = vmatpush.bf16.msra.mxu0 %v5945
    %6062 = vmatpush.bf16.msra.mxu0 %v5944
    %6063 = vmatmul.bf16.gmra.mxu0 %v5625
    %v6064 = vpop.f32.mrf.mxu0
    %v6065 = vadd.f32 %v6052, %v6064
    %v6066 = vpop.f32.mrf.mxu0
    %6067 = vdwg.mxu0
    %6068 = vmatpush.bf16.msra.mxu0 %v5959
    %6069 = vmatpush.bf16.msra.mxu0 %v5958
    %6070 = vmatpush.bf16.msra.mxu0 %v5957
    %6071 = vmatpush.bf16.msra.mxu0 %v5956
    %6072 = vmatpush.bf16.msra.mxu0 %v5955
    %6073 = vmatpush.bf16.msra.mxu0 %v5954
    %6074 = vmatpush.bf16.msra.mxu0 %v5953
    %6075 = vmatpush.bf16.msra.mxu0 %v5952
    %6076 = vmatmul.bf16.gmra.mxu0 %v5626
    %v6077 = vpop.f32.mrf.mxu0
    %v6078 = vadd.f32 %v6065, %v6077
    %v6079 = vpop.f32.mrf.mxu0
    %6080 = vdwg.mxu0
    %6081 = vmatpush.bf16.msra.mxu0 %v5967
    %6082 = vmatpush.bf16.msra.mxu0 %v5966
    %6083 = vmatpush.bf16.msra.mxu0 %v5965
    %6084 = vmatpush.bf16.msra.mxu0 %v5964
    %6085 = vmatpush.bf16.msra.mxu0 %v5963
    %6086 = vmatpush.bf16.msra.mxu0 %v5962
    %6087 = vmatpush.bf16.msra.mxu0 %v5961
    %6088 = vmatpush.bf16.msra.mxu0 %v5960
    %6089 = vmatmul.bf16.gmra.mxu0 %v5627
    %v6090 = vpop.f32.mrf.mxu0
    %v6091 = vadd.f32 %v6078, %v6090
    %v6092 = vpop.f32.mrf.mxu0
    %6093 = vdwg.mxu0
    %v6094 = vtanh.pop %v6091
    %v6095 = vadd.f32 %v6094, %v3098
    %6096 = vst.msk [vmem:[%s16] sm:$0xff] %vm3161, %v6095
    // Predicated region
    $region110: #{vae_forward.1} parent=1 // pred_check
      _
    $region111: #{vae_forward.1} parent=1 // pred_check_branch
      %6098 = sbr.rel (0) target = $region113
    $region112: #{vae_forward.1} parent=1 // pred_region
      _
    $region113: #{vae_forward.1} parent=1 // pred_fallthru
      _
    // Predicated region
    $region114: #{vae_forward.1} parent=1 // pred_check
      _
    $region115: #{vae_forward.1} parent=1 // pred_check_branch
      %6100 = sbr.rel (0) target = $region117
    $region116: #{vae_forward.1} parent=1 // pred_region
      _
    $region117: #{vae_forward.1} parent=1 // pred_fallthru
      _
    %6101 = vsyncpa [#allocation3], 1
    %6102 = vsyncpa [#allocation5], 1
    %6103 = vsyncpa [#allocation8], 1
    %6104 = vsyncpa [#allocation11], 1
    %6105 = vsyncpa [#allocation14], 1
    %6106 = vsyncpa [#allocation17], 1

</llo_original>
